<compile_context>
chip_gen: v6e
topology: v6e:2x2x1
jax: 0.10.0
libtpu: 0.0.40
codegen_flags: <defaults>
</compile_context>

<pallas_src>
import functools
import math

import jax
import jax.numpy as jnp
from jax import lax
from jax.experimental import pallas as pl
from jax.experimental.pallas import tpu as pltpu


MXU_DTYPE = jnp.bfloat16   # matmul operand dtype; accumulation stays float32
LN_EPS = 1e-5
NEG_INF = -1e9


def _layernorm_f32(x, gamma, beta, eps):
    mu = jnp.mean(x, axis=-1, keepdims=True)
    var = jnp.mean((x - mu) ** 2, axis=-1, keepdims=True)
    return (x - mu) * lax.rsqrt(var + eps) * gamma + beta


def _const_spec(shape):
    # Whole-array operand, constant index_map (fetched once, VMEM-resident),
    # single-buffered: no second wasted buffer for weights that never change.
    return pl.BlockSpec(shape, lambda *_: (0,) * len(shape),
                        pipeline_mode=pl.Buffered(1))


# ---------------------------------------------------------------------------
# Fused attention residual branch:
#   out = x + sigmoid(gate) * MHA(LN(x), kv, bias)
# Grid = (batch, query-row tiles); K/V source stays resident per batch element.
# ---------------------------------------------------------------------------

def _attn_branch_kernel(num_heads, is_self, causal, eps,
                        x_ref, kv_ref, kbias_ref, lng_ref, lnb_ref,
                        wq_ref, bq_ref, wkv_ref, bkv_ref, wo_ref, bo_ref,
                        gate_ref, o_ref):
    x = x_ref[0]                                            # (tq, D) f32 query rows
    tq, D = x.shape
    H = num_heads
    dk = D // H

    hq = _layernorm_f32(x, lng_ref[...], lnb_ref[...], eps)   # pre-norm queries
    kv = kv_ref[0]                                             # (Sk, D)
    if is_self:                                                # self-attn: K/V = LN(x)
        kv = _layernorm_f32(kv, lng_ref[...], lnb_ref[...], eps)
    Sk = kv.shape[0]

    # Fused full-width projections (1/sqrt(dk) folded into wq/bq at prep time).
    q_all = jnp.dot(hq.astype(MXU_DTYPE), wq_ref[...],
                    preferred_element_type=jnp.float32) + bq_ref[...]   # (tq, D)
    kv_all = jnp.dot(kv.astype(MXU_DTYPE), wkv_ref[...],
                     preferred_element_type=jnp.float32) + bkv_ref[...]  # (Sk, 2D)
    k_all = kv_all[:, :D]
    v_all = kv_all[:, D:]

    # Additive attention bias, computed once per tile: key padding (+ causal).
    kb = kbias_ref[0]                                        # (1, Sk), 0 / -1e9
    if causal:
        q_pos = pl.program_id(1) * tq + lax.broadcasted_iota(jnp.int32, (tq, Sk), 0)
        k_pos = lax.broadcasted_iota(jnp.int32, (tq, Sk), 1)
        bias = kb + jnp.where(q_pos >= k_pos,
                              jnp.float32(0.0), jnp.float32(NEG_INF))    # (tq, Sk)
    else:
        bias = kb                                            # broadcasts over rows

    # Per-head QK^T / softmax / PV (per-head contraction over dk is inherent;
    # the MXU runs one head's 2-D matmul at a time either way).
    ctx_heads = []
    for h in range(H):
        lo, hi = h * dk, (h + 1) * dk
        qh = q_all[:, lo:hi].astype(MXU_DTYPE)               # (tq, dk)
        kh = k_all[:, lo:hi].astype(MXU_DTYPE)               # (Sk, dk)
        vh = v_all[:, lo:hi].astype(MXU_DTYPE)               # (Sk, dk)
        s = lax.dot_general(qh, kh, (((1,), (1,)), ((), ())),
                            preferred_element_type=jnp.float32) + bias   # (tq, Sk)
        s = s - jnp.max(s, axis=-1, keepdims=True)
        p = jnp.exp(s)
        p = p * pl.reciprocal(jnp.sum(p, axis=-1, keepdims=True), approx=True)
        ctx_heads.append(jnp.dot(p.astype(MXU_DTYPE), vh,
                                 preferred_element_type=jnp.float32))    # (tq, dk)
    ctx = jnp.concatenate(ctx_heads, axis=-1)                # (tq, D) = concat_h ctx_h

    # Output projection as one full-depth (K = D) pass.
    y = jnp.dot(ctx.astype(MXU_DTYPE), wo_ref[...],
                preferred_element_type=jnp.float32) + bo_ref[...]        # (tq, D)

    # Fused gated residual.
    o_ref[0] = x + gate_ref[0, 0] * y


def _query_tile(sq):
    for t in (512, 256, 128, 64, 32, 16, 8):
        if sq % t == 0:
            return t
    return sq   # TODO(synk): pad ragged sequence lengths to a multiple of 8.


def attention_branch(x, kv, key_bias, ln, attn_p, gate, num_heads,
                     is_self, causal, eps=LN_EPS):
    """x: (B, Sq, D); kv: (B, Sk, D); key_bias: (B, 1, Sk) additive (0 / -1e9)."""
    B, Sq, D = x.shape
    Sk = kv.shape[1]
    tq = min(_query_tile(Sq), Sq)
    n_q = Sq // tq
    ln_g, ln_b = ln
    wq, bq = attn_p["wq"], attn_p["bq"]
    wkv, bkv = attn_p["wkv"], attn_p["bkv"]
    wo, bo = attn_p["wo"], attn_p["bo"]

    # Explicit VMEM budget: resident single-buffered weights + streamed tiles
    # (double-buffered) + main in-kernel intermediates, plus headroom.
    const_bytes = (wq.size + wkv.size + wo.size) * 2 \
        + (bq.size + bkv.size + bo.size + 2 * D) * 4
    stream_bytes = 2 * 2 * tq * D * 4 + 2 * (Sk * D * 4 + Sk * 4)
    act_bytes = (tq * D + Sk * 3 * D + tq * Sk + tq * D) * 4
    vmem_limit = int(min(max(const_bytes + stream_bytes + act_bytes + (4 << 20),
                             16 << 20), 64 << 20))

    kernel = functools.partial(_attn_branch_kernel, num_heads, is_self, causal, eps)

    return pl.pallas_call(
        kernel,
        out_shape=jax.ShapeDtypeStruct((B, Sq, D), jnp.float32),
        grid=(B, n_q),
        in_specs=[
            pl.BlockSpec((1, tq, D), lambda b, i: (b, i, 0)),     # query rows (tiled)
            pl.BlockSpec((1, Sk, D), lambda b, i: (b, 0, 0)),     # K/V source (per batch)
            pl.BlockSpec((1, 1, Sk), lambda b, i: (b, 0, 0)),     # key-padding bias
            _const_spec((1, D)), _const_spec((1, D)),             # LN gamma / beta
            _const_spec(wq.shape), _const_spec(bq.shape),         # Wq / bq (scale folded)
            _const_spec(wkv.shape), _const_spec(bkv.shape),       # [Wk|Wv] / [bk|bv]
            _const_spec(wo.shape), _const_spec(bo.shape),         # Wo / bo
            pl.BlockSpec((1, 1), lambda b, i: (0, 0),
                         memory_space=pltpu.MemorySpace.SMEM),    # sigmoid(gate)
        ],
        out_specs=pl.BlockSpec((1, tq, D), lambda b, i: (b, i, 0)),
        compiler_params=pltpu.CompilerParams(
            dimension_semantics=("parallel", "parallel"),
            vmem_limit_bytes=vmem_limit),
    )(x, kv, key_bias, ln_g, ln_b, wq, bq, wkv, bkv, wo, bo, gate)


# ---------------------------------------------------------------------------
# Fused FFN residual branch:
#   out = x + sigmoid(gate) * (relu(LN(x) @ W1 + b1) @ W2 + b2)
# ---------------------------------------------------------------------------

def _ffn_branch_kernel(eps, x_ref, lng_ref, lnb_ref,
                       w1_ref, b1_ref, w2_ref, b2_ref, gate_ref, o_ref):
    x = x_ref[...]                                           # (tm, D) f32
    h = _layernorm_f32(x, lng_ref[...], lnb_ref[...], eps)
    a = jnp.dot(h.astype(MXU_DTYPE), w1_ref[...],
                preferred_element_type=jnp.float32) + b1_ref[...]
    a = jnp.maximum(a, 0.0)
    y = jnp.dot(a.astype(MXU_DTYPE), w2_ref[...],
                preferred_element_type=jnp.float32) + b2_ref[...]
    o_ref[...] = x + gate_ref[0, 0] * y


def ffn_branch(x, ln, ffn_p, gate, eps=LN_EPS):
    M, D = x.shape
    w1, b1, w2, b2 = ffn_p["w1"], ffn_p["b1"], ffn_p["w2"], ffn_p["b2"]
    Dff = w1.shape[1]
    ln_g, ln_b = ln

    # Bounded row tile: pad M up to a tile multiple instead of letting the
    # (M, Dff) hidden activation scale with the whole batch.
    TM = 256
    if M <= TM:
        tm, Mp = M, M
    else:
        tm = TM
        Mp = ((M + TM - 1) // TM) * TM
    xp = jnp.pad(x, ((0, Mp - M), (0, 0))) if Mp != M else x

    const_bytes = (w1.size + w2.size) * 2 + (b1.size + b2.size + 2 * D) * 4
    stream_bytes = 2 * 2 * tm * D * 4
    act_bytes = tm * (D + Dff) * 4
    vmem_limit = int(min(max(const_bytes + stream_bytes + act_bytes + (4 << 20),
                             16 << 20), 64 << 20))

    out = pl.pallas_call(
        functools.partial(_ffn_branch_kernel, eps),
        out_shape=jax.ShapeDtypeStruct((Mp, D), jnp.float32),
        grid=(Mp // tm,),
        in_specs=[
            pl.BlockSpec((tm, D), lambda i: (i, 0)),              # x rows
            _const_spec((1, D)), _const_spec((1, D)),             # LN gamma / beta
            _const_spec(w1.shape), _const_spec(b1.shape),         # W1 / b1 (resident)
            _const_spec(w2.shape), _const_spec(b2.shape),         # W2 / b2 (resident)
            pl.BlockSpec((1, 1), lambda i: (0, 0),
                         memory_space=pltpu.MemorySpace.SMEM),    # sigmoid(gate)
        ],
        out_specs=pl.BlockSpec((tm, D), lambda i: (i, 0)),
        compiler_params=pltpu.CompilerParams(
            dimension_semantics=("parallel",),
            vmem_limit_bytes=vmem_limit),
    )(xp, ln_g, ln_b, w1, b1, w2, b2, gate)
    return out[:M] if Mp != M else out


# ---------------------------------------------------------------------------
# One-time parameter preparation (hoisted out of the per-forward path)
# ---------------------------------------------------------------------------

def prepare_params(params, num_heads):
    D = params["ln1_g"].shape[0]
    Dff = params["w1"].shape[1]
    dk = D // num_heads
    scale = 1.0 / math.sqrt(dk)

    def prep_attn(p):
        return {
            "wq": (p["wq"] * scale).astype(MXU_DTYPE),                      # (D, D)
            "bq": (p["bq"] * scale).reshape(1, D).astype(jnp.float32),
            "wkv": jnp.concatenate([p["wk"], p["wv"]], axis=1).astype(MXU_DTYPE),   # (D, 2D)
            "bkv": jnp.concatenate([p["bk"], p["bv"]]).reshape(1, 2 * D).astype(jnp.float32),
            "wo": p["wo"].astype(MXU_DTYPE),                                # (D, D)
            "bo": p["bo"].reshape(1, D).astype(jnp.float32),
        }

    def gate(g):
        return jax.nn.sigmoid(g).reshape(1, 1).astype(jnp.float32)

    return {
        "self_attn": prep_attn(params["self_attn"]),
        "cross_attn": prep_attn(params["cross_attn"]),
        "ffn": {
            "w1": params["w1"].astype(MXU_DTYPE),
            "b1": params["b1"].reshape(1, Dff).astype(jnp.float32),
            "w2": params["w2"].astype(MXU_DTYPE),
            "b2": params["b2"].reshape(1, D).astype(jnp.float32),
        },
        "ln1": (params["ln1_g"].reshape(1, D), params["ln1_b"].reshape(1, D)),
        "ln2": (params["ln2_g"].reshape(1, D), params["ln2_b"].reshape(1, D)),
        "ln3": (params["ln3_g"].reshape(1, D), params["ln3_b"].reshape(1, D)),
        "gate1": gate(params["gate1"]),
        "gate2": gate(params["gate2"]),
        "gate3": gate(params["gate3"]),
    }


def _key_padding_bias(mask, B, Sk):
    """(B, [1,] Sq, Sk) {0,1} mask -> (B, 1, Sk) additive bias (0 keep / -1e9 drop).
    Key j is kept iff any query row attends to it; the causal part of the
    self-attn mask is rebuilt in-kernel, so only key padding ships from HBM."""
    valid = jnp.max(mask.astype(jnp.float32).reshape(B, -1, Sk), axis=1)
    return jnp.where(valid > 0, 0.0, NEG_INF).astype(jnp.float32).reshape(B, 1, Sk)


# ---------------------------------------------------------------------------
# DecoderBlock forward (3 fused kernels total)
# ---------------------------------------------------------------------------

def decoder_block(tgt, encoder_out, tgt_mask, src_tgt_mask, prep, num_heads):
    B, St, D = tgt.shape
    Ss = encoder_out.shape[1]
    bias_self = _key_padding_bias(tgt_mask, B, St)
    bias_cross = _key_padding_bias(src_tgt_mask, B, Ss)

    # residual1: pre-norm self-attention (causal rebuilt in-kernel), gated residual
    x = attention_branch(tgt, tgt, bias_self, prep["ln1"], prep["self_attn"],
                         prep["gate1"], num_heads, is_self=True, causal=True)
    # residual2: pre-norm cross-attention (K/V = raw encoder_out), gated residual
    x = attention_branch(x, encoder_out, bias_cross, prep["ln2"], prep["cross_attn"],
                         prep["gate2"], num_heads, is_self=False, causal=False)
    # residual3: pre-norm position-wise FFN, gated residual
    y = ffn_branch(x.reshape(B * St, D), prep["ln3"], prep["ffn"], prep["gate3"])
    return y.reshape(B, St, D)


# ---------------------------------------------------------------------------
# Deterministic parameter init + example run
# ---------------------------------------------------------------------------

def init_params(key, d_model, d_ff):
    keys = jax.random.split(key, 16)
    kit = iter(keys)

    def dense(k, fan_in, fan_out):
        return (jax.random.normal(k, (fan_in, fan_out), jnp.float32)
                * (1.0 / math.sqrt(fan_in)))

    def attn_params(k):
        ks = jax.random.split(k, 4)
        return {
            "wq": dense(ks[0], d_model, d_model), "bq": jnp.zeros((d_model,), jnp.float32),
            "wk": dense(ks[1], d_model, d_model), "bk": jnp.zeros((d_model,), jnp.float32),
            "wv": dense(ks[2], d_model, d_model), "bv": jnp.zeros((d_model,), jnp.float32),
            "wo": dense(ks[3], d_model, d_model), "bo": jnp.zeros((d_model,), jnp.float32),
        }

    return {
        "self_attn": attn_params(next(kit)),
        "cross_attn": attn_params(next(kit)),
        "w1": dense(next(kit), d_model, d_ff), "b1": jnp.zeros((d_ff,), jnp.float32),
        "w2": dense(next(kit), d_ff, d_model), "b2": jnp.zeros((d_model,), jnp.float32),
        "ln1_g": jnp.ones((d_model,), jnp.float32), "ln1_b": jnp.zeros((d_model,), jnp.float32),
        "ln2_g": jnp.ones((d_model,), jnp.float32), "ln2_b": jnp.zeros((d_model,), jnp.float32),
        "ln3_g": jnp.ones((d_model,), jnp.float32), "ln3_b": jnp.zeros((d_model,), jnp.float32),
        "gate1": jnp.zeros((), jnp.float32),
        "gate2": jnp.zeros((), jnp.float32),
        "gate3": jnp.zeros((), jnp.float32),
    }


if __name__ == "__main__":
    B, S_TGT, S_SRC, D, H, D_FF = 2, 8, 16, 32, 4, 64

    key = jax.random.PRNGKey(0)
    k_tgt, k_enc, k_par = jax.random.split(key, 3)

    tgt = jax.random.normal(k_tgt, (B, S_TGT, D), jnp.float32)
    encoder_out = jax.random.normal(k_enc, (B, S_SRC, D), jnp.float32)

    # causal mask for self-attention: (B, 1, S_tgt, S_tgt)
    causal = jnp.tril(jnp.ones((S_TGT, S_TGT), jnp.float32))
    tgt_mask = jnp.broadcast_to(causal, (B, 1, S_TGT, S_TGT))

    # src padding mask for cross-attention: (B, 1, S_tgt, S_src)
    src_valid = jnp.ones((B, S_SRC), jnp.float32).at[1, -2:].set(0.0)
    src_tgt_mask = jnp.broadcast_to(
        src_valid[:, None, None, :], (B, 1, S_TGT, S_SRC)
    )

    params = init_params(k_par, D, D_FF)
    prep = prepare_params(params, H)          # one-time weight prep (not per forward)

    fwd = jax.jit(functools.partial(decoder_block, num_heads=H))
    out = fwd(tgt, encoder_out, tgt_mask, src_tgt_mask, prep)
    out = jax.block_until_ready(out)

    assert out.shape == (B, S_TGT, D) and out.dtype == jnp.float32
    assert bool(jnp.all(jnp.isfinite(out)))
    print("KERNEL_OK")
</pallas_src>

<mosaic_0001>
module attributes {stable_mosaic.version = 11 : i64} {
  func.func @_attn_branch_kernel(%arg0: i32, %arg1: i32, %arg2: memref<1x8x32xf32, #tpu.memory_space<vmem>>, %arg3: memref<1x16x32xf32, #tpu.memory_space<vmem>>, %arg4: memref<1x1x16xf32, #tpu.memory_space<vmem>>, %arg5: memref<1x32xf32, #tpu.memory_space<vmem>>, %arg6: memref<1x32xf32, #tpu.memory_space<vmem>>, %arg7: memref<32x32xbf16, #tpu.memory_space<vmem>>, %arg8: memref<1x32xf32, #tpu.memory_space<vmem>>, %arg9: memref<32x64xbf16, #tpu.memory_space<vmem>>, %arg10: memref<1x64xf32, #tpu.memory_space<vmem>>, %arg11: memref<32x32xbf16, #tpu.memory_space<vmem>>, %arg12: memref<1x32xf32, #tpu.memory_space<vmem>>, %arg13: memref<1x1xf32, #tpu.memory_space<smem>>, %arg14: memref<1x8x32xf32, #tpu.memory_space<vmem>>) attributes {dimension_semantics = [#tpu.dimension_semantics<parallel>, #tpu.dimension_semantics<parallel>], iteration_bounds = array<i64: 2, 1>, scalar_prefetch = 0 : i64, scratch_operands = 0 : i64, tpu.core_type = #tpu.core_type<tc>, window_params = [{transform_indices = @transform_0, window_bounds = array<i64: 1, 8, 32>}, {transform_indices = @transform_1, window_bounds = array<i64: 1, 16, 32>}, {transform_indices = @transform_2, window_bounds = array<i64: 1, 1, 16>}, {pipeline_mode = #tpu.pipeline_mode<synchronous>, transform_indices = @transform_3, window_bounds = array<i64: 1, 32>}, {pipeline_mode = #tpu.pipeline_mode<synchronous>, transform_indices = @transform_4, window_bounds = array<i64: 1, 32>}, {pipeline_mode = #tpu.pipeline_mode<synchronous>, transform_indices = @transform_5, window_bounds = array<i64: 32, 32>}, {pipeline_mode = #tpu.pipeline_mode<synchronous>, transform_indices = @transform_6, window_bounds = array<i64: 1, 32>}, {pipeline_mode = #tpu.pipeline_mode<synchronous>, transform_indices = @transform_7, window_bounds = array<i64: 32, 64>}, {pipeline_mode = #tpu.pipeline_mode<synchronous>, transform_indices = @transform_8, window_bounds = array<i64: 1, 64>}, {pipeline_mode = #tpu.pipeline_mode<synchronous>, transform_indices = @transform_9, window_bounds = array<i64: 32, 32>}, {pipeline_mode = #tpu.pipeline_mode<synchronous>, transform_indices = @transform_10, window_bounds = array<i64: 1, 32>}, {transform_indices = @transform_11, window_bounds = array<i64: 1, 1>}, {transform_indices = @transform_12, window_bounds = array<i64: 1, 8, 32>}]} {
    %c0 = arith.constant 0 : index
    %c0_0 = arith.constant 0 : index
    %c0_1 = arith.constant 0 : index
    %0 = vector.load %arg2[%c0, %c0_0, %c0_1] : memref<1x8x32xf32, #tpu.memory_space<vmem>>, vector<1x8x32xf32>
    %1 = vector.shape_cast %0 : vector<1x8x32xf32> to vector<8x32xf32>
    %c0_2 = arith.constant 0 : index
    %c0_3 = arith.constant 0 : index
    %2 = vector.load %arg5[%c0_2, %c0_3] : memref<1x32xf32, #tpu.memory_space<vmem>>, vector<1x32xf32>
    %c0_4 = arith.constant 0 : index
    %c0_5 = arith.constant 0 : index
    %3 = vector.load %arg6[%c0_4, %c0_5] : memref<1x32xf32, #tpu.memory_space<vmem>>, vector<1x32xf32>
    %cst = arith.constant dense<0.000000e+00> : vector<8xf32>
    %4 = vector.multi_reduction <add>, %1, %cst [1] : vector<8x32xf32> to vector<8xf32>
    %5 = vector.shape_cast %4 : vector<8xf32> to vector<8x1xf32>
    %cst_6 = arith.constant 3.200000e+01 : f32
    %6 = vector.broadcast %cst_6 : f32 to vector<8x1xf32>
    %7 = arith.divf %5, %6 : vector<8x1xf32>
    %8 = vector.broadcast %7 : vector<8x1xf32> to vector<8x32xf32>
    %9 = arith.subf %1, %8 : vector<8x32xf32>
    %10 = arith.mulf %9, %9 : vector<8x32xf32>
    %cst_7 = arith.constant dense<0.000000e+00> : vector<8xf32>
    %11 = vector.multi_reduction <add>, %10, %cst_7 [1] : vector<8x32xf32> to vector<8xf32>
    %12 = vector.shape_cast %11 : vector<8xf32> to vector<8x1xf32>
    %cst_8 = arith.constant 3.200000e+01 : f32
    %13 = vector.broadcast %cst_8 : f32 to vector<8x1xf32>
    %14 = arith.divf %12, %13 : vector<8x1xf32>
    %15 = vector.broadcast %7 : vector<8x1xf32> to vector<8x32xf32>
    %16 = arith.subf %1, %15 : vector<8x32xf32>
    %cst_9 = arith.constant 9.99999974E-6 : f32
    %17 = vector.broadcast %cst_9 : f32 to vector<8x1xf32>
    %18 = arith.addf %14, %17 : vector<8x1xf32>
    %19 = math.rsqrt %18 : vector<8x1xf32>
    %20 = vector.broadcast %19 : vector<8x1xf32> to vector<8x32xf32>
    %21 = arith.mulf %16, %20 : vector<8x32xf32>
    %22 = vector.broadcast %2 : vector<1x32xf32> to vector<8x32xf32>
    %23 = arith.mulf %21, %22 : vector<8x32xf32>
    %24 = vector.broadcast %3 : vector<1x32xf32> to vector<8x32xf32>
    %25 = arith.addf %23, %24 : vector<8x32xf32>
    %c0_10 = arith.constant 0 : index
    %c0_11 = arith.constant 0 : index
    %c0_12 = arith.constant 0 : index
    %26 = vector.load %arg3[%c0_10, %c0_11, %c0_12] : memref<1x16x32xf32, #tpu.memory_space<vmem>>, vector<1x16x32xf32>
    %27 = vector.shape_cast %26 : vector<1x16x32xf32> to vector<16x32xf32>
    %28 = arith.truncf %25 : vector<8x32xf32> to vector<8x32xbf16>
    %c0_13 = arith.constant 0 : index
    %c0_14 = arith.constant 0 : index
    %29 = vector.load %arg7[%c0_13, %c0_14] : memref<32x32xbf16, #tpu.memory_space<vmem>>, vector<32x32xbf16>
    %cst_15 = arith.constant dense<0.000000e+00> : vector<8x32xf32>
    %30 = tpu.matmul %28, %29, %cst_15 {dimension_numbers = #tpu.dot_dimension_numbers<[1], [0], [0], [1], [0, 0, 1, 1], [], []>} : vector<8x32xbf16>, vector<32x32xbf16>, vector<8x32xf32> -> vector<8x32xf32>
    %c0_16 = arith.constant 0 : index
    %c0_17 = arith.constant 0 : index
    %31 = vector.load %arg8[%c0_16, %c0_17] : memref<1x32xf32, #tpu.memory_space<vmem>>, vector<1x32xf32>
    %32 = vector.broadcast %31 : vector<1x32xf32> to vector<8x32xf32>
    %33 = arith.addf %30, %32 : vector<8x32xf32>
    %34 = arith.truncf %27 : vector<16x32xf32> to vector<16x32xbf16>
    %c0_18 = arith.constant 0 : index
    %c0_19 = arith.constant 0 : index
    %35 = vector.load %arg9[%c0_18, %c0_19] : memref<32x64xbf16, #tpu.memory_space<vmem>>, vector<32x64xbf16>
    %cst_20 = arith.constant dense<0.000000e+00> : vector<16x64xf32>
    %36 = tpu.matmul %34, %35, %cst_20 {dimension_numbers = #tpu.dot_dimension_numbers<[1], [0], [0], [1], [0, 0, 1, 1], [], []>} : vector<16x32xbf16>, vector<32x64xbf16>, vector<16x64xf32> -> vector<16x64xf32>
    %c0_21 = arith.constant 0 : index
    %c0_22 = arith.constant 0 : index
    %37 = vector.load %arg10[%c0_21, %c0_22] : memref<1x64xf32, #tpu.memory_space<vmem>>, vector<1x64xf32>
    %38 = vector.broadcast %37 : vector<1x64xf32> to vector<16x64xf32>
    %39 = arith.addf %36, %38 : vector<16x64xf32>
    %40 = vector.extract_strided_slice %39 {offsets = [0, 0], sizes = [16, 32], strides = [1, 1]} : vector<16x64xf32> to vector<16x32xf32>
    %41 = vector.extract_strided_slice %39 {offsets = [0, 32], sizes = [16, 32], strides = [1, 1]} : vector<16x64xf32> to vector<16x32xf32>
    %c0_23 = arith.constant 0 : index
    %c0_24 = arith.constant 0 : index
    %c0_25 = arith.constant 0 : index
    %42 = vector.load %arg4[%c0_23, %c0_24, %c0_25] : memref<1x1x16xf32, #tpu.memory_space<vmem>>, vector<1x1x16xf32>
    %43 = vector.shape_cast %42 : vector<1x1x16xf32> to vector<1x16xf32>
    %44 = vector.extract_strided_slice %33 {offsets = [0, 0], sizes = [8, 8], strides = [1, 1]} : vector<8x32xf32> to vector<8x8xf32>
    %45 = arith.truncf %44 : vector<8x8xf32> to vector<8x8xbf16>
    %46 = vector.extract_strided_slice %40 {offsets = [0, 0], sizes = [16, 8], strides = [1, 1]} : vector<16x32xf32> to vector<16x8xf32>
    %47 = arith.truncf %46 : vector<16x8xf32> to vector<16x8xbf16>
    %48 = vector.extract_strided_slice %41 {offsets = [0, 0], sizes = [16, 8], strides = [1, 1]} : vector<16x32xf32> to vector<16x8xf32>
    %49 = arith.truncf %48 : vector<16x8xf32> to vector<16x8xbf16>
    %cst_26 = arith.constant dense<0.000000e+00> : vector<8x16xf32>
    %50 = tpu.matmul %45, %47, %cst_26 {dimension_numbers = #tpu.dot_dimension_numbers<[1], [1], [0], [0], [0, 0, 1, 0], [], []>} : vector<8x8xbf16>, vector<16x8xbf16>, vector<8x16xf32> -> vector<8x16xf32>
    %51 = vector.broadcast %43 : vector<1x16xf32> to vector<8x16xf32>
    %52 = arith.addf %50, %51 : vector<8x16xf32>
    %cst_27 = arith.constant dense<0xFF800000> : vector<8xf32>
    %53 = vector.multi_reduction <maximumf>, %52, %cst_27 [1] : vector<8x16xf32> to vector<8xf32>
    %54 = vector.shape_cast %53 : vector<8xf32> to vector<8x1xf32>
    %55 = vector.broadcast %54 : vector<8x1xf32> to vector<8x16xf32>
    %56 = arith.subf %52, %55 : vector<8x16xf32>
    %57 = math.exp %56 : vector<8x16xf32>
    %cst_28 = arith.constant dense<0.000000e+00> : vector<8xf32>
    %58 = vector.multi_reduction <add>, %57, %cst_28 [1] : vector<8x16xf32> to vector<8xf32>
    %59 = vector.shape_cast %58 : vector<8xf32> to vector<8x1xf32>
    %60 = tpu.reciprocal %59 {approx = true} : vector<8x1xf32> -> vector<8x1xf32>
    %61 = vector.broadcast %60 : vector<8x1xf32> to vector<8x16xf32>
    %62 = arith.mulf %57, %61 : vector<8x16xf32>
    %63 = arith.truncf %62 : vector<8x16xf32> to vector<8x16xbf16>
    %cst_29 = arith.constant dense<0.000000e+00> : vector<8x8xf32>
    %64 = tpu.matmul %63, %49, %cst_29 {dimension_numbers = #tpu.dot_dimension_numbers<[1], [0], [0], [1], [0, 0, 1, 1], [], []>} : vector<8x16xbf16>, vector<16x8xbf16>, vector<8x8xf32> -> vector<8x8xf32>
    %65 = vector.extract_strided_slice %33 {offsets = [0, 8], sizes = [8, 8], strides = [1, 1]} : vector<8x32xf32> to vector<8x8xf32>
    %66 = arith.truncf %65 : vector<8x8xf32> to vector<8x8xbf16>
    %67 = vector.extract_strided_slice %40 {offsets = [0, 8], sizes = [16, 8], strides = [1, 1]} : vector<16x32xf32> to vector<16x8xf32>
    %68 = arith.truncf %67 : vector<16x8xf32> to vector<16x8xbf16>
    %69 = vector.extract_strided_slice %41 {offsets = [0, 8], sizes = [16, 8], strides = [1, 1]} : vector<16x32xf32> to vector<16x8xf32>
    %70 = arith.truncf %69 : vector<16x8xf32> to vector<16x8xbf16>
    %cst_30 = arith.constant dense<0.000000e+00> : vector<8x16xf32>
    %71 = tpu.matmul %66, %68, %cst_30 {dimension_numbers = #tpu.dot_dimension_numbers<[1], [1], [0], [0], [0, 0, 1, 0], [], []>} : vector<8x8xbf16>, vector<16x8xbf16>, vector<8x16xf32> -> vector<8x16xf32>
    %72 = vector.broadcast %43 : vector<1x16xf32> to vector<8x16xf32>
    %73 = arith.addf %71, %72 : vector<8x16xf32>
    %cst_31 = arith.constant dense<0xFF800000> : vector<8xf32>
    %74 = vector.multi_reduction <maximumf>, %73, %cst_31 [1] : vector<8x16xf32> to vector<8xf32>
    %75 = vector.shape_cast %74 : vector<8xf32> to vector<8x1xf32>
    %76 = vector.broadcast %75 : vector<8x1xf32> to vector<8x16xf32>
    %77 = arith.subf %73, %76 : vector<8x16xf32>
    %78 = math.exp %77 : vector<8x16xf32>
    %cst_32 = arith.constant dense<0.000000e+00> : vector<8xf32>
    %79 = vector.multi_reduction <add>, %78, %cst_32 [1] : vector<8x16xf32> to vector<8xf32>
    %80 = vector.shape_cast %79 : vector<8xf32> to vector<8x1xf32>
    %81 = tpu.reciprocal %80 {approx = true} : vector<8x1xf32> -> vector<8x1xf32>
    %82 = vector.broadcast %81 : vector<8x1xf32> to vector<8x16xf32>
    %83 = arith.mulf %78, %82 : vector<8x16xf32>
    %84 = arith.truncf %83 : vector<8x16xf32> to vector<8x16xbf16>
    %cst_33 = arith.constant dense<0.000000e+00> : vector<8x8xf32>
    %85 = tpu.matmul %84, %70, %cst_33 {dimension_numbers = #tpu.dot_dimension_numbers<[1], [0], [0], [1], [0, 0, 1, 1], [], []>} : vector<8x16xbf16>, vector<16x8xbf16>, vector<8x8xf32> -> vector<8x8xf32>
    %86 = vector.extract_strided_slice %33 {offsets = [0, 16], sizes = [8, 8], strides = [1, 1]} : vector<8x32xf32> to vector<8x8xf32>
    %87 = arith.truncf %86 : vector<8x8xf32> to vector<8x8xbf16>
    %88 = vector.extract_strided_slice %40 {offsets = [0, 16], sizes = [16, 8], strides = [1, 1]} : vector<16x32xf32> to vector<16x8xf32>
    %89 = arith.truncf %88 : vector<16x8xf32> to vector<16x8xbf16>
    %90 = vector.extract_strided_slice %41 {offsets = [0, 16], sizes = [16, 8], strides = [1, 1]} : vector<16x32xf32> to vector<16x8xf32>
    %91 = arith.truncf %90 : vector<16x8xf32> to vector<16x8xbf16>
    %cst_34 = arith.constant dense<0.000000e+00> : vector<8x16xf32>
    %92 = tpu.matmul %87, %89, %cst_34 {dimension_numbers = #tpu.dot_dimension_numbers<[1], [1], [0], [0], [0, 0, 1, 0], [], []>} : vector<8x8xbf16>, vector<16x8xbf16>, vector<8x16xf32> -> vector<8x16xf32>
    %93 = vector.broadcast %43 : vector<1x16xf32> to vector<8x16xf32>
    %94 = arith.addf %92, %93 : vector<8x16xf32>
    %cst_35 = arith.constant dense<0xFF800000> : vector<8xf32>
    %95 = vector.multi_reduction <maximumf>, %94, %cst_35 [1] : vector<8x16xf32> to vector<8xf32>
    %96 = vector.shape_cast %95 : vector<8xf32> to vector<8x1xf32>
    %97 = vector.broadcast %96 : vector<8x1xf32> to vector<8x16xf32>
    %98 = arith.subf %94, %97 : vector<8x16xf32>
    %99 = math.exp %98 : vector<8x16xf32>
    %cst_36 = arith.constant dense<0.000000e+00> : vector<8xf32>
    %100 = vector.multi_reduction <add>, %99, %cst_36 [1] : vector<8x16xf32> to vector<8xf32>
    %101 = vector.shape_cast %100 : vector<8xf32> to vector<8x1xf32>
    %102 = tpu.reciprocal %101 {approx = true} : vector<8x1xf32> -> vector<8x1xf32>
    %103 = vector.broadcast %102 : vector<8x1xf32> to vector<8x16xf32>
    %104 = arith.mulf %99, %103 : vector<8x16xf32>
    %105 = arith.truncf %104 : vector<8x16xf32> to vector<8x16xbf16>
    %cst_37 = arith.constant dense<0.000000e+00> : vector<8x8xf32>
    %106 = tpu.matmul %105, %91, %cst_37 {dimension_numbers = #tpu.dot_dimension_numbers<[1], [0], [0], [1], [0, 0, 1, 1], [], []>} : vector<8x16xbf16>, vector<16x8xbf16>, vector<8x8xf32> -> vector<8x8xf32>
    %107 = vector.extract_strided_slice %33 {offsets = [0, 24], sizes = [8, 8], strides = [1, 1]} : vector<8x32xf32> to vector<8x8xf32>
    %108 = arith.truncf %107 : vector<8x8xf32> to vector<8x8xbf16>
    %109 = vector.extract_strided_slice %40 {offsets = [0, 24], sizes = [16, 8], strides = [1, 1]} : vector<16x32xf32> to vector<16x8xf32>
    %110 = arith.truncf %109 : vector<16x8xf32> to vector<16x8xbf16>
    %111 = vector.extract_strided_slice %41 {offsets = [0, 24], sizes = [16, 8], strides = [1, 1]} : vector<16x32xf32> to vector<16x8xf32>
    %112 = arith.truncf %111 : vector<16x8xf32> to vector<16x8xbf16>
    %cst_38 = arith.constant dense<0.000000e+00> : vector<8x16xf32>
    %113 = tpu.matmul %108, %110, %cst_38 {dimension_numbers = #tpu.dot_dimension_numbers<[1], [1], [0], [0], [0, 0, 1, 0], [], []>} : vector<8x8xbf16>, vector<16x8xbf16>, vector<8x16xf32> -> vector<8x16xf32>
    %114 = vector.broadcast %43 : vector<1x16xf32> to vector<8x16xf32>
    %115 = arith.addf %113, %114 : vector<8x16xf32>
    %cst_39 = arith.constant dense<0xFF800000> : vector<8xf32>
    %116 = vector.multi_reduction <maximumf>, %115, %cst_39 [1] : vector<8x16xf32> to vector<8xf32>
    %117 = vector.shape_cast %116 : vector<8xf32> to vector<8x1xf32>
    %118 = vector.broadcast %117 : vector<8x1xf32> to vector<8x16xf32>
    %119 = arith.subf %115, %118 : vector<8x16xf32>
    %120 = math.exp %119 : vector<8x16xf32>
    %cst_40 = arith.constant dense<0.000000e+00> : vector<8xf32>
    %121 = vector.multi_reduction <add>, %120, %cst_40 [1] : vector<8x16xf32> to vector<8xf32>
    %122 = vector.shape_cast %121 : vector<8xf32> to vector<8x1xf32>
    %123 = tpu.reciprocal %122 {approx = true} : vector<8x1xf32> -> vector<8x1xf32>
    %124 = vector.broadcast %123 : vector<8x1xf32> to vector<8x16xf32>
    %125 = arith.mulf %120, %124 : vector<8x16xf32>
    %126 = arith.truncf %125 : vector<8x16xf32> to vector<8x16xbf16>
    %cst_41 = arith.constant dense<0.000000e+00> : vector<8x8xf32>
    %127 = tpu.matmul %126, %112, %cst_41 {dimension_numbers = #tpu.dot_dimension_numbers<[1], [0], [0], [1], [0, 0, 1, 1], [], []>} : vector<8x16xbf16>, vector<16x8xbf16>, vector<8x8xf32> -> vector<8x8xf32>
    %128 = tpu.concatenate %64, %85, %106, %127 in 1 : vector<8x8xf32>, vector<8x8xf32>, vector<8x8xf32>, vector<8x8xf32> -> vector<8x32xf32>
    %129 = arith.truncf %128 : vector<8x32xf32> to vector<8x32xbf16>
    %c0_42 = arith.constant 0 : index
    %c0_43 = arith.constant 0 : index
    %130 = vector.load %arg11[%c0_42, %c0_43] : memref<32x32xbf16, #tpu.memory_space<vmem>>, vector<32x32xbf16>
    %cst_44 = arith.constant dense<0.000000e+00> : vector<8x32xf32>
    %131 = tpu.matmul %129, %130, %cst_44 {dimension_numbers = #tpu.dot_dimension_numbers<[1], [0], [0], [1], [0, 0, 1, 1], [], []>} : vector<8x32xbf16>, vector<32x32xbf16>, vector<8x32xf32> -> vector<8x32xf32>
    %c0_45 = arith.constant 0 : index
    %c0_46 = arith.constant 0 : index
    %132 = vector.load %arg12[%c0_45, %c0_46] : memref<1x32xf32, #tpu.memory_space<vmem>>, vector<1x32xf32>
    %133 = vector.broadcast %132 : vector<1x32xf32> to vector<8x32xf32>
    %134 = arith.addf %131, %133 : vector<8x32xf32>
    %c0_47 = arith.constant 0 : index
    %c0_48 = arith.constant 0 : index
    %135 = memref.load %arg13[%c0_47, %c0_48] : memref<1x1xf32, #tpu.memory_space<smem>>
    %136 = vector.broadcast %135 : f32 to vector<8x32xf32>
    %137 = arith.mulf %136, %134 : vector<8x32xf32>
    %138 = arith.addf %1, %137 : vector<8x32xf32>
    %c0_49 = arith.constant 0 : index
    %c0_50 = arith.constant 0 : index
    %c0_51 = arith.constant 0 : index
    %139 = vector.load %arg14[%c0_49, %c0_50, %c0_51] : memref<1x8x32xf32, #tpu.memory_space<vmem>>, vector<1x8x32xf32>
    %140 = vector.shape_cast %139 : vector<1x8x32xf32> to vector<8x32xf32>
    %141 = vector.shape_cast %138 : vector<8x32xf32> to vector<1x8x32xf32>
    tpu.vector_store %arg14[%c0_49, %c0_50, %c0_51], %141 {strides = array<i32>} : memref<1x8x32xf32, #tpu.memory_space<vmem>>, vector<1x8x32xf32>,
    return
  }
  func.func @transform_0(%arg0: i32, %arg1: i32) -> (i32, i32, i32) {
    %c0_i32 = arith.constant 0 : i32
    %c0_i32_0 = arith.constant 0 : i32
    return %arg0, %arg1, %c0_i32 : i32, i32, i32
  }
  func.func @transform_1(%arg0: i32, %arg1: i32) -> (i32, i32, i32) {
    %c0_i32 = arith.constant 0 : i32
    %c0_i32_0 = arith.constant 0 : i32
    %c0_i32_1 = arith.constant 0 : i32
    return %arg0, %c0_i32, %c0_i32_0 : i32, i32, i32
  }
  func.func @transform_2(%arg0: i32, %arg1: i32) -> (i32, i32, i32) {
    %c0_i32 = arith.constant 0 : i32
    %c0_i32_0 = arith.constant 0 : i32
    %c0_i32_1 = arith.constant 0 : i32
    return %arg0, %c0_i32, %c0_i32_0 : i32, i32, i32
  }
  func.func @transform_3(%arg0: i32, %arg1: i32) -> (i32, i32) {
    %c0_i32 = arith.constant 0 : i32
    %c0_i32_0 = arith.constant 0 : i32
    %c0_i32_1 = arith.constant 0 : i32
    return %c0_i32, %c0_i32_0 : i32, i32
  }
  func.func @transform_4(%arg0: i32, %arg1: i32) -> (i32, i32) {
    %c0_i32 = arith.constant 0 : i32
    %c0_i32_0 = arith.constant 0 : i32
    %c0_i32_1 = arith.constant 0 : i32
    return %c0_i32, %c0_i32_0 : i32, i32
  }
  func.func @transform_5(%arg0: i32, %arg1: i32) -> (i32, i32) {
    %c0_i32 = arith.constant 0 : i32
    %c0_i32_0 = arith.constant 0 : i32
    %c0_i32_1 = arith.constant 0 : i32
    return %c0_i32, %c0_i32_0 : i32, i32
  }
  func.func @transform_6(%arg0: i32, %arg1: i32) -> (i32, i32) {
    %c0_i32 = arith.constant 0 : i32
    %c0_i32_0 = arith.constant 0 : i32
    %c0_i32_1 = arith.constant 0 : i32
    return %c0_i32, %c0_i32_0 : i32, i32
  }
  func.func @transform_7(%arg0: i32, %arg1: i32) -> (i32, i32) {
    %c0_i32 = arith.constant 0 : i32
    %c0_i32_0 = arith.constant 0 : i32
    %c0_i32_1 = arith.constant 0 : i32
    return %c0_i32, %c0_i32_0 : i32, i32
  }
  func.func @transform_8(%arg0: i32, %arg1: i32) -> (i32, i32) {
    %c0_i32 = arith.constant 0 : i32
    %c0_i32_0 = arith.constant 0 : i32
    %c0_i32_1 = arith.constant 0 : i32
    return %c0_i32, %c0_i32_0 : i32, i32
  }
  func.func @transform_9(%arg0: i32, %arg1: i32) -> (i32, i32) {
    %c0_i32 = arith.constant 0 : i32
    %c0_i32_0 = arith.constant 0 : i32
    %c0_i32_1 = arith.constant 0 : i32
    return %c0_i32, %c0_i32_0 : i32, i32
  }
  func.func @transform_10(%arg0: i32, %arg1: i32) -> (i32, i32) {
    %c0_i32 = arith.constant 0 : i32
    %c0_i32_0 = arith.constant 0 : i32
    %c0_i32_1 = arith.constant 0 : i32
    return %c0_i32, %c0_i32_0 : i32, i32
  }
  func.func @transform_11(%arg0: i32, %arg1: i32) -> (i32, i32) {
    %c0_i32 = arith.constant 0 : i32
    %c0_i32_0 = arith.constant 0 : i32
    %c0_i32_1 = arith.constant 0 : i32
    return %c0_i32, %c0_i32_0 : i32, i32
  }
  func.func @transform_12(%arg0: i32, %arg1: i32) -> (i32, i32, i32) {
    %c0_i32 = arith.constant 0 : i32
    %c0_i32_0 = arith.constant 0 : i32
    return %arg0, %arg1, %c0_i32 : i32, i32, i32
  }
}

module attributes {stable_mosaic.version = 11 : i64} {
  func.func @_attn_branch_kernel(%arg0: i32, %arg1: i32, %arg2: memref<1x8x32xf32, #tpu.memory_space<vmem>>, %arg3: memref<1x8x32xf32, #tpu.memory_space<vmem>>, %arg4: memref<1x1x8xf32, #tpu.memory_space<vmem>>, %arg5: memref<1x32xf32, #tpu.memory_space<vmem>>, %arg6: memref<1x32xf32, #tpu.memory_space<vmem>>, %arg7: memref<32x32xbf16, #tpu.memory_space<vmem>>, %arg8: memref<1x32xf32, #tpu.memory_space<vmem>>, %arg9: memref<32x64xbf16, #tpu.memory_space<vmem>>, %arg10: memref<1x64xf32, #tpu.memory_space<vmem>>, %arg11: memref<32x32xbf16, #tpu.memory_space<vmem>>, %arg12: memref<1x32xf32, #tpu.memory_space<vmem>>, %arg13: memref<1x1xf32, #tpu.memory_space<smem>>, %arg14: memref<1x8x32xf32, #tpu.memory_space<vmem>>) attributes {dimension_semantics = [#tpu.dimension_semantics<parallel>, #tpu.dimension_semantics<parallel>], iteration_bounds = array<i64: 2, 1>, scalar_prefetch = 0 : i64, scratch_operands = 0 : i64, tpu.core_type = #tpu.core_type<tc>, window_params = [{transform_indices = @transform_0, window_bounds = array<i64: 1, 8, 32>}, {transform_indices = @transform_1, window_bounds = array<i64: 1, 8, 32>}, {transform_indices = @transform_2, window_bounds = array<i64: 1, 1, 8>}, {pipeline_mode = #tpu.pipeline_mode<synchronous>, transform_indices = @transform_3, window_bounds = array<i64: 1, 32>}, {pipeline_mode = #tpu.pipeline_mode<synchronous>, transform_indices = @transform_4, window_bounds = array<i64: 1, 32>}, {pipeline_mode = #tpu.pipeline_mode<synchronous>, transform_indices = @transform_5, window_bounds = array<i64: 32, 32>}, {pipeline_mode = #tpu.pipeline_mode<synchronous>, transform_indices = @transform_6, window_bounds = array<i64: 1, 32>}, {pipeline_mode = #tpu.pipeline_mode<synchronous>, transform_indices = @transform_7, window_bounds = array<i64: 32, 64>}, {pipeline_mode = #tpu.pipeline_mode<synchronous>, transform_indices = @transform_8, window_bounds = array<i64: 1, 64>}, {pipeline_mode = #tpu.pipeline_mode<synchronous>, transform_indices = @transform_9, window_bounds = array<i64: 32, 32>}, {pipeline_mode = #tpu.pipeline_mode<synchronous>, transform_indices = @transform_10, window_bounds = array<i64: 1, 32>}, {transform_indices = @transform_11, window_bounds = array<i64: 1, 1>}, {transform_indices = @transform_12, window_bounds = array<i64: 1, 8, 32>}]} {
    %c0 = arith.constant 0 : index
    %c0_0 = arith.constant 0 : index
    %c0_1 = arith.constant 0 : index
    %0 = vector.load %arg2[%c0, %c0_0, %c0_1] : memref<1x8x32xf32, #tpu.memory_space<vmem>>, vector<1x8x32xf32>
    %1 = vector.shape_cast %0 : vector<1x8x32xf32> to vector<8x32xf32>
    %c0_2 = arith.constant 0 : index
    %c0_3 = arith.constant 0 : index
    %2 = vector.load %arg5[%c0_2, %c0_3] : memref<1x32xf32, #tpu.memory_space<vmem>>, vector<1x32xf32>
    %c0_4 = arith.constant 0 : index
    %c0_5 = arith.constant 0 : index
    %3 = vector.load %arg6[%c0_4, %c0_5] : memref<1x32xf32, #tpu.memory_space<vmem>>, vector<1x32xf32>
    %cst = arith.constant dense<0.000000e+00> : vector<8xf32>
    %4 = vector.multi_reduction <add>, %1, %cst [1] : vector<8x32xf32> to vector<8xf32>
    %5 = vector.shape_cast %4 : vector<8xf32> to vector<8x1xf32>
    %cst_6 = arith.constant 3.200000e+01 : f32
    %6 = vector.broadcast %cst_6 : f32 to vector<8x1xf32>
    %7 = arith.divf %5, %6 : vector<8x1xf32>
    %8 = vector.broadcast %7 : vector<8x1xf32> to vector<8x32xf32>
    %9 = arith.subf %1, %8 : vector<8x32xf32>
    %10 = arith.mulf %9, %9 : vector<8x32xf32>
    %cst_7 = arith.constant dense<0.000000e+00> : vector<8xf32>
    %11 = vector.multi_reduction <add>, %10, %cst_7 [1] : vector<8x32xf32> to vector<8xf32>
    %12 = vector.shape_cast %11 : vector<8xf32> to vector<8x1xf32>
    %cst_8 = arith.constant 3.200000e+01 : f32
    %13 = vector.broadcast %cst_8 : f32 to vector<8x1xf32>
    %14 = arith.divf %12, %13 : vector<8x1xf32>
    %15 = vector.broadcast %7 : vector<8x1xf32> to vector<8x32xf32>
    %16 = arith.subf %1, %15 : vector<8x32xf32>
    %cst_9 = arith.constant 9.99999974E-6 : f32
    %17 = vector.broadcast %cst_9 : f32 to vector<8x1xf32>
    %18 = arith.addf %14, %17 : vector<8x1xf32>
    %19 = math.rsqrt %18 : vector<8x1xf32>
    %20 = vector.broadcast %19 : vector<8x1xf32> to vector<8x32xf32>
    %21 = arith.mulf %16, %20 : vector<8x32xf32>
    %22 = vector.broadcast %2 : vector<1x32xf32> to vector<8x32xf32>
    %23 = arith.mulf %21, %22 : vector<8x32xf32>
    %24 = vector.broadcast %3 : vector<1x32xf32> to vector<8x32xf32>
    %25 = arith.addf %23, %24 : vector<8x32xf32>
    %c0_10 = arith.constant 0 : index
    %c0_11 = arith.constant 0 : index
    %c0_12 = arith.constant 0 : index
    %26 = vector.load %arg3[%c0_10, %c0_11, %c0_12] : memref<1x8x32xf32, #tpu.memory_space<vmem>>, vector<1x8x32xf32>
    %27 = vector.shape_cast %26 : vector<1x8x32xf32> to vector<8x32xf32>
    %c0_13 = arith.constant 0 : index
    %c0_14 = arith.constant 0 : index
    %28 = vector.load %arg5[%c0_13, %c0_14] : memref<1x32xf32, #tpu.memory_space<vmem>>, vector<1x32xf32>
    %c0_15 = arith.constant 0 : index
    %c0_16 = arith.constant 0 : index
    %29 = vector.load %arg6[%c0_15, %c0_16] : memref<1x32xf32, #tpu.memory_space<vmem>>, vector<1x32xf32>
    %cst_17 = arith.constant dense<0.000000e+00> : vector<8xf32>
    %30 = vector.multi_reduction <add>, %27, %cst_17 [1] : vector<8x32xf32> to vector<8xf32>
    %31 = vector.shape_cast %30 : vector<8xf32> to vector<8x1xf32>
    %cst_18 = arith.constant 3.200000e+01 : f32
    %32 = vector.broadcast %cst_18 : f32 to vector<8x1xf32>
    %33 = arith.divf %31, %32 : vector<8x1xf32>
    %34 = vector.broadcast %33 : vector<8x1xf32> to vector<8x32xf32>
    %35 = arith.subf %27, %34 : vector<8x32xf32>
    %36 = arith.mulf %35, %35 : vector<8x32xf32>
    %cst_19 = arith.constant dense<0.000000e+00> : vector<8xf32>
    %37 = vector.multi_reduction <add>, %36, %cst_19 [1] : vector<8x32xf32> to vector<8xf32>
    %38 = vector.shape_cast %37 : vector<8xf32> to vector<8x1xf32>
    %cst_20 = arith.constant 3.200000e+01 : f32
    %39 = vector.broadcast %cst_20 : f32 to vector<8x1xf32>
    %40 = arith.divf %38, %39 : vector<8x1xf32>
    %41 = vector.broadcast %33 : vector<8x1xf32> to vector<8x32xf32>
    %42 = arith.subf %27, %41 : vector<8x32xf32>
    %cst_21 = arith.constant 9.99999974E-6 : f32
    %43 = vector.broadcast %cst_21 : f32 to vector<8x1xf32>
    %44 = arith.addf %40, %43 : vector<8x1xf32>
    %45 = math.rsqrt %44 : vector<8x1xf32>
    %46 = vector.broadcast %45 : vector<8x1xf32> to vector<8x32xf32>
    %47 = arith.mulf %42, %46 : vector<8x32xf32>
    %48 = vector.broadcast %28 : vector<1x32xf32> to vector<8x32xf32>
    %49 = arith.mulf %47, %48 : vector<8x32xf32>
    %50 = vector.broadcast %29 : vector<1x32xf32> to vector<8x32xf32>
    %51 = arith.addf %49, %50 : vector<8x32xf32>
    %52 = arith.truncf %25 : vector<8x32xf32> to vector<8x32xbf16>
    %c0_22 = arith.constant 0 : index
    %c0_23 = arith.constant 0 : index
    %53 = vector.load %arg7[%c0_22, %c0_23] : memref<32x32xbf16, #tpu.memory_space<vmem>>, vector<32x32xbf16>
    %cst_24 = arith.constant dense<0.000000e+00> : vector<8x32xf32>
    %54 = tpu.matmul %52, %53, %cst_24 {dimension_numbers = #tpu.dot_dimension_numbers<[1], [0], [0], [1], [0, 0, 1, 1], [], []>} : vector<8x32xbf16>, vector<32x32xbf16>, vector<8x32xf32> -> vector<8x32xf32>
    %c0_25 = arith.constant 0 : index
    %c0_26 = arith.constant 0 : index
    %55 = vector.load %arg8[%c0_25, %c0_26] : memref<1x32xf32, #tpu.memory_space<vmem>>, vector<1x32xf32>
    %56 = vector.broadcast %55 : vector<1x32xf32> to vector<8x32xf32>
    %57 = arith.addf %54, %56 : vector<8x32xf32>
    %58 = arith.truncf %51 : vector<8x32xf32> to vector<8x32xbf16>
    %c0_27 = arith.constant 0 : index
    %c0_28 = arith.constant 0 : index
    %59 = vector.load %arg9[%c0_27, %c0_28] : memref<32x64xbf16, #tpu.memory_space<vmem>>, vector<32x64xbf16>
    %cst_29 = arith.constant dense<0.000000e+00> : vector<8x64xf32>
    %60 = tpu.matmul %58, %59, %cst_29 {dimension_numbers = #tpu.dot_dimension_numbers<[1], [0], [0], [1], [0, 0, 1, 1], [], []>} : vector<8x32xbf16>, vector<32x64xbf16>, vector<8x64xf32> -> vector<8x64xf32>
    %c0_30 = arith.constant 0 : index
    %c0_31 = arith.constant 0 : index
    %61 = vector.load %arg10[%c0_30, %c0_31] : memref<1x64xf32, #tpu.memory_space<vmem>>, vector<1x64xf32>
    %62 = vector.broadcast %61 : vector<1x64xf32> to vector<8x64xf32>
    %63 = arith.addf %60, %62 : vector<8x64xf32>
    %64 = vector.extract_strided_slice %63 {offsets = [0, 0], sizes = [8, 32], strides = [1, 1]} : vector<8x64xf32> to vector<8x32xf32>
    %65 = vector.extract_strided_slice %63 {offsets = [0, 32], sizes = [8, 32], strides = [1, 1]} : vector<8x64xf32> to vector<8x32xf32>
    %c0_32 = arith.constant 0 : index
    %c0_33 = arith.constant 0 : index
    %c0_34 = arith.constant 0 : index
    %66 = vector.load %arg4[%c0_32, %c0_33, %c0_34] : memref<1x1x8xf32, #tpu.memory_space<vmem>>, vector<1x1x8xf32>
    %67 = vector.shape_cast %66 : vector<1x1x8xf32> to vector<1x8xf32>
    %c8_i32 = arith.constant 8 : i32
    %68 = arith.muli %arg1, %c8_i32 : i32
    %69 = tpu.iota {dimensions = array<i32: 0>} : vector<8x8xi32>
    %70 = vector.broadcast %68 : i32 to vector<8x8xi32>
    %71 = arith.addi %70, %69 : vector<8x8xi32>
    %72 = tpu.iota {dimensions = array<i32: 1>} : vector<8x8xi32>
    %73 = arith.cmpi sge, %71, %72 : vector<8x8xi32>
    %cst_35 = arith.constant 0.000000e+00 : f32
    %cst_36 = arith.constant -1.000000e+09 : f32
    %74 = vector.broadcast %cst_35 : f32 to vector<8x8xf32>
    %75 = vector.broadcast %cst_36 : f32 to vector<8x8xf32>
    %76 = arith.select %73, %74, %75 : vector<8x8xi1>, vector<8x8xf32>
    %77 = vector.broadcast %67 : vector<1x8xf32> to vector<8x8xf32>
    %78 = arith.addf %77, %76 : vector<8x8xf32>
    %79 = vector.extract_strided_slice %57 {offsets = [0, 0], sizes = [8, 8], strides = [1, 1]} : vector<8x32xf32> to vector<8x8xf32>
    %80 = arith.truncf %79 : vector<8x8xf32> to vector<8x8xbf16>
    %81 = vector.extract_strided_slice %64 {offsets = [0, 0], sizes = [8, 8], strides = [1, 1]} : vector<8x32xf32> to vector<8x8xf32>
    %82 = arith.truncf %81 : vector<8x8xf32> to vector<8x8xbf16>
    %83 = vector.extract_strided_slice %65 {offsets = [0, 0], sizes = [8, 8], strides = [1, 1]} : vector<8x32xf32> to vector<8x8xf32>
    %84 = arith.truncf %83 : vector<8x8xf32> to vector<8x8xbf16>
    %cst_37 = arith.constant dense<0.000000e+00> : vector<8x8xf32>
    %85 = tpu.matmul %80, %82, %cst_37 {dimension_numbers = #tpu.dot_dimension_numbers<[1], [1], [0], [0], [0, 0, 1, 0], [], []>} : vector<8x8xbf16>, vector<8x8xbf16>, vector<8x8xf32> -> vector<8x8xf32>
    %86 = arith.addf %85, %78 : vector<8x8xf32>
    %cst_38 = arith.constant dense<0xFF800000> : vector<8xf32>
    %87 = vector.multi_reduction <maximumf>, %86, %cst_38 [1] : vector<8x8xf32> to vector<8xf32>
    %88 = vector.shape_cast %87 : vector<8xf32> to vector<8x1xf32>
    %89 = vector.broadcast %88 : vector<8x1xf32> to vector<8x8xf32>
    %90 = arith.subf %86, %89 : vector<8x8xf32>
    %91 = math.exp %90 : vector<8x8xf32>
    %cst_39 = arith.constant dense<0.000000e+00> : vector<8xf32>
    %92 = vector.multi_reduction <add>, %91, %cst_39 [1] : vector<8x8xf32> to vector<8xf32>
    %93 = vector.shape_cast %92 : vector<8xf32> to vector<8x1xf32>
    %94 = tpu.reciprocal %93 {approx = true} : vector<8x1xf32> -> vector<8x1xf32>
    %95 = vector.broadcast %94 : vector<8x1xf32> to vector<8x8xf32>
    %96 = arith.mulf %91, %95 : vector<8x8xf32>
    %97 = arith.truncf %96 : vector<8x8xf32> to vector<8x8xbf16>
    %cst_40 = arith.constant dense<0.000000e+00> : vector<8x8xf32>
    %98 = tpu.matmul %97, %84, %cst_40 {dimension_numbers = #tpu.dot_dimension_numbers<[1], [0], [0], [1], [0, 0, 1, 1], [], []>} : vector<8x8xbf16>, vector<8x8xbf16>, vector<8x8xf32> -> vector<8x8xf32>
    %99 = vector.extract_strided_slice %57 {offsets = [0, 8], sizes = [8, 8], strides = [1, 1]} : vector<8x32xf32> to vector<8x8xf32>
    %100 = arith.truncf %99 : vector<8x8xf32> to vector<8x8xbf16>
    %101 = vector.extract_strided_slice %64 {offsets = [0, 8], sizes = [8, 8], strides = [1, 1]} : vector<8x32xf32> to vector<8x8xf32>
    %102 = arith.truncf %101 : vector<8x8xf32> to vector<8x8xbf16>
    %103 = vector.extract_strided_slice %65 {offsets = [0, 8], sizes = [8, 8], strides = [1, 1]} : vector<8x32xf32> to vector<8x8xf32>
    %104 = arith.truncf %103 : vector<8x8xf32> to vector<8x8xbf16>
    %cst_41 = arith.constant dense<0.000000e+00> : vector<8x8xf32>
    %105 = tpu.matmul %100, %102, %cst_41 {dimension_numbers = #tpu.dot_dimension_numbers<[1], [1], [0], [0], [0, 0, 1, 0], [], []>} : vector<8x8xbf16>, vector<8x8xbf16>, vector<8x8xf32> -> vector<8x8xf32>
    %106 = arith.addf %105, %78 : vector<8x8xf32>
    %cst_42 = arith.constant dense<0xFF800000> : vector<8xf32>
    %107 = vector.multi_reduction <maximumf>, %106, %cst_42 [1] : vector<8x8xf32> to vector<8xf32>
    %108 = vector.shape_cast %107 : vector<8xf32> to vector<8x1xf32>
    %109 = vector.broadcast %108 : vector<8x1xf32> to vector<8x8xf32>
    %110 = arith.subf %106, %109 : vector<8x8xf32>
    %111 = math.exp %110 : vector<8x8xf32>
    %cst_43 = arith.constant dense<0.000000e+00> : vector<8xf32>
    %112 = vector.multi_reduction <add>, %111, %cst_43 [1] : vector<8x8xf32> to vector<8xf32>
    %113 = vector.shape_cast %112 : vector<8xf32> to vector<8x1xf32>
    %114 = tpu.reciprocal %113 {approx = true} : vector<8x1xf32> -> vector<8x1xf32>
    %115 = vector.broadcast %114 : vector<8x1xf32> to vector<8x8xf32>
    %116 = arith.mulf %111, %115 : vector<8x8xf32>
    %117 = arith.truncf %116 : vector<8x8xf32> to vector<8x8xbf16>
    %cst_44 = arith.constant dense<0.000000e+00> : vector<8x8xf32>
    %118 = tpu.matmul %117, %104, %cst_44 {dimension_numbers = #tpu.dot_dimension_numbers<[1], [0], [0], [1], [0, 0, 1, 1], [], []>} : vector<8x8xbf16>, vector<8x8xbf16>, vector<8x8xf32> -> vector<8x8xf32>
    %119 = vector.extract_strided_slice %57 {offsets = [0, 16], sizes = [8, 8], strides = [1, 1]} : vector<8x32xf32> to vector<8x8xf32>
    %120 = arith.truncf %119 : vector<8x8xf32> to vector<8x8xbf16>
    %121 = vector.extract_strided_slice %64 {offsets = [0, 16], sizes = [8, 8], strides = [1, 1]} : vector<8x32xf32> to vector<8x8xf32>
    %122 = arith.truncf %121 : vector<8x8xf32> to vector<8x8xbf16>
    %123 = vector.extract_strided_slice %65 {offsets = [0, 16], sizes = [8, 8], strides = [1, 1]} : vector<8x32xf32> to vector<8x8xf32>
    %124 = arith.truncf %123 : vector<8x8xf32> to vector<8x8xbf16>
    %cst_45 = arith.constant dense<0.000000e+00> : vector<8x8xf32>
    %125 = tpu.matmul %120, %122, %cst_45 {dimension_numbers = #tpu.dot_dimension_numbers<[1], [1], [0], [0], [0, 0, 1, 0], [], []>} : vector<8x8xbf16>, vector<8x8xbf16>, vector<8x8xf32> -> vector<8x8xf32>
    %126 = arith.addf %125, %78 : vector<8x8xf32>
    %cst_46 = arith.constant dense<0xFF800000> : vector<8xf32>
    %127 = vector.multi_reduction <maximumf>, %126, %cst_46 [1] : vector<8x8xf32> to vector<8xf32>
    %128 = vector.shape_cast %127 : vector<8xf32> to vector<8x1xf32>
    %129 = vector.broadcast %128 : vector<8x1xf32> to vector<8x8xf32>
    %130 = arith.subf %126, %129 : vector<8x8xf32>
    %131 = math.exp %130 : vector<8x8xf32>
    %cst_47 = arith.constant dense<0.000000e+00> : vector<8xf32>
    %132 = vector.multi_reduction <add>, %131, %cst_47 [1] : vector<8x8xf32> to vector<8xf32>
    %133 = vector.shape_cast %132 : vector<8xf32> to vector<8x1xf32>
    %134 = tpu.reciprocal %133 {approx = true} : vector<8x1xf32> -> vector<8x1xf32>
    %135 = vector.broadcast %134 : vector<8x1xf32> to vector<8x8xf32>
    %136 = arith.mulf %131, %135 : vector<8x8xf32>
    %137 = arith.truncf %136 : vector<8x8xf32> to vector<8x8xbf16>
    %cst_48 = arith.constant dense<0.000000e+00> : vector<8x8xf32>
    %138 = tpu.matmul %137, %124, %cst_48 {dimension_numbers = #tpu.dot_dimension_numbers<[1], [0], [0], [1], [0, 0, 1, 1], [], []>} : vector<8x8xbf16>, vector<8x8xbf16>, vector<8x8xf32> -> vector<8x8xf32>
    %139 = vector.extract_strided_slice %57 {offsets = [0, 24], sizes = [8, 8], strides = [1, 1]} : vector<8x32xf32> to vector<8x8xf32>
    %140 = arith.truncf %139 : vector<8x8xf32> to vector<8x8xbf16>
    %141 = vector.extract_strided_slice %64 {offsets = [0, 24], sizes = [8, 8], strides = [1, 1]} : vector<8x32xf32> to vector<8x8xf32>
    %142 = arith.truncf %141 : vector<8x8xf32> to vector<8x8xbf16>
    %143 = vector.extract_strided_slice %65 {offsets = [0, 24], sizes = [8, 8], strides = [1, 1]} : vector<8x32xf32> to vector<8x8xf32>
    %144 = arith.truncf %143 : vector<8x8xf32> to vector<8x8xbf16>
    %cst_49 = arith.constant dense<0.000000e+00> : vector<8x8xf32>
    %145 = tpu.matmul %140, %142, %cst_49 {dimension_numbers = #tpu.dot_dimension_numbers<[1], [1], [0], [0], [0, 0, 1, 0], [], []>} : vector<8x8xbf16>, vector<8x8xbf16>, vector<8x8xf32> -> vector<8x8xf32>
    %146 = arith.addf %145, %78 : vector<8x8xf32>
    %cst_50 = arith.constant dense<0xFF800000> : vector<8xf32>
    %147 = vector.multi_reduction <maximumf>, %146, %cst_50 [1] : vector<8x8xf32> to vector<8xf32>
    %148 = vector.shape_cast %147 : vector<8xf32> to vector<8x1xf32>
    %149 = vector.broadcast %148 : vector<8x1xf32> to vector<8x8xf32>
    %150 = arith.subf %146, %149 : vector<8x8xf32>
    %151 = math.exp %150 : vector<8x8xf32>
    %cst_51 = arith.constant dense<0.000000e+00> : vector<8xf32>
    %152 = vector.multi_reduction <add>, %151, %cst_51 [1] : vector<8x8xf32> to vector<8xf32>
    %153 = vector.shape_cast %152 : vector<8xf32> to vector<8x1xf32>
    %154 = tpu.reciprocal %153 {approx = true} : vector<8x1xf32> -> vector<8x1xf32>
    %155 = vector.broadcast %154 : vector<8x1xf32> to vector<8x8xf32>
    %156 = arith.mulf %151, %155 : vector<8x8xf32>
    %157 = arith.truncf %156 : vector<8x8xf32> to vector<8x8xbf16>
    %cst_52 = arith.constant dense<0.000000e+00> : vector<8x8xf32>
    %158 = tpu.matmul %157, %144, %cst_52 {dimension_numbers = #tpu.dot_dimension_numbers<[1], [0], [0], [1], [0, 0, 1, 1], [], []>} : vector<8x8xbf16>, vector<8x8xbf16>, vector<8x8xf32> -> vector<8x8xf32>
    %159 = tpu.concatenate %98, %118, %138, %158 in 1 : vector<8x8xf32>, vector<8x8xf32>, vector<8x8xf32>, vector<8x8xf32> -> vector<8x32xf32>
    %160 = arith.truncf %159 : vector<8x32xf32> to vector<8x32xbf16>
    %c0_53 = arith.constant 0 : index
    %c0_54 = arith.constant 0 : index
    %161 = vector.load %arg11[%c0_53, %c0_54] : memref<32x32xbf16, #tpu.memory_space<vmem>>, vector<32x32xbf16>
    %cst_55 = arith.constant dense<0.000000e+00> : vector<8x32xf32>
    %162 = tpu.matmul %160, %161, %cst_55 {dimension_numbers = #tpu.dot_dimension_numbers<[1], [0], [0], [1], [0, 0, 1, 1], [], []>} : vector<8x32xbf16>, vector<32x32xbf16>, vector<8x32xf32> -> vector<8x32xf32>
    %c0_56 = arith.constant 0 : index
    %c0_57 = arith.constant 0 : index
    %163 = vector.load %arg12[%c0_56, %c0_57] : memref<1x32xf32, #tpu.memory_space<vmem>>, vector<1x32xf32>
    %164 = vector.broadcast %163 : vector<1x32xf32> to vector<8x32xf32>
    %165 = arith.addf %162, %164 : vector<8x32xf32>
    %c0_58 = arith.constant 0 : index
    %c0_59 = arith.constant 0 : index
    %166 = memref.load %arg13[%c0_58, %c0_59] : memref<1x1xf32, #tpu.memory_space<smem>>
    %167 = vector.broadcast %166 : f32 to vector<8x32xf32>
    %168 = arith.mulf %167, %165 : vector<8x32xf32>
    %169 = arith.addf %1, %168 : vector<8x32xf32>
    %c0_60 = arith.constant 0 : index
    %c0_61 = arith.constant 0 : index
    %c0_62 = arith.constant 0 : index
    %170 = vector.load %arg14[%c0_60, %c0_61, %c0_62] : memref<1x8x32xf32, #tpu.memory_space<vmem>>, vector<1x8x32xf32>
    %171 = vector.shape_cast %170 : vector<1x8x32xf32> to vector<8x32xf32>
    %172 = vector.shape_cast %169 : vector<8x32xf32> to vector<1x8x32xf32>
    tpu.vector_store %arg14[%c0_60, %c0_61, %c0_62], %172 {strides = array<i32>} : memref<1x8x32xf32, #tpu.memory_space<vmem>>, vector<1x8x32xf32>,
    return
  }
  func.func @transform_0(%arg0: i32, %arg1: i32) -> (i32, i32, i32) {
    %c0_i32 = arith.constant 0 : i32
    %c0_i32_0 = arith.constant 0 : i32
    return %arg0, %arg1, %c0_i32 : i32, i32, i32
  }
  func.func @transform_1(%arg0: i32, %arg1: i32) -> (i32, i32, i32) {
    %c0_i32 = arith.constant 0 : i32
    %c0_i32_0 = arith.constant 0 : i32
    %c0_i32_1 = arith.constant 0 : i32
    return %arg0, %c0_i32, %c0_i32_0 : i32, i32, i32
  }
  func.func @transform_2(%arg0: i32, %arg1: i32) -> (i32, i32, i32) {
    %c0_i32 = arith.constant 0 : i32
    %c0_i32_0 = arith.constant 0 : i32
    %c0_i32_1 = arith.constant 0 : i32
    return %arg0, %c0_i32, %c0_i32_0 : i32, i32, i32
  }
  func.func @transform_3(%arg0: i32, %arg1: i32) -> (i32, i32) {
    %c0_i32 = arith.constant 0 : i32
    %c0_i32_0 = arith.constant 0 : i32
    %c0_i32_1 = arith.constant 0 : i32
    return %c0_i32, %c0_i32_0 : i32, i32
  }
  func.func @transform_4(%arg0: i32, %arg1: i32) -> (i32, i32) {
    %c0_i32 = arith.constant 0 : i32
    %c0_i32_0 = arith.constant 0 : i32
    %c0_i32_1 = arith.constant 0 : i32
    return %c0_i32, %c0_i32_0 : i32, i32
  }
  func.func @transform_5(%arg0: i32, %arg1: i32) -> (i32, i32) {
    %c0_i32 = arith.constant 0 : i32
    %c0_i32_0 = arith.constant 0 : i32
    %c0_i32_1 = arith.constant 0 : i32
    return %c0_i32, %c0_i32_0 : i32, i32
  }
  func.func @transform_6(%arg0: i32, %arg1: i32) -> (i32, i32) {
    %c0_i32 = arith.constant 0 : i32
    %c0_i32_0 = arith.constant 0 : i32
    %c0_i32_1 = arith.constant 0 : i32
    return %c0_i32, %c0_i32_0 : i32, i32
  }
  func.func @transform_7(%arg0: i32, %arg1: i32) -> (i32, i32) {
    %c0_i32 = arith.constant 0 : i32
    %c0_i32_0 = arith.constant 0 : i32
    %c0_i32_1 = arith.constant 0 : i32
    return %c0_i32, %c0_i32_0 : i32, i32
  }
  func.func @transform_8(%arg0: i32, %arg1: i32) -> (i32, i32) {
    %c0_i32 = arith.constant 0 : i32
    %c0_i32_0 = arith.constant 0 : i32
    %c0_i32_1 = arith.constant 0 : i32
    return %c0_i32, %c0_i32_0 : i32, i32
  }
  func.func @transform_9(%arg0: i32, %arg1: i32) -> (i32, i32) {
    %c0_i32 = arith.constant 0 : i32
    %c0_i32_0 = arith.constant 0 : i32
    %c0_i32_1 = arith.constant 0 : i32
    return %c0_i32, %c0_i32_0 : i32, i32
  }
  func.func @transform_10(%arg0: i32, %arg1: i32) -> (i32, i32) {
    %c0_i32 = arith.constant 0 : i32
    %c0_i32_0 = arith.constant 0 : i32
    %c0_i32_1 = arith.constant 0 : i32
    return %c0_i32, %c0_i32_0 : i32, i32
  }
  func.func @transform_11(%arg0: i32, %arg1: i32) -> (i32, i32) {
    %c0_i32 = arith.constant 0 : i32
    %c0_i32_0 = arith.constant 0 : i32
    %c0_i32_1 = arith.constant 0 : i32
    return %c0_i32, %c0_i32_0 : i32, i32
  }
  func.func @transform_12(%arg0: i32, %arg1: i32) -> (i32, i32, i32) {
    %c0_i32 = arith.constant 0 : i32
    %c0_i32_0 = arith.constant 0 : i32
    return %arg0, %arg1, %c0_i32 : i32, i32, i32
  }
}

module attributes {stable_mosaic.version = 11 : i64} {
  func.func @_ffn_branch_kernel(%arg0: i32, %arg1: memref<16x32xf32, #tpu.memory_space<vmem>>, %arg2: memref<1x32xf32, #tpu.memory_space<vmem>>, %arg3: memref<1x32xf32, #tpu.memory_space<vmem>>, %arg4: memref<32x64xbf16, #tpu.memory_space<vmem>>, %arg5: memref<1x64xf32, #tpu.memory_space<vmem>>, %arg6: memref<64x32xbf16, #tpu.memory_space<vmem>>, %arg7: memref<1x32xf32, #tpu.memory_space<vmem>>, %arg8: memref<1x1xf32, #tpu.memory_space<smem>>, %arg9: memref<16x32xf32, #tpu.memory_space<vmem>>) attributes {dimension_semantics = [#tpu.dimension_semantics<parallel>], iteration_bounds = array<i64: 1>, scalar_prefetch = 0 : i64, scratch_operands = 0 : i64, tpu.core_type = #tpu.core_type<tc>, window_params = [{transform_indices = @transform_0, window_bounds = array<i64: 16, 32>}, {pipeline_mode = #tpu.pipeline_mode<synchronous>, transform_indices = @transform_1, window_bounds = array<i64: 1, 32>}, {pipeline_mode = #tpu.pipeline_mode<synchronous>, transform_indices = @transform_2, window_bounds = array<i64: 1, 32>}, {pipeline_mode = #tpu.pipeline_mode<synchronous>, transform_indices = @transform_3, window_bounds = array<i64: 32, 64>}, {pipeline_mode = #tpu.pipeline_mode<synchronous>, transform_indices = @transform_4, window_bounds = array<i64: 1, 64>}, {pipeline_mode = #tpu.pipeline_mode<synchronous>, transform_indices = @transform_5, window_bounds = array<i64: 64, 32>}, {pipeline_mode = #tpu.pipeline_mode<synchronous>, transform_indices = @transform_6, window_bounds = array<i64: 1, 32>}, {transform_indices = @transform_7, window_bounds = array<i64: 1, 1>}, {transform_indices = @transform_8, window_bounds = array<i64: 16, 32>}]} {
    %c0 = arith.constant 0 : index
    %c0_0 = arith.constant 0 : index
    %0 = vector.load %arg1[%c0, %c0_0] : memref<16x32xf32, #tpu.memory_space<vmem>>, vector<16x32xf32>
    %c0_1 = arith.constant 0 : index
    %c0_2 = arith.constant 0 : index
    %1 = vector.load %arg2[%c0_1, %c0_2] : memref<1x32xf32, #tpu.memory_space<vmem>>, vector<1x32xf32>
    %c0_3 = arith.constant 0 : index
    %c0_4 = arith.constant 0 : index
    %2 = vector.load %arg3[%c0_3, %c0_4] : memref<1x32xf32, #tpu.memory_space<vmem>>, vector<1x32xf32>
    %cst = arith.constant dense<0.000000e+00> : vector<16xf32>
    %3 = vector.multi_reduction <add>, %0, %cst [1] : vector<16x32xf32> to vector<16xf32>
    %4 = vector.shape_cast %3 : vector<16xf32> to vector<16x1xf32>
    %cst_5 = arith.constant 3.200000e+01 : f32
    %5 = vector.broadcast %cst_5 : f32 to vector<16x1xf32>
    %6 = arith.divf %4, %5 : vector<16x1xf32>
    %7 = vector.broadcast %6 : vector<16x1xf32> to vector<16x32xf32>
    %8 = arith.subf %0, %7 : vector<16x32xf32>
    %9 = arith.mulf %8, %8 : vector<16x32xf32>
    %cst_6 = arith.constant dense<0.000000e+00> : vector<16xf32>
    %10 = vector.multi_reduction <add>, %9, %cst_6 [1] : vector<16x32xf32> to vector<16xf32>
    %11 = vector.shape_cast %10 : vector<16xf32> to vector<16x1xf32>
    %cst_7 = arith.constant 3.200000e+01 : f32
    %12 = vector.broadcast %cst_7 : f32 to vector<16x1xf32>
    %13 = arith.divf %11, %12 : vector<16x1xf32>
    %14 = vector.broadcast %6 : vector<16x1xf32> to vector<16x32xf32>
    %15 = arith.subf %0, %14 : vector<16x32xf32>
    %cst_8 = arith.constant 9.99999974E-6 : f32
    %16 = vector.broadcast %cst_8 : f32 to vector<16x1xf32>
    %17 = arith.addf %13, %16 : vector<16x1xf32>
    %18 = math.rsqrt %17 : vector<16x1xf32>
    %19 = vector.broadcast %18 : vector<16x1xf32> to vector<16x32xf32>
    %20 = arith.mulf %15, %19 : vector<16x32xf32>
    %21 = vector.broadcast %1 : vector<1x32xf32> to vector<16x32xf32>
    %22 = arith.mulf %20, %21 : vector<16x32xf32>
    %23 = vector.broadcast %2 : vector<1x32xf32> to vector<16x32xf32>
    %24 = arith.addf %22, %23 : vector<16x32xf32>
    %25 = arith.truncf %24 : vector<16x32xf32> to vector<16x32xbf16>
    %c0_9 = arith.constant 0 : index
    %c0_10 = arith.constant 0 : index
    %26 = vector.load %arg4[%c0_9, %c0_10] : memref<32x64xbf16, #tpu.memory_space<vmem>>, vector<32x64xbf16>
    %cst_11 = arith.constant dense<0.000000e+00> : vector<16x64xf32>
    %27 = tpu.matmul %25, %26, %cst_11 {dimension_numbers = #tpu.dot_dimension_numbers<[1], [0], [0], [1], [0, 0, 1, 1], [], []>} : vector<16x32xbf16>, vector<32x64xbf16>, vector<16x64xf32> -> vector<16x64xf32>
    %c0_12 = arith.constant 0 : index
    %c0_13 = arith.constant 0 : index
    %28 = vector.load %arg5[%c0_12, %c0_13] : memref<1x64xf32, #tpu.memory_space<vmem>>, vector<1x64xf32>
    %29 = vector.broadcast %28 : vector<1x64xf32> to vector<16x64xf32>
    %30 = arith.addf %27, %29 : vector<16x64xf32>
    %cst_14 = arith.constant 0.000000e+00 : f32
    %31 = vector.broadcast %cst_14 : f32 to vector<16x64xf32>
    %32 = arith.maximumf %30, %31 : vector<16x64xf32>
    %33 = arith.truncf %32 : vector<16x64xf32> to vector<16x64xbf16>
    %c0_15 = arith.constant 0 : index
    %c0_16 = arith.constant 0 : index
    %34 = vector.load %arg6[%c0_15, %c0_16] : memref<64x32xbf16, #tpu.memory_space<vmem>>, vector<64x32xbf16>
    %cst_17 = arith.constant dense<0.000000e+00> : vector<16x32xf32>
    %35 = tpu.matmul %33, %34, %cst_17 {dimension_numbers = #tpu.dot_dimension_numbers<[1], [0], [0], [1], [0, 0, 1, 1], [], []>} : vector<16x64xbf16>, vector<64x32xbf16>, vector<16x32xf32> -> vector<16x32xf32>
    %c0_18 = arith.constant 0 : index
    %c0_19 = arith.constant 0 : index
    %36 = vector.load %arg7[%c0_18, %c0_19] : memref<1x32xf32, #tpu.memory_space<vmem>>, vector<1x32xf32>
    %37 = vector.broadcast %36 : vector<1x32xf32> to vector<16x32xf32>
    %38 = arith.addf %35, %37 : vector<16x32xf32>
    %c0_20 = arith.constant 0 : index
    %c0_21 = arith.constant 0 : index
    %39 = memref.load %arg8[%c0_20, %c0_21] : memref<1x1xf32, #tpu.memory_space<smem>>
    %40 = vector.broadcast %39 : f32 to vector<16x32xf32>
    %41 = arith.mulf %40, %38 : vector<16x32xf32>
    %42 = arith.addf %0, %41 : vector<16x32xf32>
    %c0_22 = arith.constant 0 : index
    %c0_23 = arith.constant 0 : index
    %43 = vector.load %arg9[%c0_22, %c0_23] : memref<16x32xf32, #tpu.memory_space<vmem>>, vector<16x32xf32>
    tpu.vector_store %arg9[%c0_22, %c0_23], %42 {strides = array<i32>} : memref<16x32xf32, #tpu.memory_space<vmem>>, vector<16x32xf32>,
    return
  }
  func.func @transform_0(%arg0: i32) -> (i32, i32) {
    %c0_i32 = arith.constant 0 : i32
    %c0_i32_0 = arith.constant 0 : i32
    return %arg0, %c0_i32 : i32, i32
  }
  func.func @transform_1(%arg0: i32) -> (i32, i32) {
    %c0_i32 = arith.constant 0 : i32
    %c0_i32_0 = arith.constant 0 : i32
    %c0_i32_1 = arith.constant 0 : i32
    return %c0_i32, %c0_i32_0 : i32, i32
  }
  func.func @transform_2(%arg0: i32) -> (i32, i32) {
    %c0_i32 = arith.constant 0 : i32
    %c0_i32_0 = arith.constant 0 : i32
    %c0_i32_1 = arith.constant 0 : i32
    return %c0_i32, %c0_i32_0 : i32, i32
  }
  func.func @transform_3(%arg0: i32) -> (i32, i32) {
    %c0_i32 = arith.constant 0 : i32
    %c0_i32_0 = arith.constant 0 : i32
    %c0_i32_1 = arith.constant 0 : i32
    return %c0_i32, %c0_i32_0 : i32, i32
  }
  func.func @transform_4(%arg0: i32) -> (i32, i32) {
    %c0_i32 = arith.constant 0 : i32
    %c0_i32_0 = arith.constant 0 : i32
    %c0_i32_1 = arith.constant 0 : i32
    return %c0_i32, %c0_i32_0 : i32, i32
  }
  func.func @transform_5(%arg0: i32) -> (i32, i32) {
    %c0_i32 = arith.constant 0 : i32
    %c0_i32_0 = arith.constant 0 : i32
    %c0_i32_1 = arith.constant 0 : i32
    return %c0_i32, %c0_i32_0 : i32, i32
  }
  func.func @transform_6(%arg0: i32) -> (i32, i32) {
    %c0_i32 = arith.constant 0 : i32
    %c0_i32_0 = arith.constant 0 : i32
    %c0_i32_1 = arith.constant 0 : i32
    return %c0_i32, %c0_i32_0 : i32, i32
  }
  func.func @transform_7(%arg0: i32) -> (i32, i32) {
    %c0_i32 = arith.constant 0 : i32
    %c0_i32_0 = arith.constant 0 : i32
    %c0_i32_1 = arith.constant 0 : i32
    return %c0_i32, %c0_i32_0 : i32, i32
  }
  func.func @transform_8(%arg0: i32) -> (i32, i32) {
    %c0_i32 = arith.constant 0 : i32
    %c0_i32_0 = arith.constant 0 : i32
    return %arg0, %c0_i32 : i32, i32
  }
}

</mosaic_0001>

<llo_original>
// kernel: decoder_block.5
$region0: #{decoder_block.5}
  #allocation0 [shape = 'u32[]', space=smem, size = 0x4, offset = 0x4, fixed_abs, tag = 'smem constant byte address 0x4 - core index']
  #allocation1 [shape = 'u32[144,128]{1,0:T(1,128)}', space=vmem, size = 0x12000, scoped, tag = 'internal scratch']
  #allocation2 [shape = 'f32[1,1]{1,0:T(1,128)S(6)}', space=smem, size = 0x200, scoped, tag = 'scoped memory for decoder_block.5']
  %s0 = inlined_call_operand.vmem [shape: f32[16,32], index: 0, kind: input, shape index: {}]
  %s1 = inlined_call_operand.vmem [shape: f32[1,32], index: 1, kind: input, shape index: {}]
  %s2 = inlined_call_operand.vmem [shape: f32[1,32], index: 2, kind: input, shape index: {}]
  %s3 = inlined_call_operand.vmem [shape: bf16[32,64], index: 3, kind: input, shape index: {}]
  %s4 = inlined_call_operand.vmem [shape: f32[1,64], index: 4, kind: input, shape index: {}]
  %s5 = inlined_call_operand.vmem [shape: bf16[64,32], index: 5, kind: input, shape index: {}]
  %s6 = inlined_call_operand.vmem [shape: f32[1,32], index: 6, kind: input, shape index: {}]
  %s7 = inlined_call_operand.<no memory space> [shape: f32[1,1], index: 7, kind: input, shape index: {}]
  %s8 = inlined_call_operand.hbm [shape: f32[16,32], index: 8, kind: output, shape index: {}]
  %s9 = sld [smem:[#allocation0]]
  $region42: #{decoder_block.5} parent=0
    _
  %s11 = ssub.s32 1, %s9
  %s12 = scalar_select 0, %s11, %s9
  %13 = sst [smem:[#allocation2]] %s7
  $region1: #{decoder_block.5} parent=0
    #allocation3 [shape = 'u8[8192]{0}', space=vmem, size = 0x2000, scoped, tag = 'output window, operand 0, single buffered']
    #allocation4 [shape = 's32[1]{0}', space=sflag, size = 0x4, scoped, tag = 'scoped memory for decoder_block.5']
    %14 = vsyncpa [#allocation4], 0
    // Predicated region
    $region2: #{decoder_block.5} parent=1 // pred_check
      _
    $region3: #{decoder_block.5} parent=1 // pred_check_branch
      %16 = sbr.rel (0) target = $region5
    $region4: #{decoder_block.5} parent=1 // pred_region
      _
    $region5: #{decoder_block.5} parent=1 // pred_fallthru
      _
    // Predicated region
    $region6: #{decoder_block.5} parent=1 // pred_check
      _
    $region7: #{decoder_block.5} parent=1 // pred_check_branch
      %18 = sbr.rel (0) target = $region9
    $region8: #{decoder_block.5} parent=1 // pred_region
      _
    $region9: #{decoder_block.5} parent=1 // pred_fallthru
      _
    // Predicated region
    $region10: #{decoder_block.5} parent=1 // pred_check
      _
    $region11: #{decoder_block.5} parent=1 // pred_check_branch
      %20 = sbr.rel (0) target = $region13
    $region12: #{decoder_block.5} parent=1 // pred_region
      _
    $region13: #{decoder_block.5} parent=1 // pred_fallthru
      _
    // Predicated region
    $region14: #{decoder_block.5} parent=1 // pred_check
      _
    $region15: #{decoder_block.5} parent=1 // pred_check_branch
      %22 = sbr.rel (0) target = $region17
    $region16: #{decoder_block.5} parent=1 // pred_region
      _
    $region17: #{decoder_block.5} parent=1 // pred_fallthru
      _
    // Predicated region
    $region18: #{decoder_block.5} parent=1 // pred_check
      _
    $region19: #{decoder_block.5} parent=1 // pred_check_branch
      %24 = sbr.rel (0) target = $region21
    $region20: #{decoder_block.5} parent=1 // pred_region
      _
    $region21: #{decoder_block.5} parent=1 // pred_fallthru
      _
    // Predicated region
    $region22: #{decoder_block.5} parent=1 // pred_check
      _
    $region23: #{decoder_block.5} parent=1 // pred_check_branch
      %26 = sbr.rel (0) target = $region25
    $region24: #{decoder_block.5} parent=1 // pred_region
      _
    $region25: #{decoder_block.5} parent=1 // pred_fallthru
      _
    // Predicated region
    $region26: #{decoder_block.5} parent=1 // pred_check
      _
    $region27: #{decoder_block.5} parent=1 // pred_check_branch
      %28 = sbr.rel (0) target = $region29
    $region28: #{decoder_block.5} parent=1 // pred_region
      _
    $region29: #{decoder_block.5} parent=1 // pred_fallthru
      _
    // Predicated region
    $region30: #{decoder_block.5} parent=1 // pred_check
      _
    $region31: #{decoder_block.5} parent=1 // pred_check_branch
      %30 = sbr.rel (0) target = $region33
    $region32: #{decoder_block.5} parent=1 // pred_region
      _
    $region33: #{decoder_block.5} parent=1 // pred_fallthru
      _
    %v32 = vld [vmem:[%s0] sm:$0xff]
    %v33 = vld [vmem:[%s0 + $0x8] sm:$0xff]
    %v34 = vld [vmem:[%s1] sm:$0x1]
    %v35 = vld [vmem:[%s2] sm:$0x1]
    %vm36 = vcmask 261120
    %v37 = vsel %vm36, %v32, 0.0
    %38 = vadd.xlane.f32.xlu0 %v37
    %v39 = vpop.xlane.xlu0 %38
    %v40 = vsel %vm36, %v33, 0.0
    %41 = vadd.xlane.f32.xlu0 %v40
    %v42 = vpop.xlane.xlu0 %41
    %v43 = vrcp.pop 32.0
    %v44 = vmul.f32 %v39, %v43
    %v45 = vmul.f32 %v42, %v43
    %v46 = vsub.f32 %v32, %v44
    %v47 = vsub.f32 %v33, %v45
    %v48 = vmul.f32 %v46, %v46
    %v49 = vmul.f32 %v47, %v47
    %v50 = vsel %vm36, %v48, 0.0
    %51 = vadd.xlane.f32.xlu0 %v50
    %v52 = vpop.xlane.xlu0 %51
    %v53 = vsel %vm36, %v49, 0.0
    %54 = vadd.xlane.f32.xlu0 %v53
    %v55 = vpop.xlane.xlu0 %54
    %v56 = vmul.f32 %v52, %v43
    %v57 = vmul.f32 %v55, %v43
    %v58 = vadd.f32 %v56, 1e-05
    %v59 = vadd.f32 %v57, 1e-05
    %v60 = vrsqrt.pop %v58
    %v61 = vrsqrt.pop %v59
    %v62 = vmul.f32 %v46, %v60
    %v63 = vmul.f32 %v47, %v61
    %v65 = vlaneseq
    %v66 = vshrl.u32 %v65, 7
    %v67 = vsub.s32 0, %v66
    %v68 = vrot.slane %v34, %v67
    %v70 = vmul.f32 %v62, %v68
    %v71 = vmul.f32 %v63, %v68
    %v73 = vlaneseq
    %v74 = vshrl.u32 %v73, 7
    %v75 = vsub.s32 0, %v74
    %v76 = vrot.slane %v35, %v75
    %v78 = vadd.f32 %v70, %v76
    %v79 = vadd.f32 %v71, %v76
    %v80 = vpack.c.bf16 %v79, %v78
    %v81 = vld [vmem:[%s3] sm:$0xf]
    %v82 = vld [vmem:[%s3 + $0x4] sm:$0xf]
    %v83 = vld [vmem:[%s3 + $0x8] sm:$0xf]
    %v84 = vld [vmem:[%s3 + $0xc] sm:$0xf]
    %v85 = vld [vmem:[%s4] sm:$0x1]
    %v87 = vlaneseq
    %v88 = vshrl.u32 %v87, 7
    %v89 = vsub.s32 0, %v88
    %v90 = vrot.slane %v85, %v89
    %v96 = vunpack.c.l.b16 %v81
    %v97 = vunpack.c.l.b16 %v82
    %v98 = vunpack.c.l.b16 %v83
    %v99 = vunpack.c.l.b16 %v84
    %v100 = vpack.c.b16 %v97, %v96
    %v101 = vpack.c.b16 %v99, %v98
    %v105 = vsel %vm36, %v80, 0
    %107 = vmatprep.subr.bf16.mxu0 0
    %108 = vmatpush1.bf16.msra.mxu0 0
    %109 = vmatprep.subr.bf16.mxu0 0
    %110 = vmatpush1.bf16.msra.mxu0 0
    %111 = vmatprep.subr.bf16.mxu0 0
    %112 = vmatpush1.bf16.msra.mxu0 0
    %113 = vmatprep.subr.bf16.mxu0 0
    %114 = vmatpush1.bf16.msra.mxu0 0
    %115 = vmatprep.subr.bf16.mxu0 0
    %116 = vmatpush1.bf16.msra.mxu0 0
    %117 = vmatprep.subr.bf16.mxu0 0
    %118 = vmatpush1.bf16.msra.mxu0 0
    %119 = vmatprep.subr.bf16.mxu0 0
    %120 = vmatpush1.bf16.msra.mxu0 %v101
    %121 = vmatprep.subr.bf16.mxu0 0
    %122 = vmatpush1.bf16.msra.mxu0 %v100
    %123 = vmatprep.subr.bf16.mxu0 0
    %124 = vmatpush2.bf16.msra.mxu0 0
    %125 = vmatprep.subr.bf16.mxu0 0
    %126 = vmatpush2.bf16.msra.mxu0 0
    %127 = vmatprep.subr.bf16.mxu0 0
    %128 = vmatpush2.bf16.msra.mxu0 0
    %129 = vmatprep.subr.bf16.mxu0 0
    %130 = vmatpush2.bf16.msra.mxu0 0
    %131 = vmatprep.subr.bf16.mxu0 0
    %132 = vmatpush2.bf16.msra.mxu0 0
    %133 = vmatprep.subr.bf16.mxu0 0
    %134 = vmatpush2.bf16.msra.mxu0 0
    %135 = vmatprep.subr.bf16.mxu0 0
    %136 = vmatpush2.bf16.msra.mxu0 0
    %137 = vmatprep.subr.bf16.mxu0 0
    %138 = vmatpush2.bf16.msra.mxu0 0
    %139 = vmatprep.mubr.bf16.mxu0 0
    %140 = vmatmul.mubr.bf16.gmra.mxu0 %v105
    %v141 = vpop.f32.mrf.mxu0
    %v142 = vadd.f32 %v90, %v141
    %v143 = vpop.f32.mrf.mxu0
    %v144 = vpop.f32.mrf.mxu0
    %v145 = vadd.f32 %v90, %v144
    %v146 = vpop.f32.mrf.mxu0
    %147 = vdwg.mxu0
    %v148 = vmax.f32 %v142, 0.0
    %v149 = vmax.f32 %v145, 0.0
    %v150 = vpack.c.bf16 %v149, %v148
    %v151 = vld [vmem:[%s5] sm:$0xf]
    %v152 = vld [vmem:[%s5 + $0x4] sm:$0xf]
    %v153 = vld [vmem:[%s5 + $0x8] sm:$0xf]
    %v154 = vld [vmem:[%s5 + $0xc] sm:$0xf]
    %v155 = vld [vmem:[%s5 + $0x10] sm:$0xf]
    %v156 = vld [vmem:[%s5 + $0x14] sm:$0xf]
    %v157 = vld [vmem:[%s5 + $0x18] sm:$0xf]
    %v158 = vld [vmem:[%s5 + $0x1c] sm:$0xf]
    %v159 = vld [vmem:[%s6] sm:$0x1]
    %v161 = vlaneseq
    %v162 = vshrl.u32 %v161, 7
    %v163 = vsub.s32 0, %v162
    %v164 = vrot.slane %v159, %v163
    %v174 = vunpack.c.l.b16 %v151
    %v175 = vunpack.c.l.b16 %v152
    %v176 = vunpack.c.l.b16 %v153
    %v177 = vunpack.c.l.b16 %v154
    %v178 = vunpack.c.l.b16 %v155
    %v179 = vunpack.c.l.b16 %v156
    %v180 = vunpack.c.l.b16 %v157
    %v181 = vunpack.c.l.b16 %v158
    %v182 = vpack.c.b16 %v175, %v174
    %v183 = vpack.c.b16 %v177, %v176
    %v184 = vpack.c.b16 %v179, %v178
    %v185 = vpack.c.b16 %v181, %v180
    %vm190 = vcmask 523264
    %v192 = vsel %vm190, %v150, 0
    %194 = vmatprep.subr.bf16.mxu0 0
    %195 = vmatpush1.bf16.msra.mxu0 0
    %196 = vmatprep.subr.bf16.mxu0 0
    %197 = vmatpush1.bf16.msra.mxu0 0
    %198 = vmatprep.subr.bf16.mxu0 0
    %199 = vmatpush1.bf16.msra.mxu0 0
    %200 = vmatprep.subr.bf16.mxu0 0
    %201 = vmatpush1.bf16.msra.mxu0 0
    %202 = vmatprep.subr.bf16.mxu0 0
    %203 = vmatpush1.bf16.msra.mxu0 %v185
    %204 = vmatprep.subr.bf16.mxu0 0
    %205 = vmatpush1.bf16.msra.mxu0 %v184
    %206 = vmatprep.subr.bf16.mxu0 0
    %207 = vmatpush1.bf16.msra.mxu0 %v183
    %208 = vmatprep.subr.bf16.mxu0 0
    %209 = vmatpush1.bf16.msra.mxu0 %v182
    %210 = vmatprep.subr.bf16.mxu0 0
    %211 = vmatpush2.bf16.msra.mxu0 0
    %212 = vmatprep.subr.bf16.mxu0 0
    %213 = vmatpush2.bf16.msra.mxu0 0
    %214 = vmatprep.subr.bf16.mxu0 0
    %215 = vmatpush2.bf16.msra.mxu0 0
    %216 = vmatprep.subr.bf16.mxu0 0
    %217 = vmatpush2.bf16.msra.mxu0 0
    %218 = vmatprep.subr.bf16.mxu0 0
    %219 = vmatpush2.bf16.msra.mxu0 0
    %220 = vmatprep.subr.bf16.mxu0 0
    %221 = vmatpush2.bf16.msra.mxu0 0
    %222 = vmatprep.subr.bf16.mxu0 0
    %223 = vmatpush2.bf16.msra.mxu0 0
    %224 = vmatprep.subr.bf16.mxu0 0
    %225 = vmatpush2.bf16.msra.mxu0 0
    %226 = vmatprep.mubr.bf16.mxu0 0
    %227 = vmatmul.mubr.bf16.gmra.mxu0 %v192
    %v228 = vpop.f32.mrf.mxu0
    %v229 = vadd.f32 %v164, %v228
    %v230 = vpop.f32.mrf.mxu0
    %v231 = vpop.f32.mrf.mxu0
    %v232 = vadd.f32 %v164, %v231
    %v233 = vpop.f32.mrf.mxu0
    %234 = vdwg.mxu0
    %s235 = sld [smem:[#allocation2]]
    %v236 = vstv %s235
    %v237 = vmul.f32 %v236, %v229
    %v238 = vmul.f32 %v236, %v232
    %v239 = vadd.f32 %v32, %v237
    %v240 = vadd.f32 %v33, %v238
    %241 = vst.msk [vmem:[#allocation3] sm:$0xff] %vm36, %v239
    %242 = vst.msk [vmem:[#allocation3 + $0x8] sm:$0xff] %vm36, %v240
    // Predicated region
    $region34: #{decoder_block.5} parent=1 // pred_check
      _
    $region35: #{decoder_block.5} parent=1 // pred_check_branch
      %244 = sbr.rel (0) target = $region37
    $region36: #{decoder_block.5} parent=1 // pred_region
      %s246 = ssub.s32 256, 256
      %247 = vsyncadd [#allocation4], %s246
      %s248 = sshll.u32 [#allocation3], 4
      %s249 = int_to_ptr.vmem [resolvable:$true] %s248
      %254 = dma.vmem_to_hbm [thread:$0]  %s249, 256, %s8, [#allocation4], 128, 128, 8
    $region37: #{decoder_block.5} parent=1 // pred_fallthru
      _
    // Predicated region
    $region38: #{decoder_block.5} parent=1 // pred_check
      _
    $region39: #{decoder_block.5} parent=1 // pred_check_branch
      %256 = sbr.rel (0) target = $region41
    $region40: #{decoder_block.5} parent=1 // pred_region
      %257 = dma.done [#allocation4], 256
    $region41: #{decoder_block.5} parent=1 // pred_fallthru
      _
    %258 = vsyncpa [#allocation4], 1

// kernel: decoder_block.3
$region0: #{decoder_block.3}
  #allocation0 [shape = 'u32[]', space=smem, size = 0x4, offset = 0x4, fixed_abs, tag = 'smem constant byte address 0x4 - core index']
  #allocation1 [shape = 'u32[144,128]{1,0:T(1,128)}', space=vmem, size = 0x12000, scoped, tag = 'internal scratch']
  #allocation2 [shape = 'f32[1,1]{1,0:T(1,128)S(6)}', space=smem, size = 0x200, scoped, tag = 'scoped memory for decoder_block.3']
  %s0 = inlined_call_operand.vmem [shape: f32[2,8,32], index: 0, kind: input, shape index: {}, may-alias: {0,1}]
  %s1 = inlined_call_operand.vmem [shape: f32[2,8,32], index: 1, kind: input, shape index: {}, may-alias: {0,1}]
  %s2 = inlined_call_operand.vmem [shape: f32[2,1,8], index: 2, kind: input, shape index: {}]
  %s3 = inlined_call_operand.vmem [shape: f32[1,32], index: 3, kind: input, shape index: {}]
  %s4 = inlined_call_operand.vmem [shape: f32[1,32], index: 4, kind: input, shape index: {}]
  %s5 = inlined_call_operand.vmem [shape: bf16[32,32], index: 5, kind: input, shape index: {}]
  %s6 = inlined_call_operand.vmem [shape: f32[1,32], index: 6, kind: input, shape index: {}]
  %s7 = inlined_call_operand.vmem [shape: bf16[32,64], index: 7, kind: input, shape index: {}]
  %s8 = inlined_call_operand.vmem [shape: f32[1,64], index: 8, kind: input, shape index: {}]
  %s9 = inlined_call_operand.vmem [shape: bf16[32,32], index: 9, kind: input, shape index: {}]
  %s10 = inlined_call_operand.vmem [shape: f32[1,32], index: 10, kind: input, shape index: {}]
  %s11 = inlined_call_operand.<no memory space> [shape: f32[1,1], index: 11, kind: input, shape index: {}]
  %s12 = inlined_call_operand.vmem [shape: f32[2,8,32], index: 12, kind: output, shape index: {}]
  %s13 = sld [smem:[#allocation0]]
  $region81: #{decoder_block.3} parent=0
    _
  %s15 = ssub.s32 1, %s13
  %s16 = scalar_select 0, %s15, %s13
  %17 = sst [smem:[#allocation2]] %s11
  loop: start=0, step=1, limit=4
  $region2: #{decoder_block.3} parent=0 // loop_pre_header
    _
  $region3: #{decoder_block.3} parent=0 // loop_header
    %s19 = sphi 0, %s23
    %p20 = scmp.ge.s32.totalorder %s19, 4
    %s26 = sphi 0, %s38
    %s27 = sphi 0, %s34
    %s28 = sphi 0, %s26
    %s29 = sphi 0, %s27
    %s30 = sphi 0, %s28
    %s31 = sphi 0, %s29
    %s43 = sphi 0, %s45
    %s46 = sphi 0, %s43
    %s47 = sphi 0, %s46
    %s63 = sphi 0, %s47
    %s69 = sphi 0, %s71
    %s72 = sphi 0, %s69
    %s73 = sphi 0, %s72
    %s89 = sphi 0, %s73
    %s95 = sphi 0, %s97
    %s98 = sphi 0, %s95
    %s99 = sphi 0, %s98
    %s115 = sphi 0, %s99
    %s119 = sphi 0, %s119
    %s121 = sphi 0, %s119
    %s122 = sphi 0, %s121
    %s136 = sphi 0, %s122
    %s140 = sphi 0, %s140
    %s142 = sphi 0, %s140
    %s143 = sphi 0, %s142
    %s157 = sphi 0, %s143
    %s161 = sphi 0, %s161
    %s163 = sphi 0, %s161
    %s164 = sphi 0, %s163
    %s178 = sphi 0, %s164
    %s182 = sphi 0, %s182
    %s184 = sphi 0, %s182
    %s185 = sphi 0, %s184
    %s199 = sphi 0, %s185
    %s203 = sphi 0, %s203
    %s205 = sphi 0, %s203
    %s206 = sphi 0, %s205
    %s220 = sphi 0, %s206
    %s224 = sphi 0, %s224
    %s226 = sphi 0, %s224
    %s227 = sphi 0, %s226
    %s241 = sphi 0, %s227
    %s245 = sphi 0, %s245
    %s247 = sphi 0, %s245
    %s248 = sphi 0, %s247
    %s262 = sphi 0, %s248
    %s266 = sphi 0, %s266
    %s268 = sphi 0, %s266
    %s269 = sphi 0, %s268
    %s283 = sphi 0, %s269
    %s287 = sphi 0, %s287
    %s289 = sphi 0, %s287
    %s290 = sphi 0, %s289
    %s304 = sphi 0, %s290
    %s312 = sphi 0, %s314
    %s315 = sphi 0, %s312
    %s316 = sphi 0, %s315
    %s332 = sphi 0, %s316
  $region4: #{decoder_block.3} parent=0 // loop_header_branch
    %22 = sbr.rel (%p20) target = $region8
  $region5: #{decoder_block.3} parent=0 // loop_body
    %s24 = ssub.s32 %s19, 1
    %s25 = ssub.s32 %s19, 2
    %s32 = sadd.s32 1, %s27
    %p33 = scmp.ge.s32.totalorder %s32, 1
    %s34 = scalar_select %p33, 0, %s32
    %s35 = sadd.s32 1, %s26
    %s36 = scalar_select %p33, %s35, %s26
    %p37 = scmp.ge.s32.totalorder %s36, 2
    %s38 = scalar_select %p37, 0, %s36
    %s39 = ssub.s32 %s26, %s38
    %s40 = ssub.s32 %s27, %s34
    %s41 = sor.u32 %s39, %s40
    %p42 = scmp.eq.s32.totalorder %s41, 0
    %s44 = sadd.s32 %s43, 1
    %s45 = scalar_select %p42, %s43, %s44
    %p48 = pneg %p42
    %p49 = scmp.eq.s32.totalorder %s19, 1
    %p50 = por %p48, %p49
    %p51 = scmp.ne.s32.totalorder %s43, %s46
    %p52 = scmp.eq.s32.totalorder %s19, 0
    %p53 = por %p51, %p52
    %p54 = scmp.ne.s32.totalorder %s43, %s46
    %p55 = scmp.eq.s32.totalorder %s24, 1
    %p56 = por %p54, %p55
    %p57 = scmp.ne.s32.totalorder %s46, %s47
    %p58 = scmp.eq.s32.totalorder %s24, 0
    %p59 = por %p57, %p58
    %p60 = scmp.ne.s32.totalorder %s46, %s47
    %p61 = scmp.eq.s32.totalorder %s25, 1
    %p62 = por %p60, %p61
    %p64 = scmp.ne.s32.totalorder %s47, %s63
    %p65 = scmp.eq.s32.totalorder %s25, 0
    %p66 = por %p64, %p65
    %s67 = ssub.s32 %s26, %s38
    %p68 = scmp.eq.s32.totalorder %s67, 0
    %s70 = sadd.s32 %s69, 1
    %s71 = scalar_select %p68, %s69, %s70
    %p74 = pneg %p68
    %p75 = scmp.eq.s32.totalorder %s19, 1
    %p76 = por %p74, %p75
    %p77 = scmp.ne.s32.totalorder %s69, %s72
    %p78 = scmp.eq.s32.totalorder %s19, 0
    %p79 = por %p77, %p78
    %p80 = scmp.ne.s32.totalorder %s69, %s72
    %p81 = scmp.eq.s32.totalorder %s24, 1
    %p82 = por %p80, %p81
    %p83 = scmp.ne.s32.totalorder %s72, %s73
    %p84 = scmp.eq.s32.totalorder %s24, 0
    %p85 = por %p83, %p84
    %p86 = scmp.ne.s32.totalorder %s72, %s73
    %p87 = scmp.eq.s32.totalorder %s25, 1
    %p88 = por %p86, %p87
    %p90 = scmp.ne.s32.totalorder %s73, %s89
    %p91 = scmp.eq.s32.totalorder %s25, 0
    %p92 = por %p90, %p91
    %s93 = ssub.s32 %s26, %s38
    %p94 = scmp.eq.s32.totalorder %s93, 0
    %s96 = sadd.s32 %s95, 1
    %s97 = scalar_select %p94, %s95, %s96
    %p100 = pneg %p94
    %p101 = scmp.eq.s32.totalorder %s19, 1
    %p102 = por %p100, %p101
    %p103 = scmp.ne.s32.totalorder %s95, %s98
    %p104 = scmp.eq.s32.totalorder %s19, 0
    %p105 = por %p103, %p104
    %p106 = scmp.ne.s32.totalorder %s95, %s98
    %p107 = scmp.eq.s32.totalorder %s24, 1
    %p108 = por %p106, %p107
    %p109 = scmp.ne.s32.totalorder %s98, %s99
    %p110 = scmp.eq.s32.totalorder %s24, 0
    %p111 = por %p109, %p110
    %p112 = scmp.ne.s32.totalorder %s98, %s99
    %p113 = scmp.eq.s32.totalorder %s25, 1
    %p114 = por %p112, %p113
    %p116 = scmp.ne.s32.totalorder %s99, %s115
    %p117 = scmp.eq.s32.totalorder %s25, 0
    %p118 = por %p116, %p117
    %s120 = sadd.s32 %s119, 1
    %p123 = scmp.eq.s32.totalorder %s19, 1
    %p124 = scmp.ne.s32.totalorder %s119, %s121
    %p125 = scmp.eq.s32.totalorder %s19, 0
    %p126 = por %p124, %p125
    %p127 = scmp.ne.s32.totalorder %s119, %s121
    %p128 = scmp.eq.s32.totalorder %s24, 1
    %p129 = por %p127, %p128
    %p130 = scmp.ne.s32.totalorder %s121, %s122
    %p131 = scmp.eq.s32.totalorder %s24, 0
    %p132 = por %p130, %p131
    %p133 = scmp.ne.s32.totalorder %s121, %s122
    %p134 = scmp.eq.s32.totalorder %s25, 1
    %p135 = por %p133, %p134
    %p137 = scmp.ne.s32.totalorder %s122, %s136
    %p138 = scmp.eq.s32.totalorder %s25, 0
    %p139 = por %p137, %p138
    %s141 = sadd.s32 %s140, 1
    %p144 = scmp.eq.s32.totalorder %s19, 1
    %p145 = scmp.ne.s32.totalorder %s140, %s142
    %p146 = scmp.eq.s32.totalorder %s19, 0
    %p147 = por %p145, %p146
    %p148 = scmp.ne.s32.totalorder %s140, %s142
    %p149 = scmp.eq.s32.totalorder %s24, 1
    %p150 = por %p148, %p149
    %p151 = scmp.ne.s32.totalorder %s142, %s143
    %p152 = scmp.eq.s32.totalorder %s24, 0
    %p153 = por %p151, %p152
    %p154 = scmp.ne.s32.totalorder %s142, %s143
    %p155 = scmp.eq.s32.totalorder %s25, 1
    %p156 = por %p154, %p155
    %p158 = scmp.ne.s32.totalorder %s143, %s157
    %p159 = scmp.eq.s32.totalorder %s25, 0
    %p160 = por %p158, %p159
    %s162 = sadd.s32 %s161, 1
    %p165 = scmp.eq.s32.totalorder %s19, 1
    %p166 = scmp.ne.s32.totalorder %s161, %s163
    %p167 = scmp.eq.s32.totalorder %s19, 0
    %p168 = por %p166, %p167
    %p169 = scmp.ne.s32.totalorder %s161, %s163
    %p170 = scmp.eq.s32.totalorder %s24, 1
    %p171 = por %p169, %p170
    %p172 = scmp.ne.s32.totalorder %s163, %s164
    %p173 = scmp.eq.s32.totalorder %s24, 0
    %p174 = por %p172, %p173
    %p175 = scmp.ne.s32.totalorder %s163, %s164
    %p176 = scmp.eq.s32.totalorder %s25, 1
    %p177 = por %p175, %p176
    %p179 = scmp.ne.s32.totalorder %s164, %s178
    %p180 = scmp.eq.s32.totalorder %s25, 0
    %p181 = por %p179, %p180
    %s183 = sadd.s32 %s182, 1
    %p186 = scmp.eq.s32.totalorder %s19, 1
    %p187 = scmp.ne.s32.totalorder %s182, %s184
    %p188 = scmp.eq.s32.totalorder %s19, 0
    %p189 = por %p187, %p188
    %p190 = scmp.ne.s32.totalorder %s182, %s184
    %p191 = scmp.eq.s32.totalorder %s24, 1
    %p192 = por %p190, %p191
    %p193 = scmp.ne.s32.totalorder %s184, %s185
    %p194 = scmp.eq.s32.totalorder %s24, 0
    %p195 = por %p193, %p194
    %p196 = scmp.ne.s32.totalorder %s184, %s185
    %p197 = scmp.eq.s32.totalorder %s25, 1
    %p198 = por %p196, %p197
    %p200 = scmp.ne.s32.totalorder %s185, %s199
    %p201 = scmp.eq.s32.totalorder %s25, 0
    %p202 = por %p200, %p201
    %s204 = sadd.s32 %s203, 1
    %p207 = scmp.eq.s32.totalorder %s19, 1
    %p208 = scmp.ne.s32.totalorder %s203, %s205
    %p209 = scmp.eq.s32.totalorder %s19, 0
    %p210 = por %p208, %p209
    %p211 = scmp.ne.s32.totalorder %s203, %s205
    %p212 = scmp.eq.s32.totalorder %s24, 1
    %p213 = por %p211, %p212
    %p214 = scmp.ne.s32.totalorder %s205, %s206
    %p215 = scmp.eq.s32.totalorder %s24, 0
    %p216 = por %p214, %p215
    %p217 = scmp.ne.s32.totalorder %s205, %s206
    %p218 = scmp.eq.s32.totalorder %s25, 1
    %p219 = por %p217, %p218
    %p221 = scmp.ne.s32.totalorder %s206, %s220
    %p222 = scmp.eq.s32.totalorder %s25, 0
    %p223 = por %p221, %p222
    %s225 = sadd.s32 %s224, 1
    %p228 = scmp.eq.s32.totalorder %s19, 1
    %p229 = scmp.ne.s32.totalorder %s224, %s226
    %p230 = scmp.eq.s32.totalorder %s19, 0
    %p231 = por %p229, %p230
    %p232 = scmp.ne.s32.totalorder %s224, %s226
    %p233 = scmp.eq.s32.totalorder %s24, 1
    %p234 = por %p232, %p233
    %p235 = scmp.ne.s32.totalorder %s226, %s227
    %p236 = scmp.eq.s32.totalorder %s24, 0
    %p237 = por %p235, %p236
    %p238 = scmp.ne.s32.totalorder %s226, %s227
    %p239 = scmp.eq.s32.totalorder %s25, 1
    %p240 = por %p238, %p239
    %p242 = scmp.ne.s32.totalorder %s227, %s241
    %p243 = scmp.eq.s32.totalorder %s25, 0
    %p244 = por %p242, %p243
    %s246 = sadd.s32 %s245, 1
    %p249 = scmp.eq.s32.totalorder %s19, 1
    %p250 = scmp.ne.s32.totalorder %s245, %s247
    %p251 = scmp.eq.s32.totalorder %s19, 0
    %p252 = por %p250, %p251
    %p253 = scmp.ne.s32.totalorder %s245, %s247
    %p254 = scmp.eq.s32.totalorder %s24, 1
    %p255 = por %p253, %p254
    %p256 = scmp.ne.s32.totalorder %s247, %s248
    %p257 = scmp.eq.s32.totalorder %s24, 0
    %p258 = por %p256, %p257
    %p259 = scmp.ne.s32.totalorder %s247, %s248
    %p260 = scmp.eq.s32.totalorder %s25, 1
    %p261 = por %p259, %p260
    %p263 = scmp.ne.s32.totalorder %s248, %s262
    %p264 = scmp.eq.s32.totalorder %s25, 0
    %p265 = por %p263, %p264
    %s267 = sadd.s32 %s266, 1
    %p270 = scmp.eq.s32.totalorder %s19, 1
    %p271 = scmp.ne.s32.totalorder %s266, %s268
    %p272 = scmp.eq.s32.totalorder %s19, 0
    %p273 = por %p271, %p272
    %p274 = scmp.ne.s32.totalorder %s266, %s268
    %p275 = scmp.eq.s32.totalorder %s24, 1
    %p276 = por %p274, %p275
    %p277 = scmp.ne.s32.totalorder %s268, %s269
    %p278 = scmp.eq.s32.totalorder %s24, 0
    %p279 = por %p277, %p278
    %p280 = scmp.ne.s32.totalorder %s268, %s269
    %p281 = scmp.eq.s32.totalorder %s25, 1
    %p282 = por %p280, %p281
    %p284 = scmp.ne.s32.totalorder %s269, %s283
    %p285 = scmp.eq.s32.totalorder %s25, 0
    %p286 = por %p284, %p285
    %s288 = sadd.s32 %s287, 1
    %p291 = scmp.eq.s32.totalorder %s19, 1
    %p292 = scmp.ne.s32.totalorder %s287, %s289
    %p293 = scmp.eq.s32.totalorder %s19, 0
    %p294 = por %p292, %p293
    %p295 = scmp.ne.s32.totalorder %s287, %s289
    %p296 = scmp.eq.s32.totalorder %s24, 1
    %p297 = por %p295, %p296
    %p298 = scmp.ne.s32.totalorder %s289, %s290
    %p299 = scmp.eq.s32.totalorder %s24, 0
    %p300 = por %p298, %p299
    %p301 = scmp.ne.s32.totalorder %s289, %s290
    %p302 = scmp.eq.s32.totalorder %s25, 1
    %p303 = por %p301, %p302
    %p305 = scmp.ne.s32.totalorder %s290, %s304
    %p306 = scmp.eq.s32.totalorder %s25, 0
    %p307 = por %p305, %p306
    %s308 = ssub.s32 %s26, %s38
    %s309 = ssub.s32 %s27, %s34
    %s310 = sor.u32 %s308, %s309
    %p311 = scmp.eq.s32.totalorder %s310, 0
    %s313 = sadd.s32 %s312, 1
    %s314 = scalar_select %p311, %s312, %s313
    %p317 = pneg %p311
    %p318 = scmp.eq.s32.totalorder %s19, 1
    %p319 = por %p317, %p318
    %p320 = scmp.ne.s32.totalorder %s312, %s315
    %p321 = scmp.eq.s32.totalorder %s19, 0
    %p322 = por %p320, %p321
    %p323 = scmp.ne.s32.totalorder %s312, %s315
    %p324 = scmp.eq.s32.totalorder %s24, 1
    %p325 = por %p323, %p324
    %p326 = scmp.ne.s32.totalorder %s315, %s316
    %p327 = scmp.eq.s32.totalorder %s24, 0
    %p328 = por %p326, %p327
    %p329 = scmp.ne.s32.totalorder %s315, %s316
    %p330 = scmp.eq.s32.totalorder %s25, 1
    %p331 = por %p329, %p330
    %p333 = scmp.ne.s32.totalorder %s316, %s332
    %p334 = scmp.eq.s32.totalorder %s25, 0
    %p335 = por %p333, %p334
    %p336 = scmp.le.s32.totalorder 1, %s19
    %p337 = scmp.lt.s32.totalorder %s19, 3
    %p338 = pnand %p336, %p337
    %p339 = pneg %p338
    // Predicated region
    $region9: #{decoder_block.3} parent=5 // pred_check
      _
    $region10: #{decoder_block.3} parent=5 // pred_check_branch
      %341 = sbr.rel (%p338) target = $region12
    $region11: #{decoder_block.3} parent=5 // pred_region
      %s342 = ssub.s32 %s19, 1
      // Predicated region
      $region13: #{decoder_block.3} parent=11 // pred_check
        %p343 = pneg %p132
      $region14: #{decoder_block.3} parent=11 // pred_check_branch
        %345 = sbr.rel (%p343) target = $region16
      $region15: #{decoder_block.3} parent=11 // pred_region
        _
      $region16: #{decoder_block.3} parent=11 // pred_fallthru
        _
      // Predicated region
      $region17: #{decoder_block.3} parent=11 // pred_check
        %p346 = pneg %p153
      $region18: #{decoder_block.3} parent=11 // pred_check_branch
        %348 = sbr.rel (%p346) target = $region20
      $region19: #{decoder_block.3} parent=11 // pred_region
        _
      $region20: #{decoder_block.3} parent=11 // pred_fallthru
        _
      // Predicated region
      $region21: #{decoder_block.3} parent=11 // pred_check
        %p349 = pneg %p174
      $region22: #{decoder_block.3} parent=11 // pred_check_branch
        %351 = sbr.rel (%p349) target = $region24
      $region23: #{decoder_block.3} parent=11 // pred_region
        _
      $region24: #{decoder_block.3} parent=11 // pred_fallthru
        _
      // Predicated region
      $region25: #{decoder_block.3} parent=11 // pred_check
        %p352 = pneg %p195
      $region26: #{decoder_block.3} parent=11 // pred_check_branch
        %354 = sbr.rel (%p352) target = $region28
      $region27: #{decoder_block.3} parent=11 // pred_region
        _
      $region28: #{decoder_block.3} parent=11 // pred_fallthru
        _
      // Predicated region
      $region29: #{decoder_block.3} parent=11 // pred_check
        %p355 = pneg %p216
      $region30: #{decoder_block.3} parent=11 // pred_check_branch
        %357 = sbr.rel (%p355) target = $region32
      $region31: #{decoder_block.3} parent=11 // pred_region
        _
      $region32: #{decoder_block.3} parent=11 // pred_fallthru
        _
      // Predicated region
      $region33: #{decoder_block.3} parent=11 // pred_check
        %p358 = pneg %p237
      $region34: #{decoder_block.3} parent=11 // pred_check_branch
        %360 = sbr.rel (%p358) target = $region36
      $region35: #{decoder_block.3} parent=11 // pred_region
        _
      $region36: #{decoder_block.3} parent=11 // pred_fallthru
        _
      // Predicated region
      $region37: #{decoder_block.3} parent=11 // pred_check
        %p361 = pneg %p258
      $region38: #{decoder_block.3} parent=11 // pred_check_branch
        %363 = sbr.rel (%p361) target = $region40
      $region39: #{decoder_block.3} parent=11 // pred_region
        _
      $region40: #{decoder_block.3} parent=11 // pred_fallthru
        _
      // Predicated region
      $region41: #{decoder_block.3} parent=11 // pred_check
        %p364 = pneg %p279
      $region42: #{decoder_block.3} parent=11 // pred_check_branch
        %366 = sbr.rel (%p364) target = $region44
      $region43: #{decoder_block.3} parent=11 // pred_region
        _
      $region44: #{decoder_block.3} parent=11 // pred_fallthru
        _
      // Predicated region
      $region45: #{decoder_block.3} parent=11 // pred_check
        %p367 = pneg %p300
      $region46: #{decoder_block.3} parent=11 // pred_check_branch
        %369 = sbr.rel (%p367) target = $region48
      $region47: #{decoder_block.3} parent=11 // pred_region
        _
      $region48: #{decoder_block.3} parent=11 // pred_fallthru
        _
    $region12: #{decoder_block.3} parent=5 // pred_fallthru
      _
    %p370 = scmp.lt.s32.totalorder %s19, 2
    // Predicated region
    $region49: #{decoder_block.3} parent=5 // pred_check
      %p371 = pneg %p370
    $region50: #{decoder_block.3} parent=5 // pred_check_branch
      %373 = sbr.rel (%p371) target = $region52
    $region51: #{decoder_block.3} parent=5 // pred_region
      // Predicated region
      $region53: #{decoder_block.3} parent=51 // pred_check
        %p374 = pneg %p53
      $region54: #{decoder_block.3} parent=51 // pred_check_branch
        %376 = sbr.rel (%p374) target = $region56
      $region55: #{decoder_block.3} parent=51 // pred_region
        %p377 = scmp.lt.s32.totalorder %s26, 1
        %s378 = scalar_select %p377, %s26, 1
        %p379 = scmp.lt.s32.totalorder %s27, 0
        %s380 = scalar_select %p379, %s27, 0
        %s381 = sadd.s32 %s380, %s378
        %s382 = smul.addr %s381, 8
        %s383 = scalar_lea.vmem %s0, %s382
      $region56: #{decoder_block.3} parent=51 // pred_fallthru
        _
      // Predicated region
      $region57: #{decoder_block.3} parent=51 // pred_check
        %p384 = pneg %p79
      $region58: #{decoder_block.3} parent=51 // pred_check_branch
        %386 = sbr.rel (%p384) target = $region60
      $region59: #{decoder_block.3} parent=51 // pred_region
        %p387 = scmp.lt.s32.totalorder %s26, 1
        %s388 = scalar_select %p387, %s26, 1
        %s389 = smul.addr %s388, 8
        %s390 = scalar_lea.vmem %s1, %s389
      $region60: #{decoder_block.3} parent=51 // pred_fallthru
        _
      // Predicated region
      $region61: #{decoder_block.3} parent=51 // pred_check
        %p391 = pneg %p105
      $region62: #{decoder_block.3} parent=51 // pred_check_branch
        %393 = sbr.rel (%p391) target = $region64
      $region63: #{decoder_block.3} parent=51 // pred_region
        %p394 = scmp.lt.s32.totalorder %s26, 1
        %s395 = scalar_select %p394, %s26, 1
        %s396 = scalar_lea.vmem %s2, %s395
      $region64: #{decoder_block.3} parent=51 // pred_fallthru
        _
    $region52: #{decoder_block.3} parent=5 // pred_fallthru
      _
    %p397 = scmp.le.s32.totalorder 1, %s19
    %p398 = scmp.lt.s32.totalorder %s19, 3
    %p399 = pnand %p397, %p398
    %p400 = pneg %p399
    // Predicated region
    $region65: #{decoder_block.3} parent=5 // pred_check
      _
    $region66: #{decoder_block.3} parent=5 // pred_check_branch
      %402 = sbr.rel (%p399) target = $region68
    $region67: #{decoder_block.3} parent=5 // pred_region
      %s403 = ssub.s32 %s19, 1
      %p404 = scmp.lt.s32.totalorder %s28, 1
      %s405 = scalar_select %p404, %s28, 1
      %p406 = scmp.lt.s32.totalorder %s29, 0
      %s407 = scalar_select %p406, %s29, 0
      %s408 = sadd.s32 %s407, %s405
      %s409 = smul.addr %s408, 8
      %s410 = scalar_lea.vmem %s0, %s409
      %p411 = pneg %p59
      %p412 = pneg %p56
      %p413 = scmp.lt.s32.totalorder %s28, 1
      %s414 = scalar_select %p413, %s28, 1
      %s415 = smul.addr %s414, 8
      %s416 = scalar_lea.vmem %s1, %s415
      %p417 = pneg %p85
      %p418 = pneg %p82
      %p419 = scmp.lt.s32.totalorder %s28, 1
      %s420 = scalar_select %p419, %s28, 1
      %s421 = scalar_lea.vmem %s2, %s420
      %p422 = pneg %p111
      %p423 = pneg %p108
      %p424 = pneg %p132
      %p425 = pneg %p129
      %p426 = pneg %p153
      %p427 = pneg %p150
      %p428 = pneg %p174
      %p429 = pneg %p171
      %p430 = pneg %p195
      %p431 = pneg %p192
      %p432 = pneg %p216
      %p433 = pneg %p213
      %p434 = pneg %p237
      %p435 = pneg %p234
      %p436 = pneg %p258
      %p437 = pneg %p255
      %p438 = pneg %p279
      %p439 = pneg %p276
      %p440 = pneg %p300
      %p441 = pneg %p297
      %p442 = pneg %p328
      %p443 = pneg %p325
      %p444 = scmp.lt.s32.totalorder %s28, 1
      %s445 = scalar_select %p444, %s28, 1
      %p446 = scmp.lt.s32.totalorder %s29, 0
      %s447 = scalar_select %p446, %s29, 0
      %s448 = sadd.s32 %s447, %s445
      %s449 = smul.addr %s448, 8
      %s450 = scalar_lea.vmem %s12, %s449
      %p451 = scmp.lt.s32.totalorder %s28, 1
      %s452 = scalar_select %p451, %s28, 1
      %p453 = scmp.lt.s32.totalorder %s29, 0
      %s454 = scalar_select %p453, %s29, 0
      %s455 = sadd.s32 %s454, %s452
      %s456 = smul.addr %s455, 8
      %s457 = scalar_lea.vmem %s0, %s456
      %p458 = scmp.lt.s32.totalorder %s28, 1
      %s459 = scalar_select %p458, %s28, 1
      %s460 = smul.addr %s459, 8
      %s461 = scalar_lea.vmem %s1, %s460
      %p462 = scmp.lt.s32.totalorder %s28, 1
      %s463 = scalar_select %p462, %s28, 1
      %s464 = scalar_lea.vmem %s2, %s463
      %p465 = scmp.lt.s32.totalorder %s28, 1
      %s466 = scalar_select %p465, %s28, 1
      %p467 = scmp.lt.s32.totalorder %s29, 0
      %s468 = scalar_select %p467, %s29, 0
      %s469 = sadd.s32 %s468, %s466
      %s470 = smul.addr %s469, 8
      %s471 = scalar_lea.vmem %s12, %s470
      %v473 = vld [vmem:[%s457] sm:$0xff]
      %v474 = vld [vmem:[%s3] sm:$0x1]
      %v475 = vld [vmem:[%s4] sm:$0x1]
      %vm476 = vcmask 261120
      %v477 = vsel %vm476, %v473, 0.0
      %478 = vadd.xlane.f32.xlu0 %v477
      %v479 = vpop.xlane.xlu0 %478
      %v480 = vrcp.pop 32.0
      %v481 = vmul.f32 %v479, %v480
      %v482 = vsub.f32 %v473, %v481
      %v483 = vmul.f32 %v482, %v482
      %v484 = vsel %vm476, %v483, 0.0
      %485 = vadd.xlane.f32.xlu0 %v484
      %v486 = vpop.xlane.xlu0 %485
      %v487 = vmul.f32 %v486, %v480
      %v488 = vadd.f32 %v487, 1e-05
      %v489 = vrsqrt.pop %v488
      %v490 = vmul.f32 %v482, %v489
      %v492 = vlaneseq
      %v493 = vshrl.u32 %v492, 7
      %v494 = vsub.s32 0, %v493
      %v495 = vrot.slane %v474, %v494
      %v497 = vmul.f32 %v490, %v495
      %v499 = vlaneseq
      %v500 = vshrl.u32 %v499, 7
      %v501 = vsub.s32 0, %v500
      %v502 = vrot.slane %v475, %v501
      %v504 = vadd.f32 %v497, %v502
      %v505 = vld [vmem:[%s461] sm:$0xff]
      %v506 = vsel %vm476, %v505, 0.0
      %507 = vadd.xlane.f32.xlu0 %v506
      %v508 = vpop.xlane.xlu0 %507
      %v509 = vmul.f32 %v508, %v480
      %v510 = vsub.f32 %v505, %v509
      %v511 = vmul.f32 %v510, %v510
      %v512 = vsel %vm476, %v511, 0.0
      %513 = vadd.xlane.f32.xlu0 %v512
      %v514 = vpop.xlane.xlu0 %513
      %v515 = vmul.f32 %v514, %v480
      %v516 = vadd.f32 %v515, 1e-05
      %v517 = vrsqrt.pop %v516
      %v518 = vmul.f32 %v510, %v517
      %v519 = vmul.f32 %v518, %v495
      %v520 = vadd.f32 %v519, %v502
      %v521 = vpack.c.bf16 %v504, %v504
      %v522 = vld [vmem:[%s5] sm:$0xf]
      %v523 = vld [vmem:[%s5 + $0x4] sm:$0xf]
      %v524 = vld [vmem:[%s5 + $0x8] sm:$0xf]
      %v525 = vld [vmem:[%s5 + $0xc] sm:$0xf]
      %v526 = vld [vmem:[%s6] sm:$0x1]
      %v528 = vlaneseq
      %v529 = vshrl.u32 %v528, 7
      %v530 = vsub.s32 0, %v529
      %v531 = vrot.slane %v526, %v530
      %v537 = vunpack.c.l.b16 %v522
      %v538 = vunpack.c.l.b16 %v523
      %v539 = vunpack.c.l.b16 %v524
      %v540 = vunpack.c.l.b16 %v525
      %v541 = vpack.c.b16 %v538, %v537
      %v542 = vpack.c.b16 %v540, %v539
      %v546 = vsel %vm476, %v521, 0
      %548 = vmatprep.subr.bf16.mxu0 0
      %549 = vmatpush1.bf16.msra.mxu0 0
      %550 = vmatprep.subr.bf16.mxu0 0
      %551 = vmatpush1.bf16.msra.mxu0 0
      %552 = vmatprep.subr.bf16.mxu0 0
      %553 = vmatpush1.bf16.msra.mxu0 0
      %554 = vmatprep.subr.bf16.mxu0 0
      %555 = vmatpush1.bf16.msra.mxu0 0
      %556 = vmatprep.subr.bf16.mxu0 0
      %557 = vmatpush1.bf16.msra.mxu0 0
      %558 = vmatprep.subr.bf16.mxu0 0
      %559 = vmatpush1.bf16.msra.mxu0 0
      %560 = vmatprep.subr.bf16.mxu0 0
      %561 = vmatpush1.bf16.msra.mxu0 %v542
      %562 = vmatprep.subr.bf16.mxu0 0
      %563 = vmatpush1.bf16.msra.mxu0 %v541
      %564 = vmatprep.subr.bf16.mxu0 0
      %565 = vmatpush2.bf16.msra.mxu0 0
      %566 = vmatprep.subr.bf16.mxu0 0
      %567 = vmatpush2.bf16.msra.mxu0 0
      %568 = vmatprep.subr.bf16.mxu0 0
      %569 = vmatpush2.bf16.msra.mxu0 0
      %570 = vmatprep.subr.bf16.mxu0 0
      %571 = vmatpush2.bf16.msra.mxu0 0
      %572 = vmatprep.subr.bf16.mxu0 0
      %573 = vmatpush2.bf16.msra.mxu0 0
      %574 = vmatprep.subr.bf16.mxu0 0
      %575 = vmatpush2.bf16.msra.mxu0 0
      %576 = vmatprep.subr.bf16.mxu0 0
      %577 = vmatpush2.bf16.msra.mxu0 0
      %578 = vmatprep.subr.bf16.mxu0 0
      %579 = vmatpush2.bf16.msra.mxu0 0
      %580 = vmatprep.mubr.bf16.mxu0 0
      %581 = vmatmul.mubr.bf16.gmra.mxu0 %v546
      %v582 = vpop.f32.mrf.mxu0
      %v583 = vadd.f32 %v531, %v582
      %v584 = vpop.f32.mrf.mxu0
      %v585 = vpop.f32.mrf.mxu0
      %v586 = vpop.f32.mrf.mxu0
      %587 = vdwg.mxu0
      %v588 = vpack.c.bf16 %v520, %v520
      %v589 = vld [vmem:[%s7] sm:$0xf]
      %v590 = vld [vmem:[%s7 + $0x4] sm:$0xf]
      %v591 = vld [vmem:[%s7 + $0x8] sm:$0xf]
      %v592 = vld [vmem:[%s7 + $0xc] sm:$0xf]
      %v593 = vld [vmem:[%s8] sm:$0x1]
      %v595 = vlaneseq
      %v596 = vshrl.u32 %v595, 7
      %v597 = vsub.s32 0, %v596
      %v598 = vrot.slane %v593, %v597
      %v604 = vunpack.c.l.b16 %v589
      %v605 = vunpack.c.l.b16 %v590
      %v606 = vunpack.c.l.b16 %v591
      %v607 = vunpack.c.l.b16 %v592
      %v608 = vpack.c.b16 %v605, %v604
      %v609 = vpack.c.b16 %v607, %v606
      %v613 = vsel %vm476, %v588, 0
      %615 = vmatprep.subr.bf16.mxu0 0
      %616 = vmatpush1.bf16.msra.mxu0 0
      %617 = vmatprep.subr.bf16.mxu0 0
      %618 = vmatpush1.bf16.msra.mxu0 0
      %619 = vmatprep.subr.bf16.mxu0 0
      %620 = vmatpush1.bf16.msra.mxu0 0
      %621 = vmatprep.subr.bf16.mxu0 0
      %622 = vmatpush1.bf16.msra.mxu0 0
      %623 = vmatprep.subr.bf16.mxu0 0
      %624 = vmatpush1.bf16.msra.mxu0 0
      %625 = vmatprep.subr.bf16.mxu0 0
      %626 = vmatpush1.bf16.msra.mxu0 0
      %627 = vmatprep.subr.bf16.mxu0 0
      %628 = vmatpush1.bf16.msra.mxu0 %v609
      %629 = vmatprep.subr.bf16.mxu0 0
      %630 = vmatpush1.bf16.msra.mxu0 %v608
      %631 = vmatprep.subr.bf16.mxu0 0
      %632 = vmatpush2.bf16.msra.mxu0 0
      %633 = vmatprep.subr.bf16.mxu0 0
      %634 = vmatpush2.bf16.msra.mxu0 0
      %635 = vmatprep.subr.bf16.mxu0 0
      %636 = vmatpush2.bf16.msra.mxu0 0
      %637 = vmatprep.subr.bf16.mxu0 0
      %638 = vmatpush2.bf16.msra.mxu0 0
      %639 = vmatprep.subr.bf16.mxu0 0
      %640 = vmatpush2.bf16.msra.mxu0 0
      %641 = vmatprep.subr.bf16.mxu0 0
      %642 = vmatpush2.bf16.msra.mxu0 0
      %643 = vmatprep.subr.bf16.mxu0 0
      %644 = vmatpush2.bf16.msra.mxu0 0
      %645 = vmatprep.subr.bf16.mxu0 0
      %646 = vmatpush2.bf16.msra.mxu0 0
      %647 = vmatprep.mubr.bf16.mxu0 0
      %648 = vmatmul.mubr.bf16.gmra.mxu0 %v613
      %v649 = vpop.f32.mrf.mxu0
      %v650 = vadd.f32 %v598, %v649
      %v651 = vpop.f32.mrf.mxu0
      %v652 = vpop.f32.mrf.mxu0
      %v653 = vpop.f32.mrf.mxu0
      %654 = vdwg.mxu0
      %v655 = vld [vmem:[%s464] sm:$0x1]
      %s656 = smul.u32 %s29, 8
      %v657 = vlaneseq
      %v658 = vshrl.u32 %v657, 7
      %v659 = vstv %s656
      %v660 = vadd.s32 %v659, %v658
      %v661 = vlaneseq
      %v662 = vand.u32 %v661, 127
      %vm663 = vcmp.ge.s32.totalorder %v660, %v662
      %v664 = vsel %vm663, 0.0, -1e+09
      %v666 = vlaneseq
      %v667 = vshrl.u32 %v666, 7
      %v668 = vsub.s32 0, %v667
      %v669 = vrot.slane %v655, %v668
      %v671 = vadd.f32 %v669, %v664
      %v672 = vpack.c.bf16 %v583, %v583
      %v673 = vpack.c.bf16 %v650, %v650
      %vm674 = vcmask 64512
      %v676 = vsel %vm674, %v672, 0
      %v679 = vsel %vm674, %v673, 0
      %681 = vmatprep.subr.bf16.mxu0 0
      %682 = vmatpush1.bf16.xpose.msra.mxu0 0
      %683 = vmatprep.subr.bf16.mxu0 0
      %684 = vmatpush1.bf16.xpose.msra.mxu0 0
      %685 = vmatprep.subr.bf16.mxu0 0
      %686 = vmatpush1.bf16.xpose.msra.mxu0 0
      %687 = vmatprep.subr.bf16.mxu0 0
      %688 = vmatpush1.bf16.xpose.msra.mxu0 0
      %689 = vmatprep.subr.bf16.mxu0 0
      %690 = vmatpush1.bf16.xpose.msra.mxu0 0
      %691 = vmatprep.subr.bf16.mxu0 0
      %692 = vmatpush1.bf16.xpose.msra.mxu0 0
      %693 = vmatprep.subr.bf16.mxu0 0
      %694 = vmatpush1.bf16.xpose.msra.mxu0 0
      %695 = vmatprep.subr.bf16.mxu0 0
      %696 = vmatpush1.bf16.xpose.msra.mxu0 %v679
      %697 = vmatprep.subr.bf16.mxu0 0
      %698 = vmatpush2.bf16.xpose.msra.mxu0 0
      %699 = vmatprep.subr.bf16.mxu0 0
      %700 = vmatpush2.bf16.xpose.msra.mxu0 0
      %701 = vmatprep.subr.bf16.mxu0 0
      %702 = vmatpush2.bf16.xpose.msra.mxu0 0
      %703 = vmatprep.subr.bf16.mxu0 0
      %704 = vmatpush2.bf16.xpose.msra.mxu0 0
      %705 = vmatprep.subr.bf16.mxu0 0
      %706 = vmatpush2.bf16.xpose.msra.mxu0 0
      %707 = vmatprep.subr.bf16.mxu0 0
      %708 = vmatpush2.bf16.xpose.msra.mxu0 0
      %709 = vmatprep.subr.bf16.mxu0 0
      %710 = vmatpush2.bf16.xpose.msra.mxu0 0
      %711 = vmatprep.subr.bf16.mxu0 0
      %712 = vmatpush2.bf16.xpose.msra.mxu0 0
      %713 = vmatprep.mubr.bf16.mxu0 0
      %714 = vmatmul.mubr.bf16.gmra.mxu0 %v676
      %v715 = vpop.f32.mrf.mxu0
      %v716 = vadd.f32 %v671, %v715
      %v717 = vpop.f32.mrf.mxu0
      %v718 = vpop.f32.mrf.mxu0
      %v719 = vpop.f32.mrf.mxu0
      %720 = vdwg.mxu0
      %v721 = vsel %vm674, %v716, -inf
      %722 = vmax.xlane.f32.xlu0 %v721
      %v723 = vpop.xlane.xlu0 %722
      %v724 = vsub.f32 %v716, %v723
      %v725 = vmul.f32 %v724, 1.442695
      %v726 = vpow.pop %v725
      %v727 = vsel %vm674, %v726, 0.0
      %728 = vadd.xlane.f32.xlu0 %v727
      %v729 = vpop.xlane.xlu0 %728
      %v730 = vrcp.pop %v729
      %v731 = vmul.f32 %v726, %v730
      %v732 = vpack.c.bf16 %v731, %v731
      %734 = vrot.lane.b32.xlu0 %v673, 96
      %v735 = vpop.permute.xlu0 %734
      %v737 = vsel %vm674, %v732, 0
      %vm739 = vcmask 1043456
      %v741 = vsel %vm739, %v735, 0
      %743 = vmatprep.subr.bf16.mxu0 0
      %744 = vmatpush1.bf16.msra.mxu0 0
      %745 = vmatprep.subr.bf16.mxu0 0
      %746 = vmatpush1.bf16.msra.mxu0 0
      %747 = vmatprep.subr.bf16.mxu0 0
      %748 = vmatpush1.bf16.msra.mxu0 0
      %749 = vmatprep.subr.bf16.mxu0 0
      %750 = vmatpush1.bf16.msra.mxu0 0
      %751 = vmatprep.subr.bf16.mxu0 0
      %752 = vmatpush1.bf16.msra.mxu0 0
      %753 = vmatprep.subr.bf16.mxu0 0
      %754 = vmatpush1.bf16.msra.mxu0 0
      %755 = vmatprep.subr.bf16.mxu0 0
      %756 = vmatpush1.bf16.msra.mxu0 0
      %757 = vmatprep.subr.bf16.mxu0 0
      %758 = vmatpush1.bf16.msra.mxu0 %v741
      %759 = vmatprep.subr.bf16.mxu0 0
      %760 = vmatpush2.bf16.msra.mxu0 0
      %761 = vmatprep.subr.bf16.mxu0 0
      %762 = vmatpush2.bf16.msra.mxu0 0
      %763 = vmatprep.subr.bf16.mxu0 0
      %764 = vmatpush2.bf16.msra.mxu0 0
      %765 = vmatprep.subr.bf16.mxu0 0
      %766 = vmatpush2.bf16.msra.mxu0 0
      %767 = vmatprep.subr.bf16.mxu0 0
      %768 = vmatpush2.bf16.msra.mxu0 0
      %769 = vmatprep.subr.bf16.mxu0 0
      %770 = vmatpush2.bf16.msra.mxu0 0
      %771 = vmatprep.subr.bf16.mxu0 0
      %772 = vmatpush2.bf16.msra.mxu0 0
      %773 = vmatprep.subr.bf16.mxu0 0
      %774 = vmatpush2.bf16.msra.mxu0 0
      %775 = vmatprep.mubr.bf16.mxu0 0
      %776 = vmatmul.mubr.bf16.gmra.mxu0 %v737
      %v777 = vpop.f32.mrf.mxu0
      %v778 = vadd.f32 0.0, %v777
      %v779 = vpop.f32.mrf.mxu0
      %v780 = vpop.f32.mrf.mxu0
      %v781 = vpop.f32.mrf.mxu0
      %782 = vdwg.mxu0
      %784 = vrot.lane.b32.xlu0 %v672, 120
      %v785 = vpop.permute.xlu0 %784
      %786 = vrot.lane.b32.xlu0 %v673, 120
      %v787 = vpop.permute.xlu0 %786
      %v789 = vsel %vm674, %v785, 0
      %v792 = vsel %vm674, %v787, 0
      %794 = vmatprep.subr.bf16.mxu0 0
      %795 = vmatpush1.bf16.xpose.msra.mxu0 0
      %796 = vmatprep.subr.bf16.mxu0 0
      %797 = vmatpush1.bf16.xpose.msra.mxu0 0
      %798 = vmatprep.subr.bf16.mxu0 0
      %799 = vmatpush1.bf16.xpose.msra.mxu0 0
      %800 = vmatprep.subr.bf16.mxu0 0
      %801 = vmatpush1.bf16.xpose.msra.mxu0 0
      %802 = vmatprep.subr.bf16.mxu0 0
      %803 = vmatpush1.bf16.xpose.msra.mxu0 0
      %804 = vmatprep.subr.bf16.mxu0 0
      %805 = vmatpush1.bf16.xpose.msra.mxu0 0
      %806 = vmatprep.subr.bf16.mxu0 0
      %807 = vmatpush1.bf16.xpose.msra.mxu0 0
      %808 = vmatprep.subr.bf16.mxu0 0
      %809 = vmatpush1.bf16.xpose.msra.mxu0 %v792
      %810 = vmatprep.subr.bf16.mxu0 0
      %811 = vmatpush2.bf16.xpose.msra.mxu0 0
      %812 = vmatprep.subr.bf16.mxu0 0
      %813 = vmatpush2.bf16.xpose.msra.mxu0 0
      %814 = vmatprep.subr.bf16.mxu0 0
      %815 = vmatpush2.bf16.xpose.msra.mxu0 0
      %816 = vmatprep.subr.bf16.mxu0 0
      %817 = vmatpush2.bf16.xpose.msra.mxu0 0
      %818 = vmatprep.subr.bf16.mxu0 0
      %819 = vmatpush2.bf16.xpose.msra.mxu0 0
      %820 = vmatprep.subr.bf16.mxu0 0
      %821 = vmatpush2.bf16.xpose.msra.mxu0 0
      %822 = vmatprep.subr.bf16.mxu0 0
      %823 = vmatpush2.bf16.xpose.msra.mxu0 0
      %824 = vmatprep.subr.bf16.mxu0 0
      %825 = vmatpush2.bf16.xpose.msra.mxu0 0
      %826 = vmatprep.mubr.bf16.mxu0 0
      %827 = vmatmul.mubr.bf16.gmra.mxu0 %v789
      %v828 = vpop.f32.mrf.mxu0
      %v829 = vadd.f32 %v671, %v828
      %v830 = vpop.f32.mrf.mxu0
      %v831 = vpop.f32.mrf.mxu0
      %v832 = vpop.f32.mrf.mxu0
      %833 = vdwg.mxu0
      %v834 = vsel %vm674, %v829, -inf
      %835 = vmax.xlane.f32.xlu0 %v834
      %v836 = vpop.xlane.xlu0 %835
      %v837 = vsub.f32 %v829, %v836
      %v838 = vmul.f32 %v837, 1.442695
      %v839 = vpow.pop %v838
      %v840 = vsel %vm674, %v839, 0.0
      %841 = vadd.xlane.f32.xlu0 %v840
      %v842 = vpop.xlane.xlu0 %841
      %v843 = vrcp.pop %v842
      %v844 = vmul.f32 %v839, %v843
      %v845 = vpack.c.bf16 %v844, %v844
      %846 = vrot.lane.b32.xlu0 %v673, 88
      %v847 = vpop.permute.xlu0 %846
      %v849 = vsel %vm674, %v845, 0
      %v852 = vsel %vm739, %v847, 0
      %854 = vmatprep.subr.bf16.mxu0 0
      %855 = vmatpush1.bf16.msra.mxu0 0
      %856 = vmatprep.subr.bf16.mxu0 0
      %857 = vmatpush1.bf16.msra.mxu0 0
      %858 = vmatprep.subr.bf16.mxu0 0
      %859 = vmatpush1.bf16.msra.mxu0 0
      %860 = vmatprep.subr.bf16.mxu0 0
      %861 = vmatpush1.bf16.msra.mxu0 0
      %862 = vmatprep.subr.bf16.mxu0 0
      %863 = vmatpush1.bf16.msra.mxu0 0
      %864 = vmatprep.subr.bf16.mxu0 0
      %865 = vmatpush1.bf16.msra.mxu0 0
      %866 = vmatprep.subr.bf16.mxu0 0
      %867 = vmatpush1.bf16.msra.mxu0 0
      %868 = vmatprep.subr.bf16.mxu0 0
      %869 = vmatpush1.bf16.msra.mxu0 %v852
      %870 = vmatprep.subr.bf16.mxu0 0
      %871 = vmatpush2.bf16.msra.mxu0 0
      %872 = vmatprep.subr.bf16.mxu0 0
      %873 = vmatpush2.bf16.msra.mxu0 0
      %874 = vmatprep.subr.bf16.mxu0 0
      %875 = vmatpush2.bf16.msra.mxu0 0
      %876 = vmatprep.subr.bf16.mxu0 0
      %877 = vmatpush2.bf16.msra.mxu0 0
      %878 = vmatprep.subr.bf16.mxu0 0
      %879 = vmatpush2.bf16.msra.mxu0 0
      %880 = vmatprep.subr.bf16.mxu0 0
      %881 = vmatpush2.bf16.msra.mxu0 0
      %882 = vmatprep.subr.bf16.mxu0 0
      %883 = vmatpush2.bf16.msra.mxu0 0
      %884 = vmatprep.subr.bf16.mxu0 0
      %885 = vmatpush2.bf16.msra.mxu0 0
      %886 = vmatprep.mubr.bf16.mxu0 0
      %887 = vmatmul.mubr.bf16.gmra.mxu0 %v849
      %v888 = vpop.f32.mrf.mxu0
      %v889 = vadd.f32 0.0, %v888
      %v890 = vpop.f32.mrf.mxu0
      %v891 = vpop.f32.mrf.mxu0
      %v892 = vpop.f32.mrf.mxu0
      %893 = vdwg.mxu0
      %894 = vrot.lane.b32.xlu0 %v672, 112
      %v895 = vpop.permute.xlu0 %894
      %896 = vrot.lane.b32.xlu0 %v673, 112
      %v897 = vpop.permute.xlu0 %896
      %v899 = vsel %vm674, %v895, 0
      %v902 = vsel %vm674, %v897, 0
      %904 = vmatprep.subr.bf16.mxu0 0
      %905 = vmatpush1.bf16.xpose.msra.mxu0 0
      %906 = vmatprep.subr.bf16.mxu0 0
      %907 = vmatpush1.bf16.xpose.msra.mxu0 0
      %908 = vmatprep.subr.bf16.mxu0 0
      %909 = vmatpush1.bf16.xpose.msra.mxu0 0
      %910 = vmatprep.subr.bf16.mxu0 0
      %911 = vmatpush1.bf16.xpose.msra.mxu0 0
      %912 = vmatprep.subr.bf16.mxu0 0
      %913 = vmatpush1.bf16.xpose.msra.mxu0 0
      %914 = vmatprep.subr.bf16.mxu0 0
      %915 = vmatpush1.bf16.xpose.msra.mxu0 0
      %916 = vmatprep.subr.bf16.mxu0 0
      %917 = vmatpush1.bf16.xpose.msra.mxu0 0
      %918 = vmatprep.subr.bf16.mxu0 0
      %919 = vmatpush1.bf16.xpose.msra.mxu0 %v902
      %920 = vmatprep.subr.bf16.mxu0 0
      %921 = vmatpush2.bf16.xpose.msra.mxu0 0
      %922 = vmatprep.subr.bf16.mxu0 0
      %923 = vmatpush2.bf16.xpose.msra.mxu0 0
      %924 = vmatprep.subr.bf16.mxu0 0
      %925 = vmatpush2.bf16.xpose.msra.mxu0 0
      %926 = vmatprep.subr.bf16.mxu0 0
      %927 = vmatpush2.bf16.xpose.msra.mxu0 0
      %928 = vmatprep.subr.bf16.mxu0 0
      %929 = vmatpush2.bf16.xpose.msra.mxu0 0
      %930 = vmatprep.subr.bf16.mxu0 0
      %931 = vmatpush2.bf16.xpose.msra.mxu0 0
      %932 = vmatprep.subr.bf16.mxu0 0
      %933 = vmatpush2.bf16.xpose.msra.mxu0 0
      %934 = vmatprep.subr.bf16.mxu0 0
      %935 = vmatpush2.bf16.xpose.msra.mxu0 0
      %936 = vmatprep.mubr.bf16.mxu0 0
      %937 = vmatmul.mubr.bf16.gmra.mxu0 %v899
      %v938 = vpop.f32.mrf.mxu0
      %v939 = vadd.f32 %v671, %v938
      %v940 = vpop.f32.mrf.mxu0
      %v941 = vpop.f32.mrf.mxu0
      %v942 = vpop.f32.mrf.mxu0
      %943 = vdwg.mxu0
      %v944 = vsel %vm674, %v939, -inf
      %945 = vmax.xlane.f32.xlu0 %v944
      %v946 = vpop.xlane.xlu0 %945
      %v947 = vsub.f32 %v939, %v946
      %v948 = vmul.f32 %v947, 1.442695
      %v949 = vpow.pop %v948
      %v950 = vsel %vm674, %v949, 0.0
      %951 = vadd.xlane.f32.xlu0 %v950
      %v952 = vpop.xlane.xlu0 %951
      %v953 = vrcp.pop %v952
      %v954 = vmul.f32 %v949, %v953
      %v955 = vpack.c.bf16 %v954, %v954
      %956 = vrot.lane.b32.xlu0 %v673, 80
      %v957 = vpop.permute.xlu0 %956
      %v959 = vsel %vm674, %v955, 0
      %v962 = vsel %vm739, %v957, 0
      %964 = vmatprep.subr.bf16.mxu0 0
      %965 = vmatpush1.bf16.msra.mxu0 0
      %966 = vmatprep.subr.bf16.mxu0 0
      %967 = vmatpush1.bf16.msra.mxu0 0
      %968 = vmatprep.subr.bf16.mxu0 0
      %969 = vmatpush1.bf16.msra.mxu0 0
      %970 = vmatprep.subr.bf16.mxu0 0
      %971 = vmatpush1.bf16.msra.mxu0 0
      %972 = vmatprep.subr.bf16.mxu0 0
      %973 = vmatpush1.bf16.msra.mxu0 0
      %974 = vmatprep.subr.bf16.mxu0 0
      %975 = vmatpush1.bf16.msra.mxu0 0
      %976 = vmatprep.subr.bf16.mxu0 0
      %977 = vmatpush1.bf16.msra.mxu0 0
      %978 = vmatprep.subr.bf16.mxu0 0
      %979 = vmatpush1.bf16.msra.mxu0 %v962
      %980 = vmatprep.subr.bf16.mxu0 0
      %981 = vmatpush2.bf16.msra.mxu0 0
      %982 = vmatprep.subr.bf16.mxu0 0
      %983 = vmatpush2.bf16.msra.mxu0 0
      %984 = vmatprep.subr.bf16.mxu0 0
      %985 = vmatpush2.bf16.msra.mxu0 0
      %986 = vmatprep.subr.bf16.mxu0 0
      %987 = vmatpush2.bf16.msra.mxu0 0
      %988 = vmatprep.subr.bf16.mxu0 0
      %989 = vmatpush2.bf16.msra.mxu0 0
      %990 = vmatprep.subr.bf16.mxu0 0
      %991 = vmatpush2.bf16.msra.mxu0 0
      %992 = vmatprep.subr.bf16.mxu0 0
      %993 = vmatpush2.bf16.msra.mxu0 0
      %994 = vmatprep.subr.bf16.mxu0 0
      %995 = vmatpush2.bf16.msra.mxu0 0
      %996 = vmatprep.mubr.bf16.mxu0 0
      %997 = vmatmul.mubr.bf16.gmra.mxu0 %v959
      %v998 = vpop.f32.mrf.mxu0
      %v999 = vadd.f32 0.0, %v998
      %v1000 = vpop.f32.mrf.mxu0
      %v1001 = vpop.f32.mrf.mxu0
      %v1002 = vpop.f32.mrf.mxu0
      %1003 = vdwg.mxu0
      %1004 = vrot.lane.b32.xlu0 %v672, 104
      %v1005 = vpop.permute.xlu0 %1004
      %1006 = vrot.lane.b32.xlu0 %v673, 104
      %v1007 = vpop.permute.xlu0 %1006
      %v1009 = vsel %vm674, %v1005, 0
      %v1012 = vsel %vm674, %v1007, 0
      %1014 = vmatprep.subr.bf16.mxu0 0
      %1015 = vmatpush1.bf16.xpose.msra.mxu0 0
      %1016 = vmatprep.subr.bf16.mxu0 0
      %1017 = vmatpush1.bf16.xpose.msra.mxu0 0
      %1018 = vmatprep.subr.bf16.mxu0 0
      %1019 = vmatpush1.bf16.xpose.msra.mxu0 0
      %1020 = vmatprep.subr.bf16.mxu0 0
      %1021 = vmatpush1.bf16.xpose.msra.mxu0 0
      %1022 = vmatprep.subr.bf16.mxu0 0
      %1023 = vmatpush1.bf16.xpose.msra.mxu0 0
      %1024 = vmatprep.subr.bf16.mxu0 0
      %1025 = vmatpush1.bf16.xpose.msra.mxu0 0
      %1026 = vmatprep.subr.bf16.mxu0 0
      %1027 = vmatpush1.bf16.xpose.msra.mxu0 0
      %1028 = vmatprep.subr.bf16.mxu0 0
      %1029 = vmatpush1.bf16.xpose.msra.mxu0 %v1012
      %1030 = vmatprep.subr.bf16.mxu0 0
      %1031 = vmatpush2.bf16.xpose.msra.mxu0 0
      %1032 = vmatprep.subr.bf16.mxu0 0
      %1033 = vmatpush2.bf16.xpose.msra.mxu0 0
      %1034 = vmatprep.subr.bf16.mxu0 0
      %1035 = vmatpush2.bf16.xpose.msra.mxu0 0
      %1036 = vmatprep.subr.bf16.mxu0 0
      %1037 = vmatpush2.bf16.xpose.msra.mxu0 0
      %1038 = vmatprep.subr.bf16.mxu0 0
      %1039 = vmatpush2.bf16.xpose.msra.mxu0 0
      %1040 = vmatprep.subr.bf16.mxu0 0
      %1041 = vmatpush2.bf16.xpose.msra.mxu0 0
      %1042 = vmatprep.subr.bf16.mxu0 0
      %1043 = vmatpush2.bf16.xpose.msra.mxu0 0
      %1044 = vmatprep.subr.bf16.mxu0 0
      %1045 = vmatpush2.bf16.xpose.msra.mxu0 0
      %1046 = vmatprep.mubr.bf16.mxu0 0
      %1047 = vmatmul.mubr.bf16.gmra.mxu0 %v1009
      %v1048 = vpop.f32.mrf.mxu0
      %v1049 = vadd.f32 %v671, %v1048
      %v1050 = vpop.f32.mrf.mxu0
      %v1051 = vpop.f32.mrf.mxu0
      %v1052 = vpop.f32.mrf.mxu0
      %1053 = vdwg.mxu0
      %v1054 = vsel %vm674, %v1049, -inf
      %1055 = vmax.xlane.f32.xlu0 %v1054
      %v1056 = vpop.xlane.xlu0 %1055
      %v1057 = vsub.f32 %v1049, %v1056
      %v1058 = vmul.f32 %v1057, 1.442695
      %v1059 = vpow.pop %v1058
      %v1060 = vsel %vm674, %v1059, 0.0
      %1061 = vadd.xlane.f32.xlu0 %v1060
      %v1062 = vpop.xlane.xlu0 %1061
      %v1063 = vrcp.pop %v1062
      %v1064 = vmul.f32 %v1059, %v1063
      %v1065 = vpack.c.bf16 %v1064, %v1064
      %1066 = vrot.lane.b32.xlu0 %v673, 72
      %v1067 = vpop.permute.xlu0 %1066
      %v1069 = vsel %vm674, %v1065, 0
      %v1072 = vsel %vm739, %v1067, 0
      %1074 = vmatprep.subr.bf16.mxu0 0
      %1075 = vmatpush1.bf16.msra.mxu0 0
      %1076 = vmatprep.subr.bf16.mxu0 0
      %1077 = vmatpush1.bf16.msra.mxu0 0
      %1078 = vmatprep.subr.bf16.mxu0 0
      %1079 = vmatpush1.bf16.msra.mxu0 0
      %1080 = vmatprep.subr.bf16.mxu0 0
      %1081 = vmatpush1.bf16.msra.mxu0 0
      %1082 = vmatprep.subr.bf16.mxu0 0
      %1083 = vmatpush1.bf16.msra.mxu0 0
      %1084 = vmatprep.subr.bf16.mxu0 0
      %1085 = vmatpush1.bf16.msra.mxu0 0
      %1086 = vmatprep.subr.bf16.mxu0 0
      %1087 = vmatpush1.bf16.msra.mxu0 0
      %1088 = vmatprep.subr.bf16.mxu0 0
      %1089 = vmatpush1.bf16.msra.mxu0 %v1072
      %1090 = vmatprep.subr.bf16.mxu0 0
      %1091 = vmatpush2.bf16.msra.mxu0 0
      %1092 = vmatprep.subr.bf16.mxu0 0
      %1093 = vmatpush2.bf16.msra.mxu0 0
      %1094 = vmatprep.subr.bf16.mxu0 0
      %1095 = vmatpush2.bf16.msra.mxu0 0
      %1096 = vmatprep.subr.bf16.mxu0 0
      %1097 = vmatpush2.bf16.msra.mxu0 0
      %1098 = vmatprep.subr.bf16.mxu0 0
      %1099 = vmatpush2.bf16.msra.mxu0 0
      %1100 = vmatprep.subr.bf16.mxu0 0
      %1101 = vmatpush2.bf16.msra.mxu0 0
      %1102 = vmatprep.subr.bf16.mxu0 0
      %1103 = vmatpush2.bf16.msra.mxu0 0
      %1104 = vmatprep.subr.bf16.mxu0 0
      %1105 = vmatpush2.bf16.msra.mxu0 0
      %1106 = vmatprep.mubr.bf16.mxu0 0
      %1107 = vmatmul.mubr.bf16.gmra.mxu0 %v1069
      %v1108 = vpop.f32.mrf.mxu0
      %v1109 = vadd.f32 0.0, %v1108
      %v1110 = vpop.f32.mrf.mxu0
      %v1111 = vpop.f32.mrf.mxu0
      %v1112 = vpop.f32.mrf.mxu0
      %1113 = vdwg.mxu0
      %1115 = vrot.lane.b32.xlu0 %v889, 8
      %v1116 = vpop.permute.xlu0 %1115
      %1119 = vrot.lane.b32.xlu0 %v999, 16
      %v1120 = vpop.permute.xlu0 %1119
      %1123 = vrot.lane.b32.xlu0 %v1109, 24
      %v1124 = vpop.permute.xlu0 %1123
      %v1126 = vsel %vm674, %v778, %v1116
      %vm1127 = vcmask 130048
      %v1128 = vsel %vm1127, %v1126, %v1120
      %vm1129 = vcmask 195584
      %v1130 = vsel %vm1129, %v1128, %v1124
      %v1131 = vpack.c.bf16 %v1130, %v1130
      %v1132 = vld [vmem:[%s9] sm:$0xf]
      %v1133 = vld [vmem:[%s9 + $0x4] sm:$0xf]
      %v1134 = vld [vmem:[%s9 + $0x8] sm:$0xf]
      %v1135 = vld [vmem:[%s9 + $0xc] sm:$0xf]
      %v1136 = vld [vmem:[%s10] sm:$0x1]
      %v1138 = vlaneseq
      %v1139 = vshrl.u32 %v1138, 7
      %v1140 = vsub.s32 0, %v1139
      %v1141 = vrot.slane %v1136, %v1140
      %v1147 = vunpack.c.l.b16 %v1132
      %v1148 = vunpack.c.l.b16 %v1133
      %v1149 = vunpack.c.l.b16 %v1134
      %v1150 = vunpack.c.l.b16 %v1135
      %v1151 = vpack.c.b16 %v1148, %v1147
      %v1152 = vpack.c.b16 %v1150, %v1149
      %v1156 = vsel %vm476, %v1131, 0
      %1158 = vmatprep.subr.bf16.mxu0 0
      %1159 = vmatpush1.bf16.msra.mxu0 0
      %1160 = vmatprep.subr.bf16.mxu0 0
      %1161 = vmatpush1.bf16.msra.mxu0 0
      %1162 = vmatprep.subr.bf16.mxu0 0
      %1163 = vmatpush1.bf16.msra.mxu0 0
      %1164 = vmatprep.subr.bf16.mxu0 0
      %1165 = vmatpush1.bf16.msra.mxu0 0
      %1166 = vmatprep.subr.bf16.mxu0 0
      %1167 = vmatpush1.bf16.msra.mxu0 0
      %1168 = vmatprep.subr.bf16.mxu0 0
      %1169 = vmatpush1.bf16.msra.mxu0 0
      %1170 = vmatprep.subr.bf16.mxu0 0
      %1171 = vmatpush1.bf16.msra.mxu0 %v1152
      %1172 = vmatprep.subr.bf16.mxu0 0
      %1173 = vmatpush1.bf16.msra.mxu0 %v1151
      %1174 = vmatprep.subr.bf16.mxu0 0
      %1175 = vmatpush2.bf16.msra.mxu0 0
      %1176 = vmatprep.subr.bf16.mxu0 0
      %1177 = vmatpush2.bf16.msra.mxu0 0
      %1178 = vmatprep.subr.bf16.mxu0 0
      %1179 = vmatpush2.bf16.msra.mxu0 0
      %1180 = vmatprep.subr.bf16.mxu0 0
      %1181 = vmatpush2.bf16.msra.mxu0 0
      %1182 = vmatprep.subr.bf16.mxu0 0
      %1183 = vmatpush2.bf16.msra.mxu0 0
      %1184 = vmatprep.subr.bf16.mxu0 0
      %1185 = vmatpush2.bf16.msra.mxu0 0
      %1186 = vmatprep.subr.bf16.mxu0 0
      %1187 = vmatpush2.bf16.msra.mxu0 0
      %1188 = vmatprep.subr.bf16.mxu0 0
      %1189 = vmatpush2.bf16.msra.mxu0 0
      %1190 = vmatprep.mubr.bf16.mxu0 0
      %1191 = vmatmul.mubr.bf16.gmra.mxu0 %v1156
      %v1192 = vpop.f32.mrf.mxu0
      %v1193 = vadd.f32 %v1141, %v1192
      %v1194 = vpop.f32.mrf.mxu0
      %v1195 = vpop.f32.mrf.mxu0
      %v1196 = vpop.f32.mrf.mxu0
      %1197 = vdwg.mxu0
      %s1198 = sld [smem:[#allocation2]]
      %v1199 = vstv %s1198
      %v1200 = vmul.f32 %v1199, %v1193
      %v1201 = vadd.f32 %v473, %v1200
      %1202 = vst.msk [vmem:[%s471] sm:$0xff] %vm476, %v1201
      %p1203 = scmp.lt.s32.totalorder %s28, 1
      %s1204 = scalar_select %p1203, %s28, 1
      %p1205 = scmp.lt.s32.totalorder %s29, 0
      %s1206 = scalar_select %p1205, %s29, 0
      %s1207 = sadd.s32 %s1206, %s1204
      %s1208 = smul.addr %s1207, 8
      %s1209 = scalar_lea.vmem %s12, %s1208
      // Predicated region
      $region69: #{decoder_block.3} parent=67 // pred_check
        %p1210 = pneg %p325
      $region70: #{decoder_block.3} parent=67 // pred_check_branch
        %1212 = sbr.rel (%p1210) target = $region72
      $region71: #{decoder_block.3} parent=67 // pred_region
        _
      $region72: #{decoder_block.3} parent=67 // pred_fallthru
        _
    $region68: #{decoder_block.3} parent=5 // pred_fallthru
      _
    %p1213 = scmp.le.s32.totalorder 2, %s19
    // Predicated region
    $region73: #{decoder_block.3} parent=5 // pred_check
      %p1214 = pneg %p1213
    $region74: #{decoder_block.3} parent=5 // pred_check_branch
      %1216 = sbr.rel (%p1214) target = $region76
    $region75: #{decoder_block.3} parent=5 // pred_region
      %s1217 = ssub.s32 %s19, 2
      // Predicated region
      $region77: #{decoder_block.3} parent=75 // pred_check
        %p1218 = pneg %p331
      $region78: #{decoder_block.3} parent=75 // pred_check_branch
        %1220 = sbr.rel (%p1218) target = $region80
      $region79: #{decoder_block.3} parent=75 // pred_region
        %p1221 = scmp.lt.s32.totalorder %s30, 1
        %s1222 = scalar_select %p1221, %s30, 1
        %p1223 = scmp.lt.s32.totalorder %s31, 0
        %s1224 = scalar_select %p1223, %s31, 0
        %s1225 = sadd.s32 %s1224, %s1222
        %s1226 = smul.addr %s1225, 8
        %s1227 = scalar_lea.vmem %s12, %s1226
      $region80: #{decoder_block.3} parent=75 // pred_fallthru
        _
    $region76: #{decoder_block.3} parent=5 // pred_fallthru
      _
  $region6: #{decoder_block.3} parent=0 // loop_footer
    %s23 = sadd.s32 1, %s19
  $region7: #{decoder_block.3} parent=0 // loop_footer_branch
    %18 = sbr.rel target = $region3
  $region8: #{decoder_block.3} parent=0 // loop_exit
    _

// kernel: decoder_block.4
$region0: #{decoder_block.4}
  #allocation0 [shape = 'u32[]', space=smem, size = 0x4, offset = 0x4, fixed_abs, tag = 'smem constant byte address 0x4 - core index']
  #allocation1 [shape = 'u32[144,128]{1,0:T(1,128)}', space=vmem, size = 0x12000, scoped, tag = 'internal scratch']
  #allocation2 [shape = 'f32[1,1]{1,0:T(1,128)S(6)}', space=smem, size = 0x200, scoped, tag = 'scoped memory for decoder_block.4']
  %s0 = inlined_call_operand.vmem [shape: f32[2,8,32], index: 0, kind: input, shape index: {}]
  %s1 = inlined_call_operand.vmem [shape: f32[2,16,32], index: 1, kind: input, shape index: {}]
  %s2 = inlined_call_operand.vmem [shape: f32[2,1,16], index: 2, kind: input, shape index: {}]
  %s3 = inlined_call_operand.vmem [shape: f32[1,32], index: 3, kind: input, shape index: {}]
  %s4 = inlined_call_operand.vmem [shape: f32[1,32], index: 4, kind: input, shape index: {}]
  %s5 = inlined_call_operand.vmem [shape: bf16[32,32], index: 5, kind: input, shape index: {}]
  %s6 = inlined_call_operand.vmem [shape: f32[1,32], index: 6, kind: input, shape index: {}]
  %s7 = inlined_call_operand.vmem [shape: bf16[32,64], index: 7, kind: input, shape index: {}]
  %s8 = inlined_call_operand.vmem [shape: f32[1,64], index: 8, kind: input, shape index: {}]
  %s9 = inlined_call_operand.vmem [shape: bf16[32,32], index: 9, kind: input, shape index: {}]
  %s10 = inlined_call_operand.vmem [shape: f32[1,32], index: 10, kind: input, shape index: {}]
  %s11 = inlined_call_operand.<no memory space> [shape: f32[1,1], index: 11, kind: input, shape index: {}]
  %s12 = inlined_call_operand.vmem [shape: f32[2,8,32], index: 12, kind: output, shape index: {}]
  %s13 = sld [smem:[#allocation0]]
  $region81: #{decoder_block.4} parent=0
    _
  %s15 = ssub.s32 1, %s13
  %s16 = scalar_select 0, %s15, %s13
  %17 = sst [smem:[#allocation2]] %s11
  loop: start=0, step=1, limit=4
  $region2: #{decoder_block.4} parent=0 // loop_pre_header
    _
  $region3: #{decoder_block.4} parent=0 // loop_header
    %s19 = sphi 0, %s23
    %p20 = scmp.ge.s32.totalorder %s19, 4
    %s26 = sphi 0, %s38
    %s27 = sphi 0, %s34
    %s28 = sphi 0, %s26
    %s29 = sphi 0, %s27
    %s30 = sphi 0, %s28
    %s31 = sphi 0, %s29
    %s43 = sphi 0, %s45
    %s46 = sphi 0, %s43
    %s47 = sphi 0, %s46
    %s63 = sphi 0, %s47
    %s69 = sphi 0, %s71
    %s72 = sphi 0, %s69
    %s73 = sphi 0, %s72
    %s89 = sphi 0, %s73
    %s95 = sphi 0, %s97
    %s98 = sphi 0, %s95
    %s99 = sphi 0, %s98
    %s115 = sphi 0, %s99
    %s119 = sphi 0, %s119
    %s121 = sphi 0, %s119
    %s122 = sphi 0, %s121
    %s136 = sphi 0, %s122
    %s140 = sphi 0, %s140
    %s142 = sphi 0, %s140
    %s143 = sphi 0, %s142
    %s157 = sphi 0, %s143
    %s161 = sphi 0, %s161
    %s163 = sphi 0, %s161
    %s164 = sphi 0, %s163
    %s178 = sphi 0, %s164
    %s182 = sphi 0, %s182
    %s184 = sphi 0, %s182
    %s185 = sphi 0, %s184
    %s199 = sphi 0, %s185
    %s203 = sphi 0, %s203
    %s205 = sphi 0, %s203
    %s206 = sphi 0, %s205
    %s220 = sphi 0, %s206
    %s224 = sphi 0, %s224
    %s226 = sphi 0, %s224
    %s227 = sphi 0, %s226
    %s241 = sphi 0, %s227
    %s245 = sphi 0, %s245
    %s247 = sphi 0, %s245
    %s248 = sphi 0, %s247
    %s262 = sphi 0, %s248
    %s266 = sphi 0, %s266
    %s268 = sphi 0, %s266
    %s269 = sphi 0, %s268
    %s283 = sphi 0, %s269
    %s287 = sphi 0, %s287
    %s289 = sphi 0, %s287
    %s290 = sphi 0, %s289
    %s304 = sphi 0, %s290
    %s312 = sphi 0, %s314
    %s315 = sphi 0, %s312
    %s316 = sphi 0, %s315
    %s332 = sphi 0, %s316
  $region4: #{decoder_block.4} parent=0 // loop_header_branch
    %22 = sbr.rel (%p20) target = $region8
  $region5: #{decoder_block.4} parent=0 // loop_body
    %s24 = ssub.s32 %s19, 1
    %s25 = ssub.s32 %s19, 2
    %s32 = sadd.s32 1, %s27
    %p33 = scmp.ge.s32.totalorder %s32, 1
    %s34 = scalar_select %p33, 0, %s32
    %s35 = sadd.s32 1, %s26
    %s36 = scalar_select %p33, %s35, %s26
    %p37 = scmp.ge.s32.totalorder %s36, 2
    %s38 = scalar_select %p37, 0, %s36
    %s39 = ssub.s32 %s26, %s38
    %s40 = ssub.s32 %s27, %s34
    %s41 = sor.u32 %s39, %s40
    %p42 = scmp.eq.s32.totalorder %s41, 0
    %s44 = sadd.s32 %s43, 1
    %s45 = scalar_select %p42, %s43, %s44
    %p48 = pneg %p42
    %p49 = scmp.eq.s32.totalorder %s19, 1
    %p50 = por %p48, %p49
    %p51 = scmp.ne.s32.totalorder %s43, %s46
    %p52 = scmp.eq.s32.totalorder %s19, 0
    %p53 = por %p51, %p52
    %p54 = scmp.ne.s32.totalorder %s43, %s46
    %p55 = scmp.eq.s32.totalorder %s24, 1
    %p56 = por %p54, %p55
    %p57 = scmp.ne.s32.totalorder %s46, %s47
    %p58 = scmp.eq.s32.totalorder %s24, 0
    %p59 = por %p57, %p58
    %p60 = scmp.ne.s32.totalorder %s46, %s47
    %p61 = scmp.eq.s32.totalorder %s25, 1
    %p62 = por %p60, %p61
    %p64 = scmp.ne.s32.totalorder %s47, %s63
    %p65 = scmp.eq.s32.totalorder %s25, 0
    %p66 = por %p64, %p65
    %s67 = ssub.s32 %s26, %s38
    %p68 = scmp.eq.s32.totalorder %s67, 0
    %s70 = sadd.s32 %s69, 1
    %s71 = scalar_select %p68, %s69, %s70
    %p74 = pneg %p68
    %p75 = scmp.eq.s32.totalorder %s19, 1
    %p76 = por %p74, %p75
    %p77 = scmp.ne.s32.totalorder %s69, %s72
    %p78 = scmp.eq.s32.totalorder %s19, 0
    %p79 = por %p77, %p78
    %p80 = scmp.ne.s32.totalorder %s69, %s72
    %p81 = scmp.eq.s32.totalorder %s24, 1
    %p82 = por %p80, %p81
    %p83 = scmp.ne.s32.totalorder %s72, %s73
    %p84 = scmp.eq.s32.totalorder %s24, 0
    %p85 = por %p83, %p84
    %p86 = scmp.ne.s32.totalorder %s72, %s73
    %p87 = scmp.eq.s32.totalorder %s25, 1
    %p88 = por %p86, %p87
    %p90 = scmp.ne.s32.totalorder %s73, %s89
    %p91 = scmp.eq.s32.totalorder %s25, 0
    %p92 = por %p90, %p91
    %s93 = ssub.s32 %s26, %s38
    %p94 = scmp.eq.s32.totalorder %s93, 0
    %s96 = sadd.s32 %s95, 1
    %s97 = scalar_select %p94, %s95, %s96
    %p100 = pneg %p94
    %p101 = scmp.eq.s32.totalorder %s19, 1
    %p102 = por %p100, %p101
    %p103 = scmp.ne.s32.totalorder %s95, %s98
    %p104 = scmp.eq.s32.totalorder %s19, 0
    %p105 = por %p103, %p104
    %p106 = scmp.ne.s32.totalorder %s95, %s98
    %p107 = scmp.eq.s32.totalorder %s24, 1
    %p108 = por %p106, %p107
    %p109 = scmp.ne.s32.totalorder %s98, %s99
    %p110 = scmp.eq.s32.totalorder %s24, 0
    %p111 = por %p109, %p110
    %p112 = scmp.ne.s32.totalorder %s98, %s99
    %p113 = scmp.eq.s32.totalorder %s25, 1
    %p114 = por %p112, %p113
    %p116 = scmp.ne.s32.totalorder %s99, %s115
    %p117 = scmp.eq.s32.totalorder %s25, 0
    %p118 = por %p116, %p117
    %s120 = sadd.s32 %s119, 1
    %p123 = scmp.eq.s32.totalorder %s19, 1
    %p124 = scmp.ne.s32.totalorder %s119, %s121
    %p125 = scmp.eq.s32.totalorder %s19, 0
    %p126 = por %p124, %p125
    %p127 = scmp.ne.s32.totalorder %s119, %s121
    %p128 = scmp.eq.s32.totalorder %s24, 1
    %p129 = por %p127, %p128
    %p130 = scmp.ne.s32.totalorder %s121, %s122
    %p131 = scmp.eq.s32.totalorder %s24, 0
    %p132 = por %p130, %p131
    %p133 = scmp.ne.s32.totalorder %s121, %s122
    %p134 = scmp.eq.s32.totalorder %s25, 1
    %p135 = por %p133, %p134
    %p137 = scmp.ne.s32.totalorder %s122, %s136
    %p138 = scmp.eq.s32.totalorder %s25, 0
    %p139 = por %p137, %p138
    %s141 = sadd.s32 %s140, 1
    %p144 = scmp.eq.s32.totalorder %s19, 1
    %p145 = scmp.ne.s32.totalorder %s140, %s142
    %p146 = scmp.eq.s32.totalorder %s19, 0
    %p147 = por %p145, %p146
    %p148 = scmp.ne.s32.totalorder %s140, %s142
    %p149 = scmp.eq.s32.totalorder %s24, 1
    %p150 = por %p148, %p149
    %p151 = scmp.ne.s32.totalorder %s142, %s143
    %p152 = scmp.eq.s32.totalorder %s24, 0
    %p153 = por %p151, %p152
    %p154 = scmp.ne.s32.totalorder %s142, %s143
    %p155 = scmp.eq.s32.totalorder %s25, 1
    %p156 = por %p154, %p155
    %p158 = scmp.ne.s32.totalorder %s143, %s157
    %p159 = scmp.eq.s32.totalorder %s25, 0
    %p160 = por %p158, %p159
    %s162 = sadd.s32 %s161, 1
    %p165 = scmp.eq.s32.totalorder %s19, 1
    %p166 = scmp.ne.s32.totalorder %s161, %s163
    %p167 = scmp.eq.s32.totalorder %s19, 0
    %p168 = por %p166, %p167
    %p169 = scmp.ne.s32.totalorder %s161, %s163
    %p170 = scmp.eq.s32.totalorder %s24, 1
    %p171 = por %p169, %p170
    %p172 = scmp.ne.s32.totalorder %s163, %s164
    %p173 = scmp.eq.s32.totalorder %s24, 0
    %p174 = por %p172, %p173
    %p175 = scmp.ne.s32.totalorder %s163, %s164
    %p176 = scmp.eq.s32.totalorder %s25, 1
    %p177 = por %p175, %p176
    %p179 = scmp.ne.s32.totalorder %s164, %s178
    %p180 = scmp.eq.s32.totalorder %s25, 0
    %p181 = por %p179, %p180
    %s183 = sadd.s32 %s182, 1
    %p186 = scmp.eq.s32.totalorder %s19, 1
    %p187 = scmp.ne.s32.totalorder %s182, %s184
    %p188 = scmp.eq.s32.totalorder %s19, 0
    %p189 = por %p187, %p188
    %p190 = scmp.ne.s32.totalorder %s182, %s184
    %p191 = scmp.eq.s32.totalorder %s24, 1
    %p192 = por %p190, %p191
    %p193 = scmp.ne.s32.totalorder %s184, %s185
    %p194 = scmp.eq.s32.totalorder %s24, 0
    %p195 = por %p193, %p194
    %p196 = scmp.ne.s32.totalorder %s184, %s185
    %p197 = scmp.eq.s32.totalorder %s25, 1
    %p198 = por %p196, %p197
    %p200 = scmp.ne.s32.totalorder %s185, %s199
    %p201 = scmp.eq.s32.totalorder %s25, 0
    %p202 = por %p200, %p201
    %s204 = sadd.s32 %s203, 1
    %p207 = scmp.eq.s32.totalorder %s19, 1
    %p208 = scmp.ne.s32.totalorder %s203, %s205
    %p209 = scmp.eq.s32.totalorder %s19, 0
    %p210 = por %p208, %p209
    %p211 = scmp.ne.s32.totalorder %s203, %s205
    %p212 = scmp.eq.s32.totalorder %s24, 1
    %p213 = por %p211, %p212
    %p214 = scmp.ne.s32.totalorder %s205, %s206
    %p215 = scmp.eq.s32.totalorder %s24, 0
    %p216 = por %p214, %p215
    %p217 = scmp.ne.s32.totalorder %s205, %s206
    %p218 = scmp.eq.s32.totalorder %s25, 1
    %p219 = por %p217, %p218
    %p221 = scmp.ne.s32.totalorder %s206, %s220
    %p222 = scmp.eq.s32.totalorder %s25, 0
    %p223 = por %p221, %p222
    %s225 = sadd.s32 %s224, 1
    %p228 = scmp.eq.s32.totalorder %s19, 1
    %p229 = scmp.ne.s32.totalorder %s224, %s226
    %p230 = scmp.eq.s32.totalorder %s19, 0
    %p231 = por %p229, %p230
    %p232 = scmp.ne.s32.totalorder %s224, %s226
    %p233 = scmp.eq.s32.totalorder %s24, 1
    %p234 = por %p232, %p233
    %p235 = scmp.ne.s32.totalorder %s226, %s227
    %p236 = scmp.eq.s32.totalorder %s24, 0
    %p237 = por %p235, %p236
    %p238 = scmp.ne.s32.totalorder %s226, %s227
    %p239 = scmp.eq.s32.totalorder %s25, 1
    %p240 = por %p238, %p239
    %p242 = scmp.ne.s32.totalorder %s227, %s241
    %p243 = scmp.eq.s32.totalorder %s25, 0
    %p244 = por %p242, %p243
    %s246 = sadd.s32 %s245, 1
    %p249 = scmp.eq.s32.totalorder %s19, 1
    %p250 = scmp.ne.s32.totalorder %s245, %s247
    %p251 = scmp.eq.s32.totalorder %s19, 0
    %p252 = por %p250, %p251
    %p253 = scmp.ne.s32.totalorder %s245, %s247
    %p254 = scmp.eq.s32.totalorder %s24, 1
    %p255 = por %p253, %p254
    %p256 = scmp.ne.s32.totalorder %s247, %s248
    %p257 = scmp.eq.s32.totalorder %s24, 0
    %p258 = por %p256, %p257
    %p259 = scmp.ne.s32.totalorder %s247, %s248
    %p260 = scmp.eq.s32.totalorder %s25, 1
    %p261 = por %p259, %p260
    %p263 = scmp.ne.s32.totalorder %s248, %s262
    %p264 = scmp.eq.s32.totalorder %s25, 0
    %p265 = por %p263, %p264
    %s267 = sadd.s32 %s266, 1
    %p270 = scmp.eq.s32.totalorder %s19, 1
    %p271 = scmp.ne.s32.totalorder %s266, %s268
    %p272 = scmp.eq.s32.totalorder %s19, 0
    %p273 = por %p271, %p272
    %p274 = scmp.ne.s32.totalorder %s266, %s268
    %p275 = scmp.eq.s32.totalorder %s24, 1
    %p276 = por %p274, %p275
    %p277 = scmp.ne.s32.totalorder %s268, %s269
    %p278 = scmp.eq.s32.totalorder %s24, 0
    %p279 = por %p277, %p278
    %p280 = scmp.ne.s32.totalorder %s268, %s269
    %p281 = scmp.eq.s32.totalorder %s25, 1
    %p282 = por %p280, %p281
    %p284 = scmp.ne.s32.totalorder %s269, %s283
    %p285 = scmp.eq.s32.totalorder %s25, 0
    %p286 = por %p284, %p285
    %s288 = sadd.s32 %s287, 1
    %p291 = scmp.eq.s32.totalorder %s19, 1
    %p292 = scmp.ne.s32.totalorder %s287, %s289
    %p293 = scmp.eq.s32.totalorder %s19, 0
    %p294 = por %p292, %p293
    %p295 = scmp.ne.s32.totalorder %s287, %s289
    %p296 = scmp.eq.s32.totalorder %s24, 1
    %p297 = por %p295, %p296
    %p298 = scmp.ne.s32.totalorder %s289, %s290
    %p299 = scmp.eq.s32.totalorder %s24, 0
    %p300 = por %p298, %p299
    %p301 = scmp.ne.s32.totalorder %s289, %s290
    %p302 = scmp.eq.s32.totalorder %s25, 1
    %p303 = por %p301, %p302
    %p305 = scmp.ne.s32.totalorder %s290, %s304
    %p306 = scmp.eq.s32.totalorder %s25, 0
    %p307 = por %p305, %p306
    %s308 = ssub.s32 %s26, %s38
    %s309 = ssub.s32 %s27, %s34
    %s310 = sor.u32 %s308, %s309
    %p311 = scmp.eq.s32.totalorder %s310, 0
    %s313 = sadd.s32 %s312, 1
    %s314 = scalar_select %p311, %s312, %s313
    %p317 = pneg %p311
    %p318 = scmp.eq.s32.totalorder %s19, 1
    %p319 = por %p317, %p318
    %p320 = scmp.ne.s32.totalorder %s312, %s315
    %p321 = scmp.eq.s32.totalorder %s19, 0
    %p322 = por %p320, %p321
    %p323 = scmp.ne.s32.totalorder %s312, %s315
    %p324 = scmp.eq.s32.totalorder %s24, 1
    %p325 = por %p323, %p324
    %p326 = scmp.ne.s32.totalorder %s315, %s316
    %p327 = scmp.eq.s32.totalorder %s24, 0
    %p328 = por %p326, %p327
    %p329 = scmp.ne.s32.totalorder %s315, %s316
    %p330 = scmp.eq.s32.totalorder %s25, 1
    %p331 = por %p329, %p330
    %p333 = scmp.ne.s32.totalorder %s316, %s332
    %p334 = scmp.eq.s32.totalorder %s25, 0
    %p335 = por %p333, %p334
    %p336 = scmp.le.s32.totalorder 1, %s19
    %p337 = scmp.lt.s32.totalorder %s19, 3
    %p338 = pnand %p336, %p337
    %p339 = pneg %p338
    // Predicated region
    $region9: #{decoder_block.4} parent=5 // pred_check
      _
    $region10: #{decoder_block.4} parent=5 // pred_check_branch
      %341 = sbr.rel (%p338) target = $region12
    $region11: #{decoder_block.4} parent=5 // pred_region
      %s342 = ssub.s32 %s19, 1
      // Predicated region
      $region13: #{decoder_block.4} parent=11 // pred_check
        %p343 = pneg %p132
      $region14: #{decoder_block.4} parent=11 // pred_check_branch
        %345 = sbr.rel (%p343) target = $region16
      $region15: #{decoder_block.4} parent=11 // pred_region
        _
      $region16: #{decoder_block.4} parent=11 // pred_fallthru
        _
      // Predicated region
      $region17: #{decoder_block.4} parent=11 // pred_check
        %p346 = pneg %p153
      $region18: #{decoder_block.4} parent=11 // pred_check_branch
        %348 = sbr.rel (%p346) target = $region20
      $region19: #{decoder_block.4} parent=11 // pred_region
        _
      $region20: #{decoder_block.4} parent=11 // pred_fallthru
        _
      // Predicated region
      $region21: #{decoder_block.4} parent=11 // pred_check
        %p349 = pneg %p174
      $region22: #{decoder_block.4} parent=11 // pred_check_branch
        %351 = sbr.rel (%p349) target = $region24
      $region23: #{decoder_block.4} parent=11 // pred_region
        _
      $region24: #{decoder_block.4} parent=11 // pred_fallthru
        _
      // Predicated region
      $region25: #{decoder_block.4} parent=11 // pred_check
        %p352 = pneg %p195
      $region26: #{decoder_block.4} parent=11 // pred_check_branch
        %354 = sbr.rel (%p352) target = $region28
      $region27: #{decoder_block.4} parent=11 // pred_region
        _
      $region28: #{decoder_block.4} parent=11 // pred_fallthru
        _
      // Predicated region
      $region29: #{decoder_block.4} parent=11 // pred_check
        %p355 = pneg %p216
      $region30: #{decoder_block.4} parent=11 // pred_check_branch
        %357 = sbr.rel (%p355) target = $region32
      $region31: #{decoder_block.4} parent=11 // pred_region
        _
      $region32: #{decoder_block.4} parent=11 // pred_fallthru
        _
      // Predicated region
      $region33: #{decoder_block.4} parent=11 // pred_check
        %p358 = pneg %p237
      $region34: #{decoder_block.4} parent=11 // pred_check_branch
        %360 = sbr.rel (%p358) target = $region36
      $region35: #{decoder_block.4} parent=11 // pred_region
        _
      $region36: #{decoder_block.4} parent=11 // pred_fallthru
        _
      // Predicated region
      $region37: #{decoder_block.4} parent=11 // pred_check
        %p361 = pneg %p258
      $region38: #{decoder_block.4} parent=11 // pred_check_branch
        %363 = sbr.rel (%p361) target = $region40
      $region39: #{decoder_block.4} parent=11 // pred_region
        _
      $region40: #{decoder_block.4} parent=11 // pred_fallthru
        _
      // Predicated region
      $region41: #{decoder_block.4} parent=11 // pred_check
        %p364 = pneg %p279
      $region42: #{decoder_block.4} parent=11 // pred_check_branch
        %366 = sbr.rel (%p364) target = $region44
      $region43: #{decoder_block.4} parent=11 // pred_region
        _
      $region44: #{decoder_block.4} parent=11 // pred_fallthru
        _
      // Predicated region
      $region45: #{decoder_block.4} parent=11 // pred_check
        %p367 = pneg %p300
      $region46: #{decoder_block.4} parent=11 // pred_check_branch
        %369 = sbr.rel (%p367) target = $region48
      $region47: #{decoder_block.4} parent=11 // pred_region
        _
      $region48: #{decoder_block.4} parent=11 // pred_fallthru
        _
    $region12: #{decoder_block.4} parent=5 // pred_fallthru
      _
    %p370 = scmp.lt.s32.totalorder %s19, 2
    // Predicated region
    $region49: #{decoder_block.4} parent=5 // pred_check
      %p371 = pneg %p370
    $region50: #{decoder_block.4} parent=5 // pred_check_branch
      %373 = sbr.rel (%p371) target = $region52
    $region51: #{decoder_block.4} parent=5 // pred_region
      // Predicated region
      $region53: #{decoder_block.4} parent=51 // pred_check
        %p374 = pneg %p53
      $region54: #{decoder_block.4} parent=51 // pred_check_branch
        %376 = sbr.rel (%p374) target = $region56
      $region55: #{decoder_block.4} parent=51 // pred_region
        %p377 = scmp.lt.s32.totalorder %s26, 1
        %s378 = scalar_select %p377, %s26, 1
        %p379 = scmp.lt.s32.totalorder %s27, 0
        %s380 = scalar_select %p379, %s27, 0
        %s381 = sadd.s32 %s380, %s378
        %s382 = smul.addr %s381, 8
        %s383 = scalar_lea.vmem %s0, %s382
      $region56: #{decoder_block.4} parent=51 // pred_fallthru
        _
      // Predicated region
      $region57: #{decoder_block.4} parent=51 // pred_check
        %p384 = pneg %p79
      $region58: #{decoder_block.4} parent=51 // pred_check_branch
        %386 = sbr.rel (%p384) target = $region60
      $region59: #{decoder_block.4} parent=51 // pred_region
        %p387 = scmp.lt.s32.totalorder %s26, 1
        %s388 = scalar_select %p387, %s26, 1
        %s389 = smul.addr %s388, 2
        %s390 = smul.addr %s389, 8
        %s391 = scalar_lea.vmem %s1, %s390
      $region60: #{decoder_block.4} parent=51 // pred_fallthru
        _
      // Predicated region
      $region61: #{decoder_block.4} parent=51 // pred_check
        %p392 = pneg %p105
      $region62: #{decoder_block.4} parent=51 // pred_check_branch
        %394 = sbr.rel (%p392) target = $region64
      $region63: #{decoder_block.4} parent=51 // pred_region
        %p395 = scmp.lt.s32.totalorder %s26, 1
        %s396 = scalar_select %p395, %s26, 1
        %s397 = scalar_lea.vmem %s2, %s396
      $region64: #{decoder_block.4} parent=51 // pred_fallthru
        _
    $region52: #{decoder_block.4} parent=5 // pred_fallthru
      _
    %p398 = scmp.le.s32.totalorder 1, %s19
    %p399 = scmp.lt.s32.totalorder %s19, 3
    %p400 = pnand %p398, %p399
    %p401 = pneg %p400
    // Predicated region
    $region65: #{decoder_block.4} parent=5 // pred_check
      _
    $region66: #{decoder_block.4} parent=5 // pred_check_branch
      %403 = sbr.rel (%p400) target = $region68
    $region67: #{decoder_block.4} parent=5 // pred_region
      %s404 = ssub.s32 %s19, 1
      %p405 = scmp.lt.s32.totalorder %s28, 1
      %s406 = scalar_select %p405, %s28, 1
      %p407 = scmp.lt.s32.totalorder %s29, 0
      %s408 = scalar_select %p407, %s29, 0
      %s409 = sadd.s32 %s408, %s406
      %s410 = smul.addr %s409, 8
      %s411 = scalar_lea.vmem %s0, %s410
      %p412 = pneg %p59
      %p413 = pneg %p56
      %p414 = scmp.lt.s32.totalorder %s28, 1
      %s415 = scalar_select %p414, %s28, 1
      %s416 = smul.addr %s415, 2
      %s417 = smul.addr %s416, 8
      %s418 = scalar_lea.vmem %s1, %s417
      %p419 = pneg %p85
      %p420 = pneg %p82
      %p421 = scmp.lt.s32.totalorder %s28, 1
      %s422 = scalar_select %p421, %s28, 1
      %s423 = scalar_lea.vmem %s2, %s422
      %p424 = pneg %p111
      %p425 = pneg %p108
      %p426 = pneg %p132
      %p427 = pneg %p129
      %p428 = pneg %p153
      %p429 = pneg %p150
      %p430 = pneg %p174
      %p431 = pneg %p171
      %p432 = pneg %p195
      %p433 = pneg %p192
      %p434 = pneg %p216
      %p435 = pneg %p213
      %p436 = pneg %p237
      %p437 = pneg %p234
      %p438 = pneg %p258
      %p439 = pneg %p255
      %p440 = pneg %p279
      %p441 = pneg %p276
      %p442 = pneg %p300
      %p443 = pneg %p297
      %p444 = pneg %p328
      %p445 = pneg %p325
      %p446 = scmp.lt.s32.totalorder %s28, 1
      %s447 = scalar_select %p446, %s28, 1
      %p448 = scmp.lt.s32.totalorder %s29, 0
      %s449 = scalar_select %p448, %s29, 0
      %s450 = sadd.s32 %s449, %s447
      %s451 = smul.addr %s450, 8
      %s452 = scalar_lea.vmem %s12, %s451
      %p453 = scmp.lt.s32.totalorder %s28, 1
      %s454 = scalar_select %p453, %s28, 1
      %p455 = scmp.lt.s32.totalorder %s29, 0
      %s456 = scalar_select %p455, %s29, 0
      %s457 = sadd.s32 %s456, %s454
      %s458 = smul.addr %s457, 8
      %s459 = scalar_lea.vmem %s0, %s458
      %p460 = scmp.lt.s32.totalorder %s28, 1
      %s461 = scalar_select %p460, %s28, 1
      %s462 = smul.addr %s461, 2
      %s463 = smul.addr %s462, 8
      %s464 = scalar_lea.vmem %s1, %s463
      %p465 = scmp.lt.s32.totalorder %s28, 1
      %s466 = scalar_select %p465, %s28, 1
      %s467 = scalar_lea.vmem %s2, %s466
      %p468 = scmp.lt.s32.totalorder %s28, 1
      %s469 = scalar_select %p468, %s28, 1
      %p470 = scmp.lt.s32.totalorder %s29, 0
      %s471 = scalar_select %p470, %s29, 0
      %s472 = sadd.s32 %s471, %s469
      %s473 = smul.addr %s472, 8
      %s474 = scalar_lea.vmem %s12, %s473
      %v476 = vld [vmem:[%s459] sm:$0xff]
      %v477 = vld [vmem:[%s3] sm:$0x1]
      %v478 = vld [vmem:[%s4] sm:$0x1]
      %vm479 = vcmask 261120
      %v480 = vsel %vm479, %v476, 0.0
      %481 = vadd.xlane.f32.xlu0 %v480
      %v482 = vpop.xlane.xlu0 %481
      %v483 = vrcp.pop 32.0
      %v484 = vmul.f32 %v482, %v483
      %v485 = vsub.f32 %v476, %v484
      %v486 = vmul.f32 %v485, %v485
      %v487 = vsel %vm479, %v486, 0.0
      %488 = vadd.xlane.f32.xlu0 %v487
      %v489 = vpop.xlane.xlu0 %488
      %v490 = vmul.f32 %v489, %v483
      %v491 = vadd.f32 %v490, 1e-05
      %v492 = vrsqrt.pop %v491
      %v493 = vmul.f32 %v485, %v492
      %v495 = vlaneseq
      %v496 = vshrl.u32 %v495, 7
      %v497 = vsub.s32 0, %v496
      %v498 = vrot.slane %v477, %v497
      %v500 = vmul.f32 %v493, %v498
      %v502 = vlaneseq
      %v503 = vshrl.u32 %v502, 7
      %v504 = vsub.s32 0, %v503
      %v505 = vrot.slane %v478, %v504
      %v507 = vadd.f32 %v500, %v505
      %v508 = vld [vmem:[%s464] sm:$0xff]
      %v509 = vld [vmem:[%s464 + $0x8] sm:$0xff]
      %v510 = vpack.c.bf16 %v507, %v507
      %v511 = vld [vmem:[%s5] sm:$0xf]
      %v512 = vld [vmem:[%s5 + $0x4] sm:$0xf]
      %v513 = vld [vmem:[%s5 + $0x8] sm:$0xf]
      %v514 = vld [vmem:[%s5 + $0xc] sm:$0xf]
      %v515 = vld [vmem:[%s6] sm:$0x1]
      %v517 = vlaneseq
      %v518 = vshrl.u32 %v517, 7
      %v519 = vsub.s32 0, %v518
      %v520 = vrot.slane %v515, %v519
      %v526 = vunpack.c.l.b16 %v511
      %v527 = vunpack.c.l.b16 %v512
      %v528 = vunpack.c.l.b16 %v513
      %v529 = vunpack.c.l.b16 %v514
      %v530 = vpack.c.b16 %v527, %v526
      %v531 = vpack.c.b16 %v529, %v528
      %v535 = vsel %vm479, %v510, 0
      %537 = vmatprep.subr.bf16.mxu0 0
      %538 = vmatpush1.bf16.msra.mxu0 0
      %539 = vmatprep.subr.bf16.mxu0 0
      %540 = vmatpush1.bf16.msra.mxu0 0
      %541 = vmatprep.subr.bf16.mxu0 0
      %542 = vmatpush1.bf16.msra.mxu0 0
      %543 = vmatprep.subr.bf16.mxu0 0
      %544 = vmatpush1.bf16.msra.mxu0 0
      %545 = vmatprep.subr.bf16.mxu0 0
      %546 = vmatpush1.bf16.msra.mxu0 0
      %547 = vmatprep.subr.bf16.mxu0 0
      %548 = vmatpush1.bf16.msra.mxu0 0
      %549 = vmatprep.subr.bf16.mxu0 0
      %550 = vmatpush1.bf16.msra.mxu0 %v531
      %551 = vmatprep.subr.bf16.mxu0 0
      %552 = vmatpush1.bf16.msra.mxu0 %v530
      %553 = vmatprep.subr.bf16.mxu0 0
      %554 = vmatpush2.bf16.msra.mxu0 0
      %555 = vmatprep.subr.bf16.mxu0 0
      %556 = vmatpush2.bf16.msra.mxu0 0
      %557 = vmatprep.subr.bf16.mxu0 0
      %558 = vmatpush2.bf16.msra.mxu0 0
      %559 = vmatprep.subr.bf16.mxu0 0
      %560 = vmatpush2.bf16.msra.mxu0 0
      %561 = vmatprep.subr.bf16.mxu0 0
      %562 = vmatpush2.bf16.msra.mxu0 0
      %563 = vmatprep.subr.bf16.mxu0 0
      %564 = vmatpush2.bf16.msra.mxu0 0
      %565 = vmatprep.subr.bf16.mxu0 0
      %566 = vmatpush2.bf16.msra.mxu0 0
      %567 = vmatprep.subr.bf16.mxu0 0
      %568 = vmatpush2.bf16.msra.mxu0 0
      %569 = vmatprep.mubr.bf16.mxu0 0
      %570 = vmatmul.mubr.bf16.gmra.mxu0 %v535
      %v571 = vpop.f32.mrf.mxu0
      %v572 = vadd.f32 %v520, %v571
      %v573 = vpop.f32.mrf.mxu0
      %v574 = vpop.f32.mrf.mxu0
      %v575 = vpop.f32.mrf.mxu0
      %576 = vdwg.mxu0
      %v577 = vpack.c.bf16 %v509, %v508
      %v578 = vld [vmem:[%s7] sm:$0xf]
      %v579 = vld [vmem:[%s7 + $0x4] sm:$0xf]
      %v580 = vld [vmem:[%s7 + $0x8] sm:$0xf]
      %v581 = vld [vmem:[%s7 + $0xc] sm:$0xf]
      %v582 = vld [vmem:[%s8] sm:$0x1]
      %v584 = vlaneseq
      %v585 = vshrl.u32 %v584, 7
      %v586 = vsub.s32 0, %v585
      %v587 = vrot.slane %v582, %v586
      %v593 = vunpack.c.l.b16 %v578
      %v594 = vunpack.c.l.b16 %v579
      %v595 = vunpack.c.l.b16 %v580
      %v596 = vunpack.c.l.b16 %v581
      %v597 = vpack.c.b16 %v594, %v593
      %v598 = vpack.c.b16 %v596, %v595
      %v602 = vsel %vm479, %v577, 0
      %604 = vmatprep.subr.bf16.mxu0 0
      %605 = vmatpush1.bf16.msra.mxu0 0
      %606 = vmatprep.subr.bf16.mxu0 0
      %607 = vmatpush1.bf16.msra.mxu0 0
      %608 = vmatprep.subr.bf16.mxu0 0
      %609 = vmatpush1.bf16.msra.mxu0 0
      %610 = vmatprep.subr.bf16.mxu0 0
      %611 = vmatpush1.bf16.msra.mxu0 0
      %612 = vmatprep.subr.bf16.mxu0 0
      %613 = vmatpush1.bf16.msra.mxu0 0
      %614 = vmatprep.subr.bf16.mxu0 0
      %615 = vmatpush1.bf16.msra.mxu0 0
      %616 = vmatprep.subr.bf16.mxu0 0
      %617 = vmatpush1.bf16.msra.mxu0 %v598
      %618 = vmatprep.subr.bf16.mxu0 0
      %619 = vmatpush1.bf16.msra.mxu0 %v597
      %620 = vmatprep.subr.bf16.mxu0 0
      %621 = vmatpush2.bf16.msra.mxu0 0
      %622 = vmatprep.subr.bf16.mxu0 0
      %623 = vmatpush2.bf16.msra.mxu0 0
      %624 = vmatprep.subr.bf16.mxu0 0
      %625 = vmatpush2.bf16.msra.mxu0 0
      %626 = vmatprep.subr.bf16.mxu0 0
      %627 = vmatpush2.bf16.msra.mxu0 0
      %628 = vmatprep.subr.bf16.mxu0 0
      %629 = vmatpush2.bf16.msra.mxu0 0
      %630 = vmatprep.subr.bf16.mxu0 0
      %631 = vmatpush2.bf16.msra.mxu0 0
      %632 = vmatprep.subr.bf16.mxu0 0
      %633 = vmatpush2.bf16.msra.mxu0 0
      %634 = vmatprep.subr.bf16.mxu0 0
      %635 = vmatpush2.bf16.msra.mxu0 0
      %636 = vmatprep.mubr.bf16.mxu0 0
      %637 = vmatmul.mubr.bf16.gmra.mxu0 %v602
      %v638 = vpop.f32.mrf.mxu0
      %v639 = vadd.f32 %v587, %v638
      %v640 = vpop.f32.mrf.mxu0
      %v641 = vpop.f32.mrf.mxu0
      %v642 = vadd.f32 %v587, %v641
      %v643 = vpop.f32.mrf.mxu0
      %644 = vdwg.mxu0
      %v645 = vld [vmem:[%s467] sm:$0x1]
      %v646 = vpack.c.bf16 %v572, %v572
      %v647 = vpack.c.bf16 %v642, %v639
      %v649 = vlaneseq
      %v650 = vshrl.u32 %v649, 7
      %v651 = vsub.s32 0, %v650
      %v652 = vrot.slane %v645, %v651
      %vm654 = vcmask 64512
      %v656 = vsel %vm654, %v646, 0
      %v659 = vsel %vm654, %v647, 0
      %661 = vmatprep.subr.bf16.mxu0 0
      %662 = vmatpush1.bf16.xpose.msra.mxu0 0
      %663 = vmatprep.subr.bf16.mxu0 0
      %664 = vmatpush1.bf16.xpose.msra.mxu0 0
      %665 = vmatprep.subr.bf16.mxu0 0
      %666 = vmatpush1.bf16.xpose.msra.mxu0 0
      %667 = vmatprep.subr.bf16.mxu0 0
      %668 = vmatpush1.bf16.xpose.msra.mxu0 0
      %669 = vmatprep.subr.bf16.mxu0 0
      %670 = vmatpush1.bf16.xpose.msra.mxu0 0
      %671 = vmatprep.subr.bf16.mxu0 0
      %672 = vmatpush1.bf16.xpose.msra.mxu0 0
      %673 = vmatprep.subr.bf16.mxu0 0
      %674 = vmatpush1.bf16.xpose.msra.mxu0 0
      %675 = vmatprep.subr.bf16.mxu0 0
      %676 = vmatpush1.bf16.xpose.msra.mxu0 %v659
      %677 = vmatprep.subr.bf16.mxu0 0
      %678 = vmatpush2.bf16.xpose.msra.mxu0 0
      %679 = vmatprep.subr.bf16.mxu0 0
      %680 = vmatpush2.bf16.xpose.msra.mxu0 0
      %681 = vmatprep.subr.bf16.mxu0 0
      %682 = vmatpush2.bf16.xpose.msra.mxu0 0
      %683 = vmatprep.subr.bf16.mxu0 0
      %684 = vmatpush2.bf16.xpose.msra.mxu0 0
      %685 = vmatprep.subr.bf16.mxu0 0
      %686 = vmatpush2.bf16.xpose.msra.mxu0 0
      %687 = vmatprep.subr.bf16.mxu0 0
      %688 = vmatpush2.bf16.xpose.msra.mxu0 0
      %689 = vmatprep.subr.bf16.mxu0 0
      %690 = vmatpush2.bf16.xpose.msra.mxu0 0
      %691 = vmatprep.subr.bf16.mxu0 0
      %692 = vmatpush2.bf16.xpose.msra.mxu0 0
      %693 = vmatprep.mubr.bf16.mxu0 0
      %694 = vmatmul.mubr.bf16.gmra.mxu0 %v656
      %v695 = vpop.f32.mrf.mxu0
      %v696 = vadd.f32 %v652, %v695
      %v697 = vpop.f32.mrf.mxu0
      %v698 = vpop.f32.mrf.mxu0
      %v699 = vpop.f32.mrf.mxu0
      %700 = vdwg.mxu0
      %vm701 = vcmask 130048
      %v702 = vsel %vm701, %v696, -inf
      %703 = vmax.xlane.f32.xlu0 %v702
      %v704 = vpop.xlane.xlu0 %703
      %v705 = vsub.f32 %v696, %v704
      %v706 = vmul.f32 %v705, 1.442695
      %v707 = vpow.pop %v706
      %v708 = vsel %vm701, %v707, 0.0
      %709 = vadd.xlane.f32.xlu0 %v708
      %v710 = vpop.xlane.xlu0 %709
      %v711 = vrcp.pop %v710
      %v712 = vmul.f32 %v707, %v711
      %v713 = vpack.c.bf16 %v712, %v712
      %715 = vrot.lane.b32.xlu0 %v647, 96
      %v716 = vpop.permute.xlu0 %715
      %v719 = vsel %vm701, %v713, 0
      %721 = vmatprep.subr.bf16.mxu0 0
      %722 = vmatpush1.bf16.msra.mxu0 0
      %723 = vmatprep.subr.bf16.mxu0 0
      %724 = vmatpush1.bf16.msra.mxu0 0
      %725 = vmatprep.subr.bf16.mxu0 0
      %726 = vmatpush1.bf16.msra.mxu0 0
      %727 = vmatprep.subr.bf16.mxu0 0
      %728 = vmatpush1.bf16.msra.mxu0 0
      %729 = vmatprep.subr.bf16.mxu0 0
      %730 = vmatpush1.bf16.msra.mxu0 0
      %731 = vmatprep.subr.bf16.mxu0 0
      %732 = vmatpush1.bf16.msra.mxu0 0
      %733 = vmatprep.subr.bf16.mxu0 0
      %734 = vmatpush1.bf16.msra.mxu0 0
      %735 = vmatprep.subr.bf16.mxu0 0
      %736 = vmatpush1.bf16.msra.mxu0 %v716
      %737 = vmatprep.subr.bf16.mxu0 0
      %738 = vmatpush2.bf16.msra.mxu0 0
      %739 = vmatprep.subr.bf16.mxu0 0
      %740 = vmatpush2.bf16.msra.mxu0 0
      %741 = vmatprep.subr.bf16.mxu0 0
      %742 = vmatpush2.bf16.msra.mxu0 0
      %743 = vmatprep.subr.bf16.mxu0 0
      %744 = vmatpush2.bf16.msra.mxu0 0
      %745 = vmatprep.subr.bf16.mxu0 0
      %746 = vmatpush2.bf16.msra.mxu0 0
      %747 = vmatprep.subr.bf16.mxu0 0
      %748 = vmatpush2.bf16.msra.mxu0 0
      %749 = vmatprep.subr.bf16.mxu0 0
      %750 = vmatpush2.bf16.msra.mxu0 0
      %751 = vmatprep.subr.bf16.mxu0 0
      %752 = vmatpush2.bf16.msra.mxu0 0
      %753 = vmatprep.mubr.bf16.mxu0 0
      %754 = vmatmul.mubr.bf16.gmra.mxu0 %v719
      %v755 = vpop.f32.mrf.mxu0
      %v756 = vadd.f32 0.0, %v755
      %v757 = vpop.f32.mrf.mxu0
      %v758 = vpop.f32.mrf.mxu0
      %v759 = vpop.f32.mrf.mxu0
      %760 = vdwg.mxu0
      %762 = vrot.lane.b32.xlu0 %v646, 120
      %v763 = vpop.permute.xlu0 %762
      %764 = vrot.lane.b32.xlu0 %v647, 120
      %v765 = vpop.permute.xlu0 %764
      %v767 = vsel %vm654, %v763, 0
      %v770 = vsel %vm654, %v765, 0
      %772 = vmatprep.subr.bf16.mxu0 0
      %773 = vmatpush1.bf16.xpose.msra.mxu0 0
      %774 = vmatprep.subr.bf16.mxu0 0
      %775 = vmatpush1.bf16.xpose.msra.mxu0 0
      %776 = vmatprep.subr.bf16.mxu0 0
      %777 = vmatpush1.bf16.xpose.msra.mxu0 0
      %778 = vmatprep.subr.bf16.mxu0 0
      %779 = vmatpush1.bf16.xpose.msra.mxu0 0
      %780 = vmatprep.subr.bf16.mxu0 0
      %781 = vmatpush1.bf16.xpose.msra.mxu0 0
      %782 = vmatprep.subr.bf16.mxu0 0
      %783 = vmatpush1.bf16.xpose.msra.mxu0 0
      %784 = vmatprep.subr.bf16.mxu0 0
      %785 = vmatpush1.bf16.xpose.msra.mxu0 0
      %786 = vmatprep.subr.bf16.mxu0 0
      %787 = vmatpush1.bf16.xpose.msra.mxu0 %v770
      %788 = vmatprep.subr.bf16.mxu0 0
      %789 = vmatpush2.bf16.xpose.msra.mxu0 0
      %790 = vmatprep.subr.bf16.mxu0 0
      %791 = vmatpush2.bf16.xpose.msra.mxu0 0
      %792 = vmatprep.subr.bf16.mxu0 0
      %793 = vmatpush2.bf16.xpose.msra.mxu0 0
      %794 = vmatprep.subr.bf16.mxu0 0
      %795 = vmatpush2.bf16.xpose.msra.mxu0 0
      %796 = vmatprep.subr.bf16.mxu0 0
      %797 = vmatpush2.bf16.xpose.msra.mxu0 0
      %798 = vmatprep.subr.bf16.mxu0 0
      %799 = vmatpush2.bf16.xpose.msra.mxu0 0
      %800 = vmatprep.subr.bf16.mxu0 0
      %801 = vmatpush2.bf16.xpose.msra.mxu0 0
      %802 = vmatprep.subr.bf16.mxu0 0
      %803 = vmatpush2.bf16.xpose.msra.mxu0 0
      %804 = vmatprep.mubr.bf16.mxu0 0
      %805 = vmatmul.mubr.bf16.gmra.mxu0 %v767
      %v806 = vpop.f32.mrf.mxu0
      %v807 = vadd.f32 %v652, %v806
      %v808 = vpop.f32.mrf.mxu0
      %v809 = vpop.f32.mrf.mxu0
      %v810 = vpop.f32.mrf.mxu0
      %811 = vdwg.mxu0
      %v812 = vsel %vm701, %v807, -inf
      %813 = vmax.xlane.f32.xlu0 %v812
      %v814 = vpop.xlane.xlu0 %813
      %v815 = vsub.f32 %v807, %v814
      %v816 = vmul.f32 %v815, 1.442695
      %v817 = vpow.pop %v816
      %v818 = vsel %vm701, %v817, 0.0
      %819 = vadd.xlane.f32.xlu0 %v818
      %v820 = vpop.xlane.xlu0 %819
      %v821 = vrcp.pop %v820
      %v822 = vmul.f32 %v817, %v821
      %v823 = vpack.c.bf16 %v822, %v822
      %824 = vrot.lane.b32.xlu0 %v647, 88
      %v825 = vpop.permute.xlu0 %824
      %v828 = vsel %vm701, %v823, 0
      %830 = vmatprep.subr.bf16.mxu0 0
      %831 = vmatpush1.bf16.msra.mxu0 0
      %832 = vmatprep.subr.bf16.mxu0 0
      %833 = vmatpush1.bf16.msra.mxu0 0
      %834 = vmatprep.subr.bf16.mxu0 0
      %835 = vmatpush1.bf16.msra.mxu0 0
      %836 = vmatprep.subr.bf16.mxu0 0
      %837 = vmatpush1.bf16.msra.mxu0 0
      %838 = vmatprep.subr.bf16.mxu0 0
      %839 = vmatpush1.bf16.msra.mxu0 0
      %840 = vmatprep.subr.bf16.mxu0 0
      %841 = vmatpush1.bf16.msra.mxu0 0
      %842 = vmatprep.subr.bf16.mxu0 0
      %843 = vmatpush1.bf16.msra.mxu0 0
      %844 = vmatprep.subr.bf16.mxu0 0
      %845 = vmatpush1.bf16.msra.mxu0 %v825
      %846 = vmatprep.subr.bf16.mxu0 0
      %847 = vmatpush2.bf16.msra.mxu0 0
      %848 = vmatprep.subr.bf16.mxu0 0
      %849 = vmatpush2.bf16.msra.mxu0 0
      %850 = vmatprep.subr.bf16.mxu0 0
      %851 = vmatpush2.bf16.msra.mxu0 0
      %852 = vmatprep.subr.bf16.mxu0 0
      %853 = vmatpush2.bf16.msra.mxu0 0
      %854 = vmatprep.subr.bf16.mxu0 0
      %855 = vmatpush2.bf16.msra.mxu0 0
      %856 = vmatprep.subr.bf16.mxu0 0
      %857 = vmatpush2.bf16.msra.mxu0 0
      %858 = vmatprep.subr.bf16.mxu0 0
      %859 = vmatpush2.bf16.msra.mxu0 0
      %860 = vmatprep.subr.bf16.mxu0 0
      %861 = vmatpush2.bf16.msra.mxu0 0
      %862 = vmatprep.mubr.bf16.mxu0 0
      %863 = vmatmul.mubr.bf16.gmra.mxu0 %v828
      %v864 = vpop.f32.mrf.mxu0
      %v865 = vadd.f32 0.0, %v864
      %v866 = vpop.f32.mrf.mxu0
      %v867 = vpop.f32.mrf.mxu0
      %v868 = vpop.f32.mrf.mxu0
      %869 = vdwg.mxu0
      %870 = vrot.lane.b32.xlu0 %v646, 112
      %v871 = vpop.permute.xlu0 %870
      %872 = vrot.lane.b32.xlu0 %v647, 112
      %v873 = vpop.permute.xlu0 %872
      %v875 = vsel %vm654, %v871, 0
      %v878 = vsel %vm654, %v873, 0
      %880 = vmatprep.subr.bf16.mxu0 0
      %881 = vmatpush1.bf16.xpose.msra.mxu0 0
      %882 = vmatprep.subr.bf16.mxu0 0
      %883 = vmatpush1.bf16.xpose.msra.mxu0 0
      %884 = vmatprep.subr.bf16.mxu0 0
      %885 = vmatpush1.bf16.xpose.msra.mxu0 0
      %886 = vmatprep.subr.bf16.mxu0 0
      %887 = vmatpush1.bf16.xpose.msra.mxu0 0
      %888 = vmatprep.subr.bf16.mxu0 0
      %889 = vmatpush1.bf16.xpose.msra.mxu0 0
      %890 = vmatprep.subr.bf16.mxu0 0
      %891 = vmatpush1.bf16.xpose.msra.mxu0 0
      %892 = vmatprep.subr.bf16.mxu0 0
      %893 = vmatpush1.bf16.xpose.msra.mxu0 0
      %894 = vmatprep.subr.bf16.mxu0 0
      %895 = vmatpush1.bf16.xpose.msra.mxu0 %v878
      %896 = vmatprep.subr.bf16.mxu0 0
      %897 = vmatpush2.bf16.xpose.msra.mxu0 0
      %898 = vmatprep.subr.bf16.mxu0 0
      %899 = vmatpush2.bf16.xpose.msra.mxu0 0
      %900 = vmatprep.subr.bf16.mxu0 0
      %901 = vmatpush2.bf16.xpose.msra.mxu0 0
      %902 = vmatprep.subr.bf16.mxu0 0
      %903 = vmatpush2.bf16.xpose.msra.mxu0 0
      %904 = vmatprep.subr.bf16.mxu0 0
      %905 = vmatpush2.bf16.xpose.msra.mxu0 0
      %906 = vmatprep.subr.bf16.mxu0 0
      %907 = vmatpush2.bf16.xpose.msra.mxu0 0
      %908 = vmatprep.subr.bf16.mxu0 0
      %909 = vmatpush2.bf16.xpose.msra.mxu0 0
      %910 = vmatprep.subr.bf16.mxu0 0
      %911 = vmatpush2.bf16.xpose.msra.mxu0 0
      %912 = vmatprep.mubr.bf16.mxu0 0
      %913 = vmatmul.mubr.bf16.gmra.mxu0 %v875
      %v914 = vpop.f32.mrf.mxu0
      %v915 = vadd.f32 %v652, %v914
      %v916 = vpop.f32.mrf.mxu0
      %v917 = vpop.f32.mrf.mxu0
      %v918 = vpop.f32.mrf.mxu0
      %919 = vdwg.mxu0
      %v920 = vsel %vm701, %v915, -inf
      %921 = vmax.xlane.f32.xlu0 %v920
      %v922 = vpop.xlane.xlu0 %921
      %v923 = vsub.f32 %v915, %v922
      %v924 = vmul.f32 %v923, 1.442695
      %v925 = vpow.pop %v924
      %v926 = vsel %vm701, %v925, 0.0
      %927 = vadd.xlane.f32.xlu0 %v926
      %v928 = vpop.xlane.xlu0 %927
      %v929 = vrcp.pop %v928
      %v930 = vmul.f32 %v925, %v929
      %v931 = vpack.c.bf16 %v930, %v930
      %932 = vrot.lane.b32.xlu0 %v647, 80
      %v933 = vpop.permute.xlu0 %932
      %v936 = vsel %vm701, %v931, 0
      %938 = vmatprep.subr.bf16.mxu0 0
      %939 = vmatpush1.bf16.msra.mxu0 0
      %940 = vmatprep.subr.bf16.mxu0 0
      %941 = vmatpush1.bf16.msra.mxu0 0
      %942 = vmatprep.subr.bf16.mxu0 0
      %943 = vmatpush1.bf16.msra.mxu0 0
      %944 = vmatprep.subr.bf16.mxu0 0
      %945 = vmatpush1.bf16.msra.mxu0 0
      %946 = vmatprep.subr.bf16.mxu0 0
      %947 = vmatpush1.bf16.msra.mxu0 0
      %948 = vmatprep.subr.bf16.mxu0 0
      %949 = vmatpush1.bf16.msra.mxu0 0
      %950 = vmatprep.subr.bf16.mxu0 0
      %951 = vmatpush1.bf16.msra.mxu0 0
      %952 = vmatprep.subr.bf16.mxu0 0
      %953 = vmatpush1.bf16.msra.mxu0 %v933
      %954 = vmatprep.subr.bf16.mxu0 0
      %955 = vmatpush2.bf16.msra.mxu0 0
      %956 = vmatprep.subr.bf16.mxu0 0
      %957 = vmatpush2.bf16.msra.mxu0 0
      %958 = vmatprep.subr.bf16.mxu0 0
      %959 = vmatpush2.bf16.msra.mxu0 0
      %960 = vmatprep.subr.bf16.mxu0 0
      %961 = vmatpush2.bf16.msra.mxu0 0
      %962 = vmatprep.subr.bf16.mxu0 0
      %963 = vmatpush2.bf16.msra.mxu0 0
      %964 = vmatprep.subr.bf16.mxu0 0
      %965 = vmatpush2.bf16.msra.mxu0 0
      %966 = vmatprep.subr.bf16.mxu0 0
      %967 = vmatpush2.bf16.msra.mxu0 0
      %968 = vmatprep.subr.bf16.mxu0 0
      %969 = vmatpush2.bf16.msra.mxu0 0
      %970 = vmatprep.mubr.bf16.mxu0 0
      %971 = vmatmul.mubr.bf16.gmra.mxu0 %v936
      %v972 = vpop.f32.mrf.mxu0
      %v973 = vadd.f32 0.0, %v972
      %v974 = vpop.f32.mrf.mxu0
      %v975 = vpop.f32.mrf.mxu0
      %v976 = vpop.f32.mrf.mxu0
      %977 = vdwg.mxu0
      %978 = vrot.lane.b32.xlu0 %v646, 104
      %v979 = vpop.permute.xlu0 %978
      %980 = vrot.lane.b32.xlu0 %v647, 104
      %v981 = vpop.permute.xlu0 %980
      %v983 = vsel %vm654, %v979, 0
      %v986 = vsel %vm654, %v981, 0
      %988 = vmatprep.subr.bf16.mxu0 0
      %989 = vmatpush1.bf16.xpose.msra.mxu0 0
      %990 = vmatprep.subr.bf16.mxu0 0
      %991 = vmatpush1.bf16.xpose.msra.mxu0 0
      %992 = vmatprep.subr.bf16.mxu0 0
      %993 = vmatpush1.bf16.xpose.msra.mxu0 0
      %994 = vmatprep.subr.bf16.mxu0 0
      %995 = vmatpush1.bf16.xpose.msra.mxu0 0
      %996 = vmatprep.subr.bf16.mxu0 0
      %997 = vmatpush1.bf16.xpose.msra.mxu0 0
      %998 = vmatprep.subr.bf16.mxu0 0
      %999 = vmatpush1.bf16.xpose.msra.mxu0 0
      %1000 = vmatprep.subr.bf16.mxu0 0
      %1001 = vmatpush1.bf16.xpose.msra.mxu0 0
      %1002 = vmatprep.subr.bf16.mxu0 0
      %1003 = vmatpush1.bf16.xpose.msra.mxu0 %v986
      %1004 = vmatprep.subr.bf16.mxu0 0
      %1005 = vmatpush2.bf16.xpose.msra.mxu0 0
      %1006 = vmatprep.subr.bf16.mxu0 0
      %1007 = vmatpush2.bf16.xpose.msra.mxu0 0
      %1008 = vmatprep.subr.bf16.mxu0 0
      %1009 = vmatpush2.bf16.xpose.msra.mxu0 0
      %1010 = vmatprep.subr.bf16.mxu0 0
      %1011 = vmatpush2.bf16.xpose.msra.mxu0 0
      %1012 = vmatprep.subr.bf16.mxu0 0
      %1013 = vmatpush2.bf16.xpose.msra.mxu0 0
      %1014 = vmatprep.subr.bf16.mxu0 0
      %1015 = vmatpush2.bf16.xpose.msra.mxu0 0
      %1016 = vmatprep.subr.bf16.mxu0 0
      %1017 = vmatpush2.bf16.xpose.msra.mxu0 0
      %1018 = vmatprep.subr.bf16.mxu0 0
      %1019 = vmatpush2.bf16.xpose.msra.mxu0 0
      %1020 = vmatprep.mubr.bf16.mxu0 0
      %1021 = vmatmul.mubr.bf16.gmra.mxu0 %v983
      %v1022 = vpop.f32.mrf.mxu0
      %v1023 = vadd.f32 %v652, %v1022
      %v1024 = vpop.f32.mrf.mxu0
      %v1025 = vpop.f32.mrf.mxu0
      %v1026 = vpop.f32.mrf.mxu0
      %1027 = vdwg.mxu0
      %v1028 = vsel %vm701, %v1023, -inf
      %1029 = vmax.xlane.f32.xlu0 %v1028
      %v1030 = vpop.xlane.xlu0 %1029
      %v1031 = vsub.f32 %v1023, %v1030
      %v1032 = vmul.f32 %v1031, 1.442695
      %v1033 = vpow.pop %v1032
      %v1034 = vsel %vm701, %v1033, 0.0
      %1035 = vadd.xlane.f32.xlu0 %v1034
      %v1036 = vpop.xlane.xlu0 %1035
      %v1037 = vrcp.pop %v1036
      %v1038 = vmul.f32 %v1033, %v1037
      %v1039 = vpack.c.bf16 %v1038, %v1038
      %1040 = vrot.lane.b32.xlu0 %v647, 72
      %v1041 = vpop.permute.xlu0 %1040
      %v1044 = vsel %vm701, %v1039, 0
      %1046 = vmatprep.subr.bf16.mxu0 0
      %1047 = vmatpush1.bf16.msra.mxu0 0
      %1048 = vmatprep.subr.bf16.mxu0 0
      %1049 = vmatpush1.bf16.msra.mxu0 0
      %1050 = vmatprep.subr.bf16.mxu0 0
      %1051 = vmatpush1.bf16.msra.mxu0 0
      %1052 = vmatprep.subr.bf16.mxu0 0
      %1053 = vmatpush1.bf16.msra.mxu0 0
      %1054 = vmatprep.subr.bf16.mxu0 0
      %1055 = vmatpush1.bf16.msra.mxu0 0
      %1056 = vmatprep.subr.bf16.mxu0 0
      %1057 = vmatpush1.bf16.msra.mxu0 0
      %1058 = vmatprep.subr.bf16.mxu0 0
      %1059 = vmatpush1.bf16.msra.mxu0 0
      %1060 = vmatprep.subr.bf16.mxu0 0
      %1061 = vmatpush1.bf16.msra.mxu0 %v1041
      %1062 = vmatprep.subr.bf16.mxu0 0
      %1063 = vmatpush2.bf16.msra.mxu0 0
      %1064 = vmatprep.subr.bf16.mxu0 0
      %1065 = vmatpush2.bf16.msra.mxu0 0
      %1066 = vmatprep.subr.bf16.mxu0 0
      %1067 = vmatpush2.bf16.msra.mxu0 0
      %1068 = vmatprep.subr.bf16.mxu0 0
      %1069 = vmatpush2.bf16.msra.mxu0 0
      %1070 = vmatprep.subr.bf16.mxu0 0
      %1071 = vmatpush2.bf16.msra.mxu0 0
      %1072 = vmatprep.subr.bf16.mxu0 0
      %1073 = vmatpush2.bf16.msra.mxu0 0
      %1074 = vmatprep.subr.bf16.mxu0 0
      %1075 = vmatpush2.bf16.msra.mxu0 0
      %1076 = vmatprep.subr.bf16.mxu0 0
      %1077 = vmatpush2.bf16.msra.mxu0 0
      %1078 = vmatprep.mubr.bf16.mxu0 0
      %1079 = vmatmul.mubr.bf16.gmra.mxu0 %v1044
      %v1080 = vpop.f32.mrf.mxu0
      %v1081 = vadd.f32 0.0, %v1080
      %v1082 = vpop.f32.mrf.mxu0
      %v1083 = vpop.f32.mrf.mxu0
      %v1084 = vpop.f32.mrf.mxu0
      %1085 = vdwg.mxu0
      %1087 = vrot.lane.b32.xlu0 %v865, 8
      %v1088 = vpop.permute.xlu0 %1087
      %1091 = vrot.lane.b32.xlu0 %v973, 16
      %v1092 = vpop.permute.xlu0 %1091
      %1095 = vrot.lane.b32.xlu0 %v1081, 24
      %v1096 = vpop.permute.xlu0 %1095
      %v1098 = vsel %vm654, %v756, %v1088
      %v1099 = vsel %vm701, %v1098, %v1092
      %vm1100 = vcmask 195584
      %v1101 = vsel %vm1100, %v1099, %v1096
      %v1102 = vpack.c.bf16 %v1101, %v1101
      %v1103 = vld [vmem:[%s9] sm:$0xf]
      %v1104 = vld [vmem:[%s9 + $0x4] sm:$0xf]
      %v1105 = vld [vmem:[%s9 + $0x8] sm:$0xf]
      %v1106 = vld [vmem:[%s9 + $0xc] sm:$0xf]
      %v1107 = vld [vmem:[%s10] sm:$0x1]
      %v1109 = vlaneseq
      %v1110 = vshrl.u32 %v1109, 7
      %v1111 = vsub.s32 0, %v1110
      %v1112 = vrot.slane %v1107, %v1111
      %v1118 = vunpack.c.l.b16 %v1103
      %v1119 = vunpack.c.l.b16 %v1104
      %v1120 = vunpack.c.l.b16 %v1105
      %v1121 = vunpack.c.l.b16 %v1106
      %v1122 = vpack.c.b16 %v1119, %v1118
      %v1123 = vpack.c.b16 %v1121, %v1120
      %v1127 = vsel %vm479, %v1102, 0
      %1129 = vmatprep.subr.bf16.mxu0 0
      %1130 = vmatpush1.bf16.msra.mxu0 0
      %1131 = vmatprep.subr.bf16.mxu0 0
      %1132 = vmatpush1.bf16.msra.mxu0 0
      %1133 = vmatprep.subr.bf16.mxu0 0
      %1134 = vmatpush1.bf16.msra.mxu0 0
      %1135 = vmatprep.subr.bf16.mxu0 0
      %1136 = vmatpush1.bf16.msra.mxu0 0
      %1137 = vmatprep.subr.bf16.mxu0 0
      %1138 = vmatpush1.bf16.msra.mxu0 0
      %1139 = vmatprep.subr.bf16.mxu0 0
      %1140 = vmatpush1.bf16.msra.mxu0 0
      %1141 = vmatprep.subr.bf16.mxu0 0
      %1142 = vmatpush1.bf16.msra.mxu0 %v1123
      %1143 = vmatprep.subr.bf16.mxu0 0
      %1144 = vmatpush1.bf16.msra.mxu0 %v1122
      %1145 = vmatprep.subr.bf16.mxu0 0
      %1146 = vmatpush2.bf16.msra.mxu0 0
      %1147 = vmatprep.subr.bf16.mxu0 0
      %1148 = vmatpush2.bf16.msra.mxu0 0
      %1149 = vmatprep.subr.bf16.mxu0 0
      %1150 = vmatpush2.bf16.msra.mxu0 0
      %1151 = vmatprep.subr.bf16.mxu0 0
      %1152 = vmatpush2.bf16.msra.mxu0 0
      %1153 = vmatprep.subr.bf16.mxu0 0
      %1154 = vmatpush2.bf16.msra.mxu0 0
      %1155 = vmatprep.subr.bf16.mxu0 0
      %1156 = vmatpush2.bf16.msra.mxu0 0
      %1157 = vmatprep.subr.bf16.mxu0 0
      %1158 = vmatpush2.bf16.msra.mxu0 0
      %1159 = vmatprep.subr.bf16.mxu0 0
      %1160 = vmatpush2.bf16.msra.mxu0 0
      %1161 = vmatprep.mubr.bf16.mxu0 0
      %1162 = vmatmul.mubr.bf16.gmra.mxu0 %v1127
      %v1163 = vpop.f32.mrf.mxu0
      %v1164 = vadd.f32 %v1112, %v1163
      %v1165 = vpop.f32.mrf.mxu0
      %v1166 = vpop.f32.mrf.mxu0
      %v1167 = vpop.f32.mrf.mxu0
      %1168 = vdwg.mxu0
      %s1169 = sld [smem:[#allocation2]]
      %v1170 = vstv %s1169
      %v1171 = vmul.f32 %v1170, %v1164
      %v1172 = vadd.f32 %v476, %v1171
      %1173 = vst.msk [vmem:[%s474] sm:$0xff] %vm479, %v1172
      %p1174 = scmp.lt.s32.totalorder %s28, 1
      %s1175 = scalar_select %p1174, %s28, 1
      %p1176 = scmp.lt.s32.totalorder %s29, 0
      %s1177 = scalar_select %p1176, %s29, 0
      %s1178 = sadd.s32 %s1177, %s1175
      %s1179 = smul.addr %s1178, 8
      %s1180 = scalar_lea.vmem %s12, %s1179
      // Predicated region
      $region69: #{decoder_block.4} parent=67 // pred_check
        %p1181 = pneg %p325
      $region70: #{decoder_block.4} parent=67 // pred_check_branch
        %1183 = sbr.rel (%p1181) target = $region72
      $region71: #{decoder_block.4} parent=67 // pred_region
        _
      $region72: #{decoder_block.4} parent=67 // pred_fallthru
        _
    $region68: #{decoder_block.4} parent=5 // pred_fallthru
      _
    %p1184 = scmp.le.s32.totalorder 2, %s19
    // Predicated region
    $region73: #{decoder_block.4} parent=5 // pred_check
      %p1185 = pneg %p1184
    $region74: #{decoder_block.4} parent=5 // pred_check_branch
      %1187 = sbr.rel (%p1185) target = $region76
    $region75: #{decoder_block.4} parent=5 // pred_region
      %s1188 = ssub.s32 %s19, 2
      // Predicated region
      $region77: #{decoder_block.4} parent=75 // pred_check
        %p1189 = pneg %p331
      $region78: #{decoder_block.4} parent=75 // pred_check_branch
        %1191 = sbr.rel (%p1189) target = $region80
      $region79: #{decoder_block.4} parent=75 // pred_region
        %p1192 = scmp.lt.s32.totalorder %s30, 1
        %s1193 = scalar_select %p1192, %s30, 1
        %p1194 = scmp.lt.s32.totalorder %s31, 0
        %s1195 = scalar_select %p1194, %s31, 0
        %s1196 = sadd.s32 %s1195, %s1193
        %s1197 = smul.addr %s1196, 8
        %s1198 = scalar_lea.vmem %s12, %s1197
      $region80: #{decoder_block.4} parent=75 // pred_fallthru
        _
    $region76: #{decoder_block.4} parent=5 // pred_fallthru
      _
  $region6: #{decoder_block.4} parent=0 // loop_footer
    %s23 = sadd.s32 1, %s19
  $region7: #{decoder_block.4} parent=0 // loop_footer_branch
    %18 = sbr.rel target = $region3
  $region8: #{decoder_block.4} parent=0 // loop_exit
    _

</llo_original>
